<compile_context>
chip_gen: v7x
topology: tpu7x:2x2x1
jax: 0.10.0
libtpu: 0.0.40
codegen_flags: <defaults>
</compile_context>

<pallas_src>
import math
import functools

import jax
import jax.numpy as jnp
from jax import lax
from jax.experimental import pallas as pl
from jax.experimental.pallas import tpu as pltpu

EPS = 1e-6
NEG_INF = -1e9


# ---------------------------------------------------------------------------
# In-kernel helpers
# ---------------------------------------------------------------------------

def _layernorm(x, alpha, bias):
    # torch-style: unbiased std (ddof=1), eps added to std (not variance).
    # alpha is folded into the per-row scalar -> one (rows,1) multiply, not (rows,D).
    d = x.shape[-1]
    mean = jnp.mean(x, axis=-1, keepdims=True)
    diff = x - mean
    var = jnp.sum(diff * diff, axis=-1, keepdims=True) * (1.0 / (d - 1))
    inv = pl.reciprocal(jnp.sqrt(var) + EPS, approx=True)   # EUP, off the VPU path
    return diff * (alpha * inv) + bias


def _mha(xq, kv, mask_bias, wq_ref, bq_ref, wkv_ref, bkv_ref, wo_ref, bo_ref,
         *, n_heads, scale):
    """Multi-head attention on one batch slice.

    xq: (Sq, D) f32 query-side input (already LayerNorm'ed)
    kv: (Sk, D) f32 key/value-side input (same object as xq for self-attention)
    mask_bias: (Sq, Sk) f32 additive bias (0 where visible, -1e9 where masked)
    Weights are bf16 (MXU fast path), biases f32, accumulation f32.
    """
    d_model = xq.shape[-1]
    dk = d_model // n_heads
    sq = xq.shape[0]

    xq16 = xq.astype(jnp.bfloat16)
    kv16 = xq16 if kv is xq else kv.astype(jnp.bfloat16)   # self-attn: cast once

    # Q projection + fused (K|V) projection: two matmuls instead of three.
    q = jnp.dot(xq16, wq_ref[...], preferred_element_type=jnp.float32) + bq_ref[...]
    kvp = jnp.dot(kv16, wkv_ref[...], preferred_element_type=jnp.float32) + bkv_ref[...]
    q = q * scale                                           # fold 1/sqrt(dk) once

    wo = wo_ref[...]                                        # (D, D) bf16, loaded once
    out = jnp.zeros((sq, d_model), jnp.float32)

    # Per-head attention with W_o folded into the loop:
    #   concat_h(P_h V_h) @ W_o == sum_h (P_h V_h) @ W_o[h*dk:(h+1)*dk, :]
    # -> lane-dense (Sq, D) accumulator, no lane-axis concat, no dk-wide writes.
    # TODO(synk): for large dk/Sq/Sk switch to a single batched (H, Sq, dk) dot_general
    #             with a flash-style kv-tiled online softmax.
    for h in range(n_heads):
        qh = q[:, h * dk:(h + 1) * dk].astype(jnp.bfloat16)
        kh = kvp[:, h * dk:(h + 1) * dk].astype(jnp.bfloat16)
        vh = kvp[:, d_model + h * dk:d_model + (h + 1) * dk].astype(jnp.bfloat16)
        s = lax.dot_general(qh, kh, (((1,), (1,)), ((), ())),
                            preferred_element_type=jnp.float32)        # (Sq, Sk)
        s = s + mask_bias
        s = s - jnp.max(s, axis=-1, keepdims=True)
        p = jnp.exp(s)
        p = p * pl.reciprocal(jnp.sum(p, axis=-1, keepdims=True), approx=True)
        hv = jnp.dot(p.astype(jnp.bfloat16), vh,
                     preferred_element_type=jnp.float32)                # (Sq, dk)
        out = out + jnp.dot(hv.astype(jnp.bfloat16), wo[h * dk:(h + 1) * dk, :],
                            preferred_element_type=jnp.float32)         # (Sq, D)
    return out + bo_ref[...]


# ---------------------------------------------------------------------------
# Fused decoder-block kernel (one grid step == one batch element)
# ---------------------------------------------------------------------------

def decoder_block_kernel(x_ref, enc_ref, tmask_ref, smask_ref,
                         wq0_ref, bq0_ref, wkv0_ref, bkv0_ref, wo0_ref, bo0_ref,
                         wq1_ref, bq1_ref, wkv1_ref, bkv1_ref, wo1_ref, bo1_ref,
                         w1_ref, b1_ref, w2_ref, b2_ref,
                         ln_a_ref, ln_b_ref,
                         o_ref, *, n_heads, scale):
    x = x_ref[0].astype(jnp.float32)        # (St, D)
    enc = enc_ref[0].astype(jnp.float32)    # (Ss, D)

    zero = jnp.float32(0.0)
    neg = jnp.float32(NEG_INF)
    # Masks hoisted to additive biases, computed once per batch slice.
    # (exact-zero test matches torch's masked_fill_(mask == 0, -1e9) semantics)
    tbias = jnp.where(tmask_ref[0] == zero, neg, zero)      # (St, St)
    sbias = jnp.where(smask_ref[0] == zero, neg, zero)      # (St, Ss)

    # residual conn 0: self attention (kv == LN(x): one LN, x read once)
    xn = _layernorm(x, ln_a_ref[0], ln_b_ref[0])
    x = x + _mha(xn, xn, tbias,
                 wq0_ref, bq0_ref, wkv0_ref, bkv0_ref, wo0_ref, bo0_ref,
                 n_heads=n_heads, scale=scale)

    # residual conn 1: cross attention (encoder output is NOT normalized)
    xn = _layernorm(x, ln_a_ref[1], ln_b_ref[1])
    x = x + _mha(xn, enc, sbias,
                 wq1_ref, bq1_ref, wkv1_ref, bkv1_ref, wo1_ref, bo1_ref,
                 n_heads=n_heads, scale=scale)

    # residual conn 2: feed forward (Linear -> ReLU -> Linear)
    xn = _layernorm(x, ln_a_ref[2], ln_b_ref[2])
    h = jnp.dot(xn.astype(jnp.bfloat16), w1_ref[...],
                preferred_element_type=jnp.float32) + b1_ref[...]
    h = jnp.maximum(h, 0.0)
    y = jnp.dot(h.astype(jnp.bfloat16), w2_ref[...],
                preferred_element_type=jnp.float32) + b2_ref[...]

    o_ref[0] = (x + y).astype(o_ref.dtype)                  # fused residual add


# ---------------------------------------------------------------------------
# Wrapper: one pallas_call for the whole decoder block
# ---------------------------------------------------------------------------

def decoder_block_forward(params, x, encoder_output, src_mask, trgt_mask, n_heads):
    B, St, D = x.shape
    Ss = encoder_output.shape[1]
    dk = D // n_heads

    # Per-batch (B, Sq, Sk) mask tables (tiny here; supports per-batch padding masks).
    # TODO(synk): for large Sq/Sk generate the causal mask in-kernel with broadcasted_iota
    #             and keep padding masks as (B, Sk) vectors instead of full tables.
    tmask = jnp.broadcast_to(trgt_mask, (B, 1, St, St)).reshape(B, St, St).astype(jnp.float32)
    smask = jnp.broadcast_to(src_mask, (B, 1, St, Ss)).reshape(B, St, Ss).astype(jnp.float32)

    sa, ca = params["self_attn"], params["cross_attn"]
    kern = functools.partial(decoder_block_kernel, n_heads=n_heads,
                             scale=1.0 / math.sqrt(dk))

    def wspec(arr):  # full-array block, constant index (weights / biases)
        return pl.BlockSpec(arr.shape, lambda b, nd=arr.ndim: (0,) * nd)

    smem = pl.BlockSpec(memory_space=pltpu.MemorySpace.SMEM)

    # TODO(synk): when D / S grow, add pipeline_mode=pl.Buffered(1) on the constant-index
    #             weight specs, tile Sq / kv (flash-style), and set vmem_limit_bytes
    #             (v7x has 64 MiB VMEM, v5e has a 16 MiB scoped default).
    return pl.pallas_call(
        kern,
        out_shape=jax.ShapeDtypeStruct((B, St, D), x.dtype),
        grid=(B,),
        in_specs=[
            pl.BlockSpec((1, St, D), lambda b: (b, 0, 0)),      # x
            pl.BlockSpec((1, Ss, D), lambda b: (b, 0, 0)),      # encoder output
            pl.BlockSpec((1, St, St), lambda b: (b, 0, 0)),     # target mask
            pl.BlockSpec((1, St, Ss), lambda b: (b, 0, 0)),     # source mask
            wspec(sa["wq"]), wspec(sa["bq"]), wspec(sa["wkv"]),
            wspec(sa["bkv"]), wspec(sa["wo"]), wspec(sa["bo"]),
            wspec(ca["wq"]), wspec(ca["bq"]), wspec(ca["wkv"]),
            wspec(ca["bkv"]), wspec(ca["wo"]), wspec(ca["bo"]),
            wspec(params["ff_w1"]), wspec(params["ff_b1"]),
            wspec(params["ff_w2"]), wspec(params["ff_b2"]),
            smem, smem,                                          # LN alpha / bias (3,)
        ],
        out_specs=pl.BlockSpec((1, St, D), lambda b: (b, 0, 0)),
        compiler_params=pltpu.CompilerParams(
            dimension_semantics=("parallel",)),                  # B=2 -> both v7x TCs busy
    )(x, encoder_output, tmask, smask,
      sa["wq"], sa["bq"], sa["wkv"], sa["bkv"], sa["wo"], sa["bo"],
      ca["wq"], ca["bq"], ca["wkv"], ca["bkv"], ca["wo"], ca["bo"],
      params["ff_w1"], params["ff_b1"], params["ff_w2"], params["ff_b2"],
      params["ln_a"], params["ln_b"])


# ---------------------------------------------------------------------------
# Deterministic parameter initialization (weights stored (D_in, D_out) in bf16)
# ---------------------------------------------------------------------------

def init_linear(key, d_in, d_out):
    kw, kb = jax.random.split(key)
    w = jax.random.normal(kw, (d_in, d_out), jnp.float32) * 0.02
    b = jax.random.normal(kb, (d_out,), jnp.float32) * 0.02
    return w, b


def init_mha(key, d_model):
    ks = jax.random.split(key, 4)
    wq, bq = init_linear(ks[0], d_model, d_model)
    wk, bk = init_linear(ks[1], d_model, d_model)
    wv, bv = init_linear(ks[2], d_model, d_model)
    wo, bo = init_linear(ks[3], d_model, d_model)
    return dict(
        wq=wq.astype(jnp.bfloat16), bq=bq.reshape(1, d_model),
        wkv=jnp.concatenate([wk, wv], axis=1).astype(jnp.bfloat16),   # (D, 2D)
        bkv=jnp.concatenate([bk, bv], axis=0).reshape(1, 2 * d_model),
        wo=wo.astype(jnp.bfloat16), bo=bo.reshape(1, d_model),
    )


def init_params(key, d_model, d_ff):
    ks = jax.random.split(key, 4)
    params = {
        "self_attn": init_mha(ks[0], d_model),
        "cross_attn": init_mha(ks[1], d_model),
    }
    w1, b1 = init_linear(ks[2], d_model, d_ff)
    w2, b2 = init_linear(ks[3], d_ff, d_model)
    params["ff_w1"], params["ff_b1"] = w1.astype(jnp.bfloat16), b1.reshape(1, d_ff)
    params["ff_w2"], params["ff_b2"] = w2.astype(jnp.bfloat16), b2.reshape(1, d_model)
    params["ln_a"] = jnp.ones((3,), jnp.float32)    # LayerNormalization.alpha (torch.ones(1)) x3
    params["ln_b"] = jnp.zeros((3,), jnp.float32)   # LayerNormalization.bias  (torch.zeros(1)) x3
    return params


# ---------------------------------------------------------------------------
# Pure-JAX f32 reference (mirrors the PyTorch module) for the correctness check
# ---------------------------------------------------------------------------

def _ref_layernorm(x, a, b):
    d = x.shape[-1]
    mean = jnp.mean(x, axis=-1, keepdims=True)
    diff = x - mean
    std = jnp.sqrt(jnp.sum(diff * diff, axis=-1, keepdims=True) / (d - 1))
    return a * diff / (std + EPS) + b


def _ref_mha(p, q_in, kv_in, mask, n_heads):
    hp = lax.Precision.HIGHEST
    D = q_in.shape[-1]
    dk = D // n_heads
    wq = p["wq"].astype(jnp.float32)
    wkv = p["wkv"].astype(jnp.float32)
    wo = p["wo"].astype(jnp.float32)
    q = jnp.einsum("bsd,de->bse", q_in, wq, precision=hp) + p["bq"][0]
    kvp = jnp.einsum("bsd,de->bse", kv_in, wkv, precision=hp) + p["bkv"][0]
    k, v = kvp[..., :D], kvp[..., D:]
    B, Sq, _ = q.shape
    Sk = k.shape[1]
    qh = q.reshape(B, Sq, n_heads, dk).transpose(0, 2, 1, 3)
    kh = k.reshape(B, Sk, n_heads, dk).transpose(0, 2, 1, 3)
    vh = v.reshape(B, Sk, n_heads, dk).transpose(0, 2, 1, 3)
    s = jnp.einsum("bhqd,bhkd->bhqk", qh, kh, precision=hp) / math.sqrt(dk)
    s = jnp.where(mask[:, None] == 0, NEG_INF, s)
    pa = jax.nn.softmax(s, axis=-1)
    o = jnp.einsum("bhqk,bhkd->bhqd", pa, vh, precision=hp)
    o = o.transpose(0, 2, 1, 3).reshape(B, Sq, D)
    return jnp.einsum("bsd,de->bse", o, wo, precision=hp) + p["bo"][0]


def ref_forward(params, x, enc, src_mask, trgt_mask, n_heads):
    hp = lax.Precision.HIGHEST
    B, St, D = x.shape
    Ss = enc.shape[1]
    tm = jnp.broadcast_to(trgt_mask, (B, 1, St, St)).reshape(B, St, St)
    sm = jnp.broadcast_to(src_mask, (B, 1, St, Ss)).reshape(B, St, Ss)
    xn = _ref_layernorm(x, params["ln_a"][0], params["ln_b"][0])
    x = x + _ref_mha(params["self_attn"], xn, xn, tm, n_heads)
    xn = _ref_layernorm(x, params["ln_a"][1], params["ln_b"][1])
    x = x + _ref_mha(params["cross_attn"], xn, enc, sm, n_heads)
    xn = _ref_layernorm(x, params["ln_a"][2], params["ln_b"][2])
    w1 = params["ff_w1"].astype(jnp.float32)
    w2 = params["ff_w2"].astype(jnp.float32)
    h = jnp.maximum(jnp.einsum("bsd,df->bsf", xn, w1, precision=hp) + params["ff_b1"][0], 0.0)
    y = jnp.einsum("bsf,fd->bsd", h, w2, precision=hp) + params["ff_b2"][0]
    return x + y


# ---------------------------------------------------------------------------
# Main
# ---------------------------------------------------------------------------

if __name__ == "__main__":
    B, S_TGT, S_SRC = 2, 8, 8
    D_MODEL, N_HEADS, D_FF = 32, 4, 64

    key = jax.random.PRNGKey(0)
    k_par, k_x, k_enc = jax.random.split(key, 3)

    params = init_params(k_par, D_MODEL, D_FF)
    x = jax.random.normal(k_x, (B, S_TGT, D_MODEL), jnp.float32)
    enc_out = jax.random.normal(k_enc, (B, S_SRC, D_MODEL), jnp.float32)

    # target mask: causal (1, 1, S_tgt, S_tgt); source mask: all-ones (1, 1, 1, S_src)
    trgt_mask = jnp.tril(jnp.ones((S_TGT, S_TGT), jnp.float32)).reshape(1, 1, S_TGT, S_TGT)
    src_mask = jnp.ones((1, 1, 1, S_SRC), jnp.float32)

    fwd = jax.jit(functools.partial(decoder_block_forward, n_heads=N_HEADS))
    out = fwd(params, x, enc_out, src_mask, trgt_mask)
    jax.block_until_ready(out)

    assert out.shape == (B, S_TGT, D_MODEL)
    assert bool(jnp.all(jnp.isfinite(out)))

    # Tolerance accounts for bf16 MXU operands + EUP approx reciprocals in the kernel
    # vs. the f32 HIGHEST-precision reference (same bf16-representable weight values).
    ref = ref_forward(params, x, enc_out, src_mask, trgt_mask, N_HEADS)
    max_err = float(jnp.max(jnp.abs(out - ref)))
    assert max_err < 1e-2, f"mismatch vs reference: {max_err}"

    print("KERNEL_OK")
</pallas_src>

<mosaic_0001>
module attributes {stable_mosaic.version = 11 : i64} {
  func.func @decoder_block_kernel(%arg0: i32, %arg1: memref<1x8x32xf32, #tpu.memory_space<vmem>>, %arg2: memref<1x8x32xf32, #tpu.memory_space<vmem>>, %arg3: memref<1x8x8xf32, #tpu.memory_space<vmem>>, %arg4: memref<1x8x8xf32, #tpu.memory_space<vmem>>, %arg5: memref<32x32xbf16, #tpu.memory_space<vmem>>, %arg6: memref<1x32xf32, #tpu.memory_space<vmem>>, %arg7: memref<32x64xbf16, #tpu.memory_space<vmem>>, %arg8: memref<1x64xf32, #tpu.memory_space<vmem>>, %arg9: memref<32x32xbf16, #tpu.memory_space<vmem>>, %arg10: memref<1x32xf32, #tpu.memory_space<vmem>>, %arg11: memref<32x32xbf16, #tpu.memory_space<vmem>>, %arg12: memref<1x32xf32, #tpu.memory_space<vmem>>, %arg13: memref<32x64xbf16, #tpu.memory_space<vmem>>, %arg14: memref<1x64xf32, #tpu.memory_space<vmem>>, %arg15: memref<32x32xbf16, #tpu.memory_space<vmem>>, %arg16: memref<1x32xf32, #tpu.memory_space<vmem>>, %arg17: memref<32x64xbf16, #tpu.memory_space<vmem>>, %arg18: memref<1x64xf32, #tpu.memory_space<vmem>>, %arg19: memref<64x32xbf16, #tpu.memory_space<vmem>>, %arg20: memref<1x32xf32, #tpu.memory_space<vmem>>, %arg21: memref<3xf32, #tpu.memory_space<smem>>, %arg22: memref<3xf32, #tpu.memory_space<smem>>, %arg23: memref<1x8x32xf32, #tpu.memory_space<vmem>>) attributes {dimension_semantics = [#tpu.dimension_semantics<parallel>], iteration_bounds = array<i64: 2>, scalar_prefetch = 0 : i64, scratch_operands = 0 : i64, tpu.core_type = #tpu.core_type<tc>, window_params = [{transform_indices = @transform_0, window_bounds = array<i64: 1, 8, 32>}, {transform_indices = @transform_1, window_bounds = array<i64: 1, 8, 32>}, {transform_indices = @transform_2, window_bounds = array<i64: 1, 8, 8>}, {transform_indices = @transform_3, window_bounds = array<i64: 1, 8, 8>}, {pipeline_mode = #tpu.pipeline_mode<synchronous>, transform_indices = @transform_4, window_bounds = array<i64: 32, 32>}, {pipeline_mode = #tpu.pipeline_mode<synchronous>, transform_indices = @transform_5, window_bounds = array<i64: 1, 32>}, {pipeline_mode = #tpu.pipeline_mode<synchronous>, transform_indices = @transform_6, window_bounds = array<i64: 32, 64>}, {pipeline_mode = #tpu.pipeline_mode<synchronous>, transform_indices = @transform_7, window_bounds = array<i64: 1, 64>}, {pipeline_mode = #tpu.pipeline_mode<synchronous>, transform_indices = @transform_8, window_bounds = array<i64: 32, 32>}, {pipeline_mode = #tpu.pipeline_mode<synchronous>, transform_indices = @transform_9, window_bounds = array<i64: 1, 32>}, {pipeline_mode = #tpu.pipeline_mode<synchronous>, transform_indices = @transform_10, window_bounds = array<i64: 32, 32>}, {pipeline_mode = #tpu.pipeline_mode<synchronous>, transform_indices = @transform_11, window_bounds = array<i64: 1, 32>}, {pipeline_mode = #tpu.pipeline_mode<synchronous>, transform_indices = @transform_12, window_bounds = array<i64: 32, 64>}, {pipeline_mode = #tpu.pipeline_mode<synchronous>, transform_indices = @transform_13, window_bounds = array<i64: 1, 64>}, {pipeline_mode = #tpu.pipeline_mode<synchronous>, transform_indices = @transform_14, window_bounds = array<i64: 32, 32>}, {pipeline_mode = #tpu.pipeline_mode<synchronous>, transform_indices = @transform_15, window_bounds = array<i64: 1, 32>}, {pipeline_mode = #tpu.pipeline_mode<synchronous>, transform_indices = @transform_16, window_bounds = array<i64: 32, 64>}, {pipeline_mode = #tpu.pipeline_mode<synchronous>, transform_indices = @transform_17, window_bounds = array<i64: 1, 64>}, {pipeline_mode = #tpu.pipeline_mode<synchronous>, transform_indices = @transform_18, window_bounds = array<i64: 64, 32>}, {pipeline_mode = #tpu.pipeline_mode<synchronous>, transform_indices = @transform_19, window_bounds = array<i64: 1, 32>}, {transform_indices = @transform_20, window_bounds = array<i64: 3>}, {transform_indices = @transform_21, window_bounds = array<i64: 3>}, {transform_indices = @transform_22, window_bounds = array<i64: 1, 8, 32>}]} {
    %c0 = arith.constant 0 : index
    %c0_0 = arith.constant 0 : index
    %c0_1 = arith.constant 0 : index
    %0 = vector.load %arg1[%c0, %c0_0, %c0_1] : memref<1x8x32xf32, #tpu.memory_space<vmem>>, vector<1x8x32xf32>
    %1 = vector.shape_cast %0 : vector<1x8x32xf32> to vector<8x32xf32>
    %c0_2 = arith.constant 0 : index
    %c0_3 = arith.constant 0 : index
    %c0_4 = arith.constant 0 : index
    %2 = vector.load %arg2[%c0_2, %c0_3, %c0_4] : memref<1x8x32xf32, #tpu.memory_space<vmem>>, vector<1x8x32xf32>
    %3 = vector.shape_cast %2 : vector<1x8x32xf32> to vector<8x32xf32>
    %c0_5 = arith.constant 0 : index
    %c0_6 = arith.constant 0 : index
    %c0_7 = arith.constant 0 : index
    %4 = vector.load %arg3[%c0_5, %c0_6, %c0_7] : memref<1x8x8xf32, #tpu.memory_space<vmem>>, vector<1x8x8xf32>
    %5 = vector.shape_cast %4 : vector<1x8x8xf32> to vector<8x8xf32>
    %cst = arith.constant 0.000000e+00 : f32
    %6 = vector.broadcast %cst : f32 to vector<8x8xf32>
    %7 = arith.cmpf oeq, %5, %6 : vector<8x8xf32>
    %cst_8 = arith.constant -1.000000e+09 : f32
    %cst_9 = arith.constant 0.000000e+00 : f32
    %8 = vector.broadcast %cst_8 : f32 to vector<8x8xf32>
    %9 = vector.broadcast %cst_9 : f32 to vector<8x8xf32>
    %10 = arith.select %7, %8, %9 : vector<8x8xi1>, vector<8x8xf32>
    %c0_10 = arith.constant 0 : index
    %c0_11 = arith.constant 0 : index
    %c0_12 = arith.constant 0 : index
    %11 = vector.load %arg4[%c0_10, %c0_11, %c0_12] : memref<1x8x8xf32, #tpu.memory_space<vmem>>, vector<1x8x8xf32>
    %12 = vector.shape_cast %11 : vector<1x8x8xf32> to vector<8x8xf32>
    %cst_13 = arith.constant 0.000000e+00 : f32
    %13 = vector.broadcast %cst_13 : f32 to vector<8x8xf32>
    %14 = arith.cmpf oeq, %12, %13 : vector<8x8xf32>
    %cst_14 = arith.constant -1.000000e+09 : f32
    %cst_15 = arith.constant 0.000000e+00 : f32
    %15 = vector.broadcast %cst_14 : f32 to vector<8x8xf32>
    %16 = vector.broadcast %cst_15 : f32 to vector<8x8xf32>
    %17 = arith.select %14, %15, %16 : vector<8x8xi1>, vector<8x8xf32>
    %c0_16 = arith.constant 0 : index
    %18 = memref.load %arg21[%c0_16] : memref<3xf32, #tpu.memory_space<smem>>
    %c0_17 = arith.constant 0 : index
    %19 = memref.load %arg22[%c0_17] : memref<3xf32, #tpu.memory_space<smem>>
    %cst_18 = arith.constant dense<0.000000e+00> : vector<8xf32>
    %20 = vector.multi_reduction <add>, %1, %cst_18 [1] : vector<8x32xf32> to vector<8xf32>
    %21 = vector.shape_cast %20 : vector<8xf32> to vector<8x1xf32>
    %cst_19 = arith.constant 3.200000e+01 : f32
    %22 = vector.broadcast %cst_19 : f32 to vector<8x1xf32>
    %23 = arith.divf %21, %22 : vector<8x1xf32>
    %24 = vector.broadcast %23 : vector<8x1xf32> to vector<8x32xf32>
    %25 = arith.subf %1, %24 : vector<8x32xf32>
    %26 = arith.mulf %25, %25 : vector<8x32xf32>
    %cst_20 = arith.constant dense<0.000000e+00> : vector<8xf32>
    %27 = vector.multi_reduction <add>, %26, %cst_20 [1] : vector<8x32xf32> to vector<8xf32>
    %28 = vector.shape_cast %27 : vector<8xf32> to vector<8x1xf32>
    %cst_21 = arith.constant 0.0322580636 : f32
    %29 = vector.broadcast %cst_21 : f32 to vector<8x1xf32>
    %30 = arith.mulf %28, %29 : vector<8x1xf32>
    %31 = math.sqrt %30 : vector<8x1xf32>
    %cst_22 = arith.constant 9.99999997E-7 : f32
    %32 = vector.broadcast %cst_22 : f32 to vector<8x1xf32>
    %33 = arith.addf %31, %32 : vector<8x1xf32>
    %34 = tpu.reciprocal %33 {approx = true} : vector<8x1xf32> -> vector<8x1xf32>
    %35 = vector.broadcast %18 : f32 to vector<8x1xf32>
    %36 = arith.mulf %35, %34 : vector<8x1xf32>
    %37 = vector.broadcast %36 : vector<8x1xf32> to vector<8x32xf32>
    %38 = arith.mulf %25, %37 : vector<8x32xf32>
    %39 = vector.broadcast %19 : f32 to vector<8x32xf32>
    %40 = arith.addf %38, %39 : vector<8x32xf32>
    %41 = arith.truncf %40 : vector<8x32xf32> to vector<8x32xbf16>
    %c0_23 = arith.constant 0 : index
    %c0_24 = arith.constant 0 : index
    %42 = vector.load %arg5[%c0_23, %c0_24] : memref<32x32xbf16, #tpu.memory_space<vmem>>, vector<32x32xbf16>
    %cst_25 = arith.constant dense<0.000000e+00> : vector<8x32xf32>
    %43 = tpu.matmul %41, %42, %cst_25 {dimension_numbers = #tpu.dot_dimension_numbers<[1], [0], [0], [1], [0, 0, 1, 1], [], []>} : vector<8x32xbf16>, vector<32x32xbf16>, vector<8x32xf32> -> vector<8x32xf32>
    %c0_26 = arith.constant 0 : index
    %c0_27 = arith.constant 0 : index
    %44 = vector.load %arg6[%c0_26, %c0_27] : memref<1x32xf32, #tpu.memory_space<vmem>>, vector<1x32xf32>
    %45 = vector.broadcast %44 : vector<1x32xf32> to vector<8x32xf32>
    %46 = arith.addf %43, %45 : vector<8x32xf32>
    %c0_28 = arith.constant 0 : index
    %c0_29 = arith.constant 0 : index
    %47 = vector.load %arg7[%c0_28, %c0_29] : memref<32x64xbf16, #tpu.memory_space<vmem>>, vector<32x64xbf16>
    %cst_30 = arith.constant dense<0.000000e+00> : vector<8x64xf32>
    %48 = tpu.matmul %41, %47, %cst_30 {dimension_numbers = #tpu.dot_dimension_numbers<[1], [0], [0], [1], [0, 0, 1, 1], [], []>} : vector<8x32xbf16>, vector<32x64xbf16>, vector<8x64xf32> -> vector<8x64xf32>
    %c0_31 = arith.constant 0 : index
    %c0_32 = arith.constant 0 : index
    %49 = vector.load %arg8[%c0_31, %c0_32] : memref<1x64xf32, #tpu.memory_space<vmem>>, vector<1x64xf32>
    %50 = vector.broadcast %49 : vector<1x64xf32> to vector<8x64xf32>
    %51 = arith.addf %48, %50 : vector<8x64xf32>
    %cst_33 = arith.constant 0.353553385 : f32
    %52 = vector.broadcast %cst_33 : f32 to vector<8x32xf32>
    %53 = arith.mulf %46, %52 : vector<8x32xf32>
    %c0_34 = arith.constant 0 : index
    %c0_35 = arith.constant 0 : index
    %54 = vector.load %arg9[%c0_34, %c0_35] : memref<32x32xbf16, #tpu.memory_space<vmem>>, vector<32x32xbf16>
    %cst_36 = arith.constant 0.000000e+00 : f32
    %55 = vector.broadcast %cst_36 : f32 to vector<8x32xf32>
    %56 = vector.extract_strided_slice %53 {offsets = [0, 0], sizes = [8, 8], strides = [1, 1]} : vector<8x32xf32> to vector<8x8xf32>
    %57 = arith.truncf %56 : vector<8x8xf32> to vector<8x8xbf16>
    %58 = vector.extract_strided_slice %51 {offsets = [0, 0], sizes = [8, 8], strides = [1, 1]} : vector<8x64xf32> to vector<8x8xf32>
    %59 = arith.truncf %58 : vector<8x8xf32> to vector<8x8xbf16>
    %60 = vector.extract_strided_slice %51 {offsets = [0, 32], sizes = [8, 8], strides = [1, 1]} : vector<8x64xf32> to vector<8x8xf32>
    %61 = arith.truncf %60 : vector<8x8xf32> to vector<8x8xbf16>
    %cst_37 = arith.constant dense<0.000000e+00> : vector<8x8xf32>
    %62 = tpu.matmul %57, %59, %cst_37 {dimension_numbers = #tpu.dot_dimension_numbers<[1], [1], [0], [0], [0, 0, 1, 0], [], []>} : vector<8x8xbf16>, vector<8x8xbf16>, vector<8x8xf32> -> vector<8x8xf32>
    %63 = arith.addf %62, %10 : vector<8x8xf32>
    %cst_38 = arith.constant dense<0xFF800000> : vector<8xf32>
    %64 = vector.multi_reduction <maximumf>, %63, %cst_38 [1] : vector<8x8xf32> to vector<8xf32>
    %65 = vector.shape_cast %64 : vector<8xf32> to vector<8x1xf32>
    %66 = vector.broadcast %65 : vector<8x1xf32> to vector<8x8xf32>
    %67 = arith.subf %63, %66 : vector<8x8xf32>
    %68 = math.exp %67 : vector<8x8xf32>
    %cst_39 = arith.constant dense<0.000000e+00> : vector<8xf32>
    %69 = vector.multi_reduction <add>, %68, %cst_39 [1] : vector<8x8xf32> to vector<8xf32>
    %70 = vector.shape_cast %69 : vector<8xf32> to vector<8x1xf32>
    %71 = tpu.reciprocal %70 {approx = true} : vector<8x1xf32> -> vector<8x1xf32>
    %72 = vector.broadcast %71 : vector<8x1xf32> to vector<8x8xf32>
    %73 = arith.mulf %68, %72 : vector<8x8xf32>
    %74 = arith.truncf %73 : vector<8x8xf32> to vector<8x8xbf16>
    %cst_40 = arith.constant dense<0.000000e+00> : vector<8x8xf32>
    %75 = tpu.matmul %74, %61, %cst_40 {dimension_numbers = #tpu.dot_dimension_numbers<[1], [0], [0], [1], [0, 0, 1, 1], [], []>} : vector<8x8xbf16>, vector<8x8xbf16>, vector<8x8xf32> -> vector<8x8xf32>
    %76 = arith.truncf %75 : vector<8x8xf32> to vector<8x8xbf16>
    %77 = vector.extract_strided_slice %54 {offsets = [0, 0], sizes = [8, 32], strides = [1, 1]} : vector<32x32xbf16> to vector<8x32xbf16>
    %cst_41 = arith.constant dense<0.000000e+00> : vector<8x32xf32>
    %78 = tpu.matmul %76, %77, %cst_41 {dimension_numbers = #tpu.dot_dimension_numbers<[1], [0], [0], [1], [0, 0, 1, 1], [], []>} : vector<8x8xbf16>, vector<8x32xbf16>, vector<8x32xf32> -> vector<8x32xf32>
    %79 = arith.addf %55, %78 : vector<8x32xf32>
    %80 = vector.extract_strided_slice %53 {offsets = [0, 8], sizes = [8, 8], strides = [1, 1]} : vector<8x32xf32> to vector<8x8xf32>
    %81 = arith.truncf %80 : vector<8x8xf32> to vector<8x8xbf16>
    %82 = vector.extract_strided_slice %51 {offsets = [0, 8], sizes = [8, 8], strides = [1, 1]} : vector<8x64xf32> to vector<8x8xf32>
    %83 = arith.truncf %82 : vector<8x8xf32> to vector<8x8xbf16>
    %84 = vector.extract_strided_slice %51 {offsets = [0, 40], sizes = [8, 8], strides = [1, 1]} : vector<8x64xf32> to vector<8x8xf32>
    %85 = arith.truncf %84 : vector<8x8xf32> to vector<8x8xbf16>
    %cst_42 = arith.constant dense<0.000000e+00> : vector<8x8xf32>
    %86 = tpu.matmul %81, %83, %cst_42 {dimension_numbers = #tpu.dot_dimension_numbers<[1], [1], [0], [0], [0, 0, 1, 0], [], []>} : vector<8x8xbf16>, vector<8x8xbf16>, vector<8x8xf32> -> vector<8x8xf32>
    %87 = arith.addf %86, %10 : vector<8x8xf32>
    %cst_43 = arith.constant dense<0xFF800000> : vector<8xf32>
    %88 = vector.multi_reduction <maximumf>, %87, %cst_43 [1] : vector<8x8xf32> to vector<8xf32>
    %89 = vector.shape_cast %88 : vector<8xf32> to vector<8x1xf32>
    %90 = vector.broadcast %89 : vector<8x1xf32> to vector<8x8xf32>
    %91 = arith.subf %87, %90 : vector<8x8xf32>
    %92 = math.exp %91 : vector<8x8xf32>
    %cst_44 = arith.constant dense<0.000000e+00> : vector<8xf32>
    %93 = vector.multi_reduction <add>, %92, %cst_44 [1] : vector<8x8xf32> to vector<8xf32>
    %94 = vector.shape_cast %93 : vector<8xf32> to vector<8x1xf32>
    %95 = tpu.reciprocal %94 {approx = true} : vector<8x1xf32> -> vector<8x1xf32>
    %96 = vector.broadcast %95 : vector<8x1xf32> to vector<8x8xf32>
    %97 = arith.mulf %92, %96 : vector<8x8xf32>
    %98 = arith.truncf %97 : vector<8x8xf32> to vector<8x8xbf16>
    %cst_45 = arith.constant dense<0.000000e+00> : vector<8x8xf32>
    %99 = tpu.matmul %98, %85, %cst_45 {dimension_numbers = #tpu.dot_dimension_numbers<[1], [0], [0], [1], [0, 0, 1, 1], [], []>} : vector<8x8xbf16>, vector<8x8xbf16>, vector<8x8xf32> -> vector<8x8xf32>
    %100 = arith.truncf %99 : vector<8x8xf32> to vector<8x8xbf16>
    %101 = vector.extract_strided_slice %54 {offsets = [8, 0], sizes = [8, 32], strides = [1, 1]} : vector<32x32xbf16> to vector<8x32xbf16>
    %cst_46 = arith.constant dense<0.000000e+00> : vector<8x32xf32>
    %102 = tpu.matmul %100, %101, %cst_46 {dimension_numbers = #tpu.dot_dimension_numbers<[1], [0], [0], [1], [0, 0, 1, 1], [], []>} : vector<8x8xbf16>, vector<8x32xbf16>, vector<8x32xf32> -> vector<8x32xf32>
    %103 = arith.addf %79, %102 : vector<8x32xf32>
    %104 = vector.extract_strided_slice %53 {offsets = [0, 16], sizes = [8, 8], strides = [1, 1]} : vector<8x32xf32> to vector<8x8xf32>
    %105 = arith.truncf %104 : vector<8x8xf32> to vector<8x8xbf16>
    %106 = vector.extract_strided_slice %51 {offsets = [0, 16], sizes = [8, 8], strides = [1, 1]} : vector<8x64xf32> to vector<8x8xf32>
    %107 = arith.truncf %106 : vector<8x8xf32> to vector<8x8xbf16>
    %108 = vector.extract_strided_slice %51 {offsets = [0, 48], sizes = [8, 8], strides = [1, 1]} : vector<8x64xf32> to vector<8x8xf32>
    %109 = arith.truncf %108 : vector<8x8xf32> to vector<8x8xbf16>
    %cst_47 = arith.constant dense<0.000000e+00> : vector<8x8xf32>
    %110 = tpu.matmul %105, %107, %cst_47 {dimension_numbers = #tpu.dot_dimension_numbers<[1], [1], [0], [0], [0, 0, 1, 0], [], []>} : vector<8x8xbf16>, vector<8x8xbf16>, vector<8x8xf32> -> vector<8x8xf32>
    %111 = arith.addf %110, %10 : vector<8x8xf32>
    %cst_48 = arith.constant dense<0xFF800000> : vector<8xf32>
    %112 = vector.multi_reduction <maximumf>, %111, %cst_48 [1] : vector<8x8xf32> to vector<8xf32>
    %113 = vector.shape_cast %112 : vector<8xf32> to vector<8x1xf32>
    %114 = vector.broadcast %113 : vector<8x1xf32> to vector<8x8xf32>
    %115 = arith.subf %111, %114 : vector<8x8xf32>
    %116 = math.exp %115 : vector<8x8xf32>
    %cst_49 = arith.constant dense<0.000000e+00> : vector<8xf32>
    %117 = vector.multi_reduction <add>, %116, %cst_49 [1] : vector<8x8xf32> to vector<8xf32>
    %118 = vector.shape_cast %117 : vector<8xf32> to vector<8x1xf32>
    %119 = tpu.reciprocal %118 {approx = true} : vector<8x1xf32> -> vector<8x1xf32>
    %120 = vector.broadcast %119 : vector<8x1xf32> to vector<8x8xf32>
    %121 = arith.mulf %116, %120 : vector<8x8xf32>
    %122 = arith.truncf %121 : vector<8x8xf32> to vector<8x8xbf16>
    %cst_50 = arith.constant dense<0.000000e+00> : vector<8x8xf32>
    %123 = tpu.matmul %122, %109, %cst_50 {dimension_numbers = #tpu.dot_dimension_numbers<[1], [0], [0], [1], [0, 0, 1, 1], [], []>} : vector<8x8xbf16>, vector<8x8xbf16>, vector<8x8xf32> -> vector<8x8xf32>
    %124 = arith.truncf %123 : vector<8x8xf32> to vector<8x8xbf16>
    %125 = vector.extract_strided_slice %54 {offsets = [16, 0], sizes = [8, 32], strides = [1, 1]} : vector<32x32xbf16> to vector<8x32xbf16>
    %cst_51 = arith.constant dense<0.000000e+00> : vector<8x32xf32>
    %126 = tpu.matmul %124, %125, %cst_51 {dimension_numbers = #tpu.dot_dimension_numbers<[1], [0], [0], [1], [0, 0, 1, 1], [], []>} : vector<8x8xbf16>, vector<8x32xbf16>, vector<8x32xf32> -> vector<8x32xf32>
    %127 = arith.addf %103, %126 : vector<8x32xf32>
    %128 = vector.extract_strided_slice %53 {offsets = [0, 24], sizes = [8, 8], strides = [1, 1]} : vector<8x32xf32> to vector<8x8xf32>
    %129 = arith.truncf %128 : vector<8x8xf32> to vector<8x8xbf16>
    %130 = vector.extract_strided_slice %51 {offsets = [0, 24], sizes = [8, 8], strides = [1, 1]} : vector<8x64xf32> to vector<8x8xf32>
    %131 = arith.truncf %130 : vector<8x8xf32> to vector<8x8xbf16>
    %132 = vector.extract_strided_slice %51 {offsets = [0, 56], sizes = [8, 8], strides = [1, 1]} : vector<8x64xf32> to vector<8x8xf32>
    %133 = arith.truncf %132 : vector<8x8xf32> to vector<8x8xbf16>
    %cst_52 = arith.constant dense<0.000000e+00> : vector<8x8xf32>
    %134 = tpu.matmul %129, %131, %cst_52 {dimension_numbers = #tpu.dot_dimension_numbers<[1], [1], [0], [0], [0, 0, 1, 0], [], []>} : vector<8x8xbf16>, vector<8x8xbf16>, vector<8x8xf32> -> vector<8x8xf32>
    %135 = arith.addf %134, %10 : vector<8x8xf32>
    %cst_53 = arith.constant dense<0xFF800000> : vector<8xf32>
    %136 = vector.multi_reduction <maximumf>, %135, %cst_53 [1] : vector<8x8xf32> to vector<8xf32>
    %137 = vector.shape_cast %136 : vector<8xf32> to vector<8x1xf32>
    %138 = vector.broadcast %137 : vector<8x1xf32> to vector<8x8xf32>
    %139 = arith.subf %135, %138 : vector<8x8xf32>
    %140 = math.exp %139 : vector<8x8xf32>
    %cst_54 = arith.constant dense<0.000000e+00> : vector<8xf32>
    %141 = vector.multi_reduction <add>, %140, %cst_54 [1] : vector<8x8xf32> to vector<8xf32>
    %142 = vector.shape_cast %141 : vector<8xf32> to vector<8x1xf32>
    %143 = tpu.reciprocal %142 {approx = true} : vector<8x1xf32> -> vector<8x1xf32>
    %144 = vector.broadcast %143 : vector<8x1xf32> to vector<8x8xf32>
    %145 = arith.mulf %140, %144 : vector<8x8xf32>
    %146 = arith.truncf %145 : vector<8x8xf32> to vector<8x8xbf16>
    %cst_55 = arith.constant dense<0.000000e+00> : vector<8x8xf32>
    %147 = tpu.matmul %146, %133, %cst_55 {dimension_numbers = #tpu.dot_dimension_numbers<[1], [0], [0], [1], [0, 0, 1, 1], [], []>} : vector<8x8xbf16>, vector<8x8xbf16>, vector<8x8xf32> -> vector<8x8xf32>
    %148 = arith.truncf %147 : vector<8x8xf32> to vector<8x8xbf16>
    %149 = vector.extract_strided_slice %54 {offsets = [24, 0], sizes = [8, 32], strides = [1, 1]} : vector<32x32xbf16> to vector<8x32xbf16>
    %cst_56 = arith.constant dense<0.000000e+00> : vector<8x32xf32>
    %150 = tpu.matmul %148, %149, %cst_56 {dimension_numbers = #tpu.dot_dimension_numbers<[1], [0], [0], [1], [0, 0, 1, 1], [], []>} : vector<8x8xbf16>, vector<8x32xbf16>, vector<8x32xf32> -> vector<8x32xf32>
    %151 = arith.addf %127, %150 : vector<8x32xf32>
    %c0_57 = arith.constant 0 : index
    %c0_58 = arith.constant 0 : index
    %152 = vector.load %arg10[%c0_57, %c0_58] : memref<1x32xf32, #tpu.memory_space<vmem>>, vector<1x32xf32>
    %153 = vector.broadcast %152 : vector<1x32xf32> to vector<8x32xf32>
    %154 = arith.addf %151, %153 : vector<8x32xf32>
    %155 = arith.addf %1, %154 : vector<8x32xf32>
    %c1 = arith.constant 1 : index
    %156 = memref.load %arg21[%c1] : memref<3xf32, #tpu.memory_space<smem>>
    %c1_59 = arith.constant 1 : index
    %157 = memref.load %arg22[%c1_59] : memref<3xf32, #tpu.memory_space<smem>>
    %cst_60 = arith.constant dense<0.000000e+00> : vector<8xf32>
    %158 = vector.multi_reduction <add>, %155, %cst_60 [1] : vector<8x32xf32> to vector<8xf32>
    %159 = vector.shape_cast %158 : vector<8xf32> to vector<8x1xf32>
    %cst_61 = arith.constant 3.200000e+01 : f32
    %160 = vector.broadcast %cst_61 : f32 to vector<8x1xf32>
    %161 = arith.divf %159, %160 : vector<8x1xf32>
    %162 = vector.broadcast %161 : vector<8x1xf32> to vector<8x32xf32>
    %163 = arith.subf %155, %162 : vector<8x32xf32>
    %164 = arith.mulf %163, %163 : vector<8x32xf32>
    %cst_62 = arith.constant dense<0.000000e+00> : vector<8xf32>
    %165 = vector.multi_reduction <add>, %164, %cst_62 [1] : vector<8x32xf32> to vector<8xf32>
    %166 = vector.shape_cast %165 : vector<8xf32> to vector<8x1xf32>
    %cst_63 = arith.constant 0.0322580636 : f32
    %167 = vector.broadcast %cst_63 : f32 to vector<8x1xf32>
    %168 = arith.mulf %166, %167 : vector<8x1xf32>
    %169 = math.sqrt %168 : vector<8x1xf32>
    %cst_64 = arith.constant 9.99999997E-7 : f32
    %170 = vector.broadcast %cst_64 : f32 to vector<8x1xf32>
    %171 = arith.addf %169, %170 : vector<8x1xf32>
    %172 = tpu.reciprocal %171 {approx = true} : vector<8x1xf32> -> vector<8x1xf32>
    %173 = vector.broadcast %156 : f32 to vector<8x1xf32>
    %174 = arith.mulf %173, %172 : vector<8x1xf32>
    %175 = vector.broadcast %174 : vector<8x1xf32> to vector<8x32xf32>
    %176 = arith.mulf %163, %175 : vector<8x32xf32>
    %177 = vector.broadcast %157 : f32 to vector<8x32xf32>
    %178 = arith.addf %176, %177 : vector<8x32xf32>
    %179 = arith.truncf %178 : vector<8x32xf32> to vector<8x32xbf16>
    %180 = arith.truncf %3 : vector<8x32xf32> to vector<8x32xbf16>
    %c0_65 = arith.constant 0 : index
    %c0_66 = arith.constant 0 : index
    %181 = vector.load %arg11[%c0_65, %c0_66] : memref<32x32xbf16, #tpu.memory_space<vmem>>, vector<32x32xbf16>
    %cst_67 = arith.constant dense<0.000000e+00> : vector<8x32xf32>
    %182 = tpu.matmul %179, %181, %cst_67 {dimension_numbers = #tpu.dot_dimension_numbers<[1], [0], [0], [1], [0, 0, 1, 1], [], []>} : vector<8x32xbf16>, vector<32x32xbf16>, vector<8x32xf32> -> vector<8x32xf32>
    %c0_68 = arith.constant 0 : index
    %c0_69 = arith.constant 0 : index
    %183 = vector.load %arg12[%c0_68, %c0_69] : memref<1x32xf32, #tpu.memory_space<vmem>>, vector<1x32xf32>
    %184 = vector.broadcast %183 : vector<1x32xf32> to vector<8x32xf32>
    %185 = arith.addf %182, %184 : vector<8x32xf32>
    %c0_70 = arith.constant 0 : index
    %c0_71 = arith.constant 0 : index
    %186 = vector.load %arg13[%c0_70, %c0_71] : memref<32x64xbf16, #tpu.memory_space<vmem>>, vector<32x64xbf16>
    %cst_72 = arith.constant dense<0.000000e+00> : vector<8x64xf32>
    %187 = tpu.matmul %180, %186, %cst_72 {dimension_numbers = #tpu.dot_dimension_numbers<[1], [0], [0], [1], [0, 0, 1, 1], [], []>} : vector<8x32xbf16>, vector<32x64xbf16>, vector<8x64xf32> -> vector<8x64xf32>
    %c0_73 = arith.constant 0 : index
    %c0_74 = arith.constant 0 : index
    %188 = vector.load %arg14[%c0_73, %c0_74] : memref<1x64xf32, #tpu.memory_space<vmem>>, vector<1x64xf32>
    %189 = vector.broadcast %188 : vector<1x64xf32> to vector<8x64xf32>
    %190 = arith.addf %187, %189 : vector<8x64xf32>
    %cst_75 = arith.constant 0.353553385 : f32
    %191 = vector.broadcast %cst_75 : f32 to vector<8x32xf32>
    %192 = arith.mulf %185, %191 : vector<8x32xf32>
    %c0_76 = arith.constant 0 : index
    %c0_77 = arith.constant 0 : index
    %193 = vector.load %arg15[%c0_76, %c0_77] : memref<32x32xbf16, #tpu.memory_space<vmem>>, vector<32x32xbf16>
    %cst_78 = arith.constant 0.000000e+00 : f32
    %194 = vector.broadcast %cst_78 : f32 to vector<8x32xf32>
    %195 = vector.extract_strided_slice %192 {offsets = [0, 0], sizes = [8, 8], strides = [1, 1]} : vector<8x32xf32> to vector<8x8xf32>
    %196 = arith.truncf %195 : vector<8x8xf32> to vector<8x8xbf16>
    %197 = vector.extract_strided_slice %190 {offsets = [0, 0], sizes = [8, 8], strides = [1, 1]} : vector<8x64xf32> to vector<8x8xf32>
    %198 = arith.truncf %197 : vector<8x8xf32> to vector<8x8xbf16>
    %199 = vector.extract_strided_slice %190 {offsets = [0, 32], sizes = [8, 8], strides = [1, 1]} : vector<8x64xf32> to vector<8x8xf32>
    %200 = arith.truncf %199 : vector<8x8xf32> to vector<8x8xbf16>
    %cst_79 = arith.constant dense<0.000000e+00> : vector<8x8xf32>
    %201 = tpu.matmul %196, %198, %cst_79 {dimension_numbers = #tpu.dot_dimension_numbers<[1], [1], [0], [0], [0, 0, 1, 0], [], []>} : vector<8x8xbf16>, vector<8x8xbf16>, vector<8x8xf32> -> vector<8x8xf32>
    %202 = arith.addf %201, %17 : vector<8x8xf32>
    %cst_80 = arith.constant dense<0xFF800000> : vector<8xf32>
    %203 = vector.multi_reduction <maximumf>, %202, %cst_80 [1] : vector<8x8xf32> to vector<8xf32>
    %204 = vector.shape_cast %203 : vector<8xf32> to vector<8x1xf32>
    %205 = vector.broadcast %204 : vector<8x1xf32> to vector<8x8xf32>
    %206 = arith.subf %202, %205 : vector<8x8xf32>
    %207 = math.exp %206 : vector<8x8xf32>
    %cst_81 = arith.constant dense<0.000000e+00> : vector<8xf32>
    %208 = vector.multi_reduction <add>, %207, %cst_81 [1] : vector<8x8xf32> to vector<8xf32>
    %209 = vector.shape_cast %208 : vector<8xf32> to vector<8x1xf32>
    %210 = tpu.reciprocal %209 {approx = true} : vector<8x1xf32> -> vector<8x1xf32>
    %211 = vector.broadcast %210 : vector<8x1xf32> to vector<8x8xf32>
    %212 = arith.mulf %207, %211 : vector<8x8xf32>
    %213 = arith.truncf %212 : vector<8x8xf32> to vector<8x8xbf16>
    %cst_82 = arith.constant dense<0.000000e+00> : vector<8x8xf32>
    %214 = tpu.matmul %213, %200, %cst_82 {dimension_numbers = #tpu.dot_dimension_numbers<[1], [0], [0], [1], [0, 0, 1, 1], [], []>} : vector<8x8xbf16>, vector<8x8xbf16>, vector<8x8xf32> -> vector<8x8xf32>
    %215 = arith.truncf %214 : vector<8x8xf32> to vector<8x8xbf16>
    %216 = vector.extract_strided_slice %193 {offsets = [0, 0], sizes = [8, 32], strides = [1, 1]} : vector<32x32xbf16> to vector<8x32xbf16>
    %cst_83 = arith.constant dense<0.000000e+00> : vector<8x32xf32>
    %217 = tpu.matmul %215, %216, %cst_83 {dimension_numbers = #tpu.dot_dimension_numbers<[1], [0], [0], [1], [0, 0, 1, 1], [], []>} : vector<8x8xbf16>, vector<8x32xbf16>, vector<8x32xf32> -> vector<8x32xf32>
    %218 = arith.addf %194, %217 : vector<8x32xf32>
    %219 = vector.extract_strided_slice %192 {offsets = [0, 8], sizes = [8, 8], strides = [1, 1]} : vector<8x32xf32> to vector<8x8xf32>
    %220 = arith.truncf %219 : vector<8x8xf32> to vector<8x8xbf16>
    %221 = vector.extract_strided_slice %190 {offsets = [0, 8], sizes = [8, 8], strides = [1, 1]} : vector<8x64xf32> to vector<8x8xf32>
    %222 = arith.truncf %221 : vector<8x8xf32> to vector<8x8xbf16>
    %223 = vector.extract_strided_slice %190 {offsets = [0, 40], sizes = [8, 8], strides = [1, 1]} : vector<8x64xf32> to vector<8x8xf32>
    %224 = arith.truncf %223 : vector<8x8xf32> to vector<8x8xbf16>
    %cst_84 = arith.constant dense<0.000000e+00> : vector<8x8xf32>
    %225 = tpu.matmul %220, %222, %cst_84 {dimension_numbers = #tpu.dot_dimension_numbers<[1], [1], [0], [0], [0, 0, 1, 0], [], []>} : vector<8x8xbf16>, vector<8x8xbf16>, vector<8x8xf32> -> vector<8x8xf32>
    %226 = arith.addf %225, %17 : vector<8x8xf32>
    %cst_85 = arith.constant dense<0xFF800000> : vector<8xf32>
    %227 = vector.multi_reduction <maximumf>, %226, %cst_85 [1] : vector<8x8xf32> to vector<8xf32>
    %228 = vector.shape_cast %227 : vector<8xf32> to vector<8x1xf32>
    %229 = vector.broadcast %228 : vector<8x1xf32> to vector<8x8xf32>
    %230 = arith.subf %226, %229 : vector<8x8xf32>
    %231 = math.exp %230 : vector<8x8xf32>
    %cst_86 = arith.constant dense<0.000000e+00> : vector<8xf32>
    %232 = vector.multi_reduction <add>, %231, %cst_86 [1] : vector<8x8xf32> to vector<8xf32>
    %233 = vector.shape_cast %232 : vector<8xf32> to vector<8x1xf32>
    %234 = tpu.reciprocal %233 {approx = true} : vector<8x1xf32> -> vector<8x1xf32>
    %235 = vector.broadcast %234 : vector<8x1xf32> to vector<8x8xf32>
    %236 = arith.mulf %231, %235 : vector<8x8xf32>
    %237 = arith.truncf %236 : vector<8x8xf32> to vector<8x8xbf16>
    %cst_87 = arith.constant dense<0.000000e+00> : vector<8x8xf32>
    %238 = tpu.matmul %237, %224, %cst_87 {dimension_numbers = #tpu.dot_dimension_numbers<[1], [0], [0], [1], [0, 0, 1, 1], [], []>} : vector<8x8xbf16>, vector<8x8xbf16>, vector<8x8xf32> -> vector<8x8xf32>
    %239 = arith.truncf %238 : vector<8x8xf32> to vector<8x8xbf16>
    %240 = vector.extract_strided_slice %193 {offsets = [8, 0], sizes = [8, 32], strides = [1, 1]} : vector<32x32xbf16> to vector<8x32xbf16>
    %cst_88 = arith.constant dense<0.000000e+00> : vector<8x32xf32>
    %241 = tpu.matmul %239, %240, %cst_88 {dimension_numbers = #tpu.dot_dimension_numbers<[1], [0], [0], [1], [0, 0, 1, 1], [], []>} : vector<8x8xbf16>, vector<8x32xbf16>, vector<8x32xf32> -> vector<8x32xf32>
    %242 = arith.addf %218, %241 : vector<8x32xf32>
    %243 = vector.extract_strided_slice %192 {offsets = [0, 16], sizes = [8, 8], strides = [1, 1]} : vector<8x32xf32> to vector<8x8xf32>
    %244 = arith.truncf %243 : vector<8x8xf32> to vector<8x8xbf16>
    %245 = vector.extract_strided_slice %190 {offsets = [0, 16], sizes = [8, 8], strides = [1, 1]} : vector<8x64xf32> to vector<8x8xf32>
    %246 = arith.truncf %245 : vector<8x8xf32> to vector<8x8xbf16>
    %247 = vector.extract_strided_slice %190 {offsets = [0, 48], sizes = [8, 8], strides = [1, 1]} : vector<8x64xf32> to vector<8x8xf32>
    %248 = arith.truncf %247 : vector<8x8xf32> to vector<8x8xbf16>
    %cst_89 = arith.constant dense<0.000000e+00> : vector<8x8xf32>
    %249 = tpu.matmul %244, %246, %cst_89 {dimension_numbers = #tpu.dot_dimension_numbers<[1], [1], [0], [0], [0, 0, 1, 0], [], []>} : vector<8x8xbf16>, vector<8x8xbf16>, vector<8x8xf32> -> vector<8x8xf32>
    %250 = arith.addf %249, %17 : vector<8x8xf32>
    %cst_90 = arith.constant dense<0xFF800000> : vector<8xf32>
    %251 = vector.multi_reduction <maximumf>, %250, %cst_90 [1] : vector<8x8xf32> to vector<8xf32>
    %252 = vector.shape_cast %251 : vector<8xf32> to vector<8x1xf32>
    %253 = vector.broadcast %252 : vector<8x1xf32> to vector<8x8xf32>
    %254 = arith.subf %250, %253 : vector<8x8xf32>
    %255 = math.exp %254 : vector<8x8xf32>
    %cst_91 = arith.constant dense<0.000000e+00> : vector<8xf32>
    %256 = vector.multi_reduction <add>, %255, %cst_91 [1] : vector<8x8xf32> to vector<8xf32>
    %257 = vector.shape_cast %256 : vector<8xf32> to vector<8x1xf32>
    %258 = tpu.reciprocal %257 {approx = true} : vector<8x1xf32> -> vector<8x1xf32>
    %259 = vector.broadcast %258 : vector<8x1xf32> to vector<8x8xf32>
    %260 = arith.mulf %255, %259 : vector<8x8xf32>
    %261 = arith.truncf %260 : vector<8x8xf32> to vector<8x8xbf16>
    %cst_92 = arith.constant dense<0.000000e+00> : vector<8x8xf32>
    %262 = tpu.matmul %261, %248, %cst_92 {dimension_numbers = #tpu.dot_dimension_numbers<[1], [0], [0], [1], [0, 0, 1, 1], [], []>} : vector<8x8xbf16>, vector<8x8xbf16>, vector<8x8xf32> -> vector<8x8xf32>
    %263 = arith.truncf %262 : vector<8x8xf32> to vector<8x8xbf16>
    %264 = vector.extract_strided_slice %193 {offsets = [16, 0], sizes = [8, 32], strides = [1, 1]} : vector<32x32xbf16> to vector<8x32xbf16>
    %cst_93 = arith.constant dense<0.000000e+00> : vector<8x32xf32>
    %265 = tpu.matmul %263, %264, %cst_93 {dimension_numbers = #tpu.dot_dimension_numbers<[1], [0], [0], [1], [0, 0, 1, 1], [], []>} : vector<8x8xbf16>, vector<8x32xbf16>, vector<8x32xf32> -> vector<8x32xf32>
    %266 = arith.addf %242, %265 : vector<8x32xf32>
    %267 = vector.extract_strided_slice %192 {offsets = [0, 24], sizes = [8, 8], strides = [1, 1]} : vector<8x32xf32> to vector<8x8xf32>
    %268 = arith.truncf %267 : vector<8x8xf32> to vector<8x8xbf16>
    %269 = vector.extract_strided_slice %190 {offsets = [0, 24], sizes = [8, 8], strides = [1, 1]} : vector<8x64xf32> to vector<8x8xf32>
    %270 = arith.truncf %269 : vector<8x8xf32> to vector<8x8xbf16>
    %271 = vector.extract_strided_slice %190 {offsets = [0, 56], sizes = [8, 8], strides = [1, 1]} : vector<8x64xf32> to vector<8x8xf32>
    %272 = arith.truncf %271 : vector<8x8xf32> to vector<8x8xbf16>
    %cst_94 = arith.constant dense<0.000000e+00> : vector<8x8xf32>
    %273 = tpu.matmul %268, %270, %cst_94 {dimension_numbers = #tpu.dot_dimension_numbers<[1], [1], [0], [0], [0, 0, 1, 0], [], []>} : vector<8x8xbf16>, vector<8x8xbf16>, vector<8x8xf32> -> vector<8x8xf32>
    %274 = arith.addf %273, %17 : vector<8x8xf32>
    %cst_95 = arith.constant dense<0xFF800000> : vector<8xf32>
    %275 = vector.multi_reduction <maximumf>, %274, %cst_95 [1] : vector<8x8xf32> to vector<8xf32>
    %276 = vector.shape_cast %275 : vector<8xf32> to vector<8x1xf32>
    %277 = vector.broadcast %276 : vector<8x1xf32> to vector<8x8xf32>
    %278 = arith.subf %274, %277 : vector<8x8xf32>
    %279 = math.exp %278 : vector<8x8xf32>
    %cst_96 = arith.constant dense<0.000000e+00> : vector<8xf32>
    %280 = vector.multi_reduction <add>, %279, %cst_96 [1] : vector<8x8xf32> to vector<8xf32>
    %281 = vector.shape_cast %280 : vector<8xf32> to vector<8x1xf32>
    %282 = tpu.reciprocal %281 {approx = true} : vector<8x1xf32> -> vector<8x1xf32>
    %283 = vector.broadcast %282 : vector<8x1xf32> to vector<8x8xf32>
    %284 = arith.mulf %279, %283 : vector<8x8xf32>
    %285 = arith.truncf %284 : vector<8x8xf32> to vector<8x8xbf16>
    %cst_97 = arith.constant dense<0.000000e+00> : vector<8x8xf32>
    %286 = tpu.matmul %285, %272, %cst_97 {dimension_numbers = #tpu.dot_dimension_numbers<[1], [0], [0], [1], [0, 0, 1, 1], [], []>} : vector<8x8xbf16>, vector<8x8xbf16>, vector<8x8xf32> -> vector<8x8xf32>
    %287 = arith.truncf %286 : vector<8x8xf32> to vector<8x8xbf16>
    %288 = vector.extract_strided_slice %193 {offsets = [24, 0], sizes = [8, 32], strides = [1, 1]} : vector<32x32xbf16> to vector<8x32xbf16>
    %cst_98 = arith.constant dense<0.000000e+00> : vector<8x32xf32>
    %289 = tpu.matmul %287, %288, %cst_98 {dimension_numbers = #tpu.dot_dimension_numbers<[1], [0], [0], [1], [0, 0, 1, 1], [], []>} : vector<8x8xbf16>, vector<8x32xbf16>, vector<8x32xf32> -> vector<8x32xf32>
    %290 = arith.addf %266, %289 : vector<8x32xf32>
    %c0_99 = arith.constant 0 : index
    %c0_100 = arith.constant 0 : index
    %291 = vector.load %arg16[%c0_99, %c0_100] : memref<1x32xf32, #tpu.memory_space<vmem>>, vector<1x32xf32>
    %292 = vector.broadcast %291 : vector<1x32xf32> to vector<8x32xf32>
    %293 = arith.addf %290, %292 : vector<8x32xf32>
    %294 = arith.addf %155, %293 : vector<8x32xf32>
    %c2 = arith.constant 2 : index
    %295 = memref.load %arg21[%c2] : memref<3xf32, #tpu.memory_space<smem>>
    %c2_101 = arith.constant 2 : index
    %296 = memref.load %arg22[%c2_101] : memref<3xf32, #tpu.memory_space<smem>>
    %cst_102 = arith.constant dense<0.000000e+00> : vector<8xf32>
    %297 = vector.multi_reduction <add>, %294, %cst_102 [1] : vector<8x32xf32> to vector<8xf32>
    %298 = vector.shape_cast %297 : vector<8xf32> to vector<8x1xf32>
    %cst_103 = arith.constant 3.200000e+01 : f32
    %299 = vector.broadcast %cst_103 : f32 to vector<8x1xf32>
    %300 = arith.divf %298, %299 : vector<8x1xf32>
    %301 = vector.broadcast %300 : vector<8x1xf32> to vector<8x32xf32>
    %302 = arith.subf %294, %301 : vector<8x32xf32>
    %303 = arith.mulf %302, %302 : vector<8x32xf32>
    %cst_104 = arith.constant dense<0.000000e+00> : vector<8xf32>
    %304 = vector.multi_reduction <add>, %303, %cst_104 [1] : vector<8x32xf32> to vector<8xf32>
    %305 = vector.shape_cast %304 : vector<8xf32> to vector<8x1xf32>
    %cst_105 = arith.constant 0.0322580636 : f32
    %306 = vector.broadcast %cst_105 : f32 to vector<8x1xf32>
    %307 = arith.mulf %305, %306 : vector<8x1xf32>
    %308 = math.sqrt %307 : vector<8x1xf32>
    %cst_106 = arith.constant 9.99999997E-7 : f32
    %309 = vector.broadcast %cst_106 : f32 to vector<8x1xf32>
    %310 = arith.addf %308, %309 : vector<8x1xf32>
    %311 = tpu.reciprocal %310 {approx = true} : vector<8x1xf32> -> vector<8x1xf32>
    %312 = vector.broadcast %295 : f32 to vector<8x1xf32>
    %313 = arith.mulf %312, %311 : vector<8x1xf32>
    %314 = vector.broadcast %313 : vector<8x1xf32> to vector<8x32xf32>
    %315 = arith.mulf %302, %314 : vector<8x32xf32>
    %316 = vector.broadcast %296 : f32 to vector<8x32xf32>
    %317 = arith.addf %315, %316 : vector<8x32xf32>
    %318 = arith.truncf %317 : vector<8x32xf32> to vector<8x32xbf16>
    %c0_107 = arith.constant 0 : index
    %c0_108 = arith.constant 0 : index
    %319 = vector.load %arg17[%c0_107, %c0_108] : memref<32x64xbf16, #tpu.memory_space<vmem>>, vector<32x64xbf16>
    %cst_109 = arith.constant dense<0.000000e+00> : vector<8x64xf32>
    %320 = tpu.matmul %318, %319, %cst_109 {dimension_numbers = #tpu.dot_dimension_numbers<[1], [0], [0], [1], [0, 0, 1, 1], [], []>} : vector<8x32xbf16>, vector<32x64xbf16>, vector<8x64xf32> -> vector<8x64xf32>
    %c0_110 = arith.constant 0 : index
    %c0_111 = arith.constant 0 : index
    %321 = vector.load %arg18[%c0_110, %c0_111] : memref<1x64xf32, #tpu.memory_space<vmem>>, vector<1x64xf32>
    %322 = vector.broadcast %321 : vector<1x64xf32> to vector<8x64xf32>
    %323 = arith.addf %320, %322 : vector<8x64xf32>
    %cst_112 = arith.constant 0.000000e+00 : f32
    %324 = vector.broadcast %cst_112 : f32 to vector<8x64xf32>
    %325 = arith.maximumf %323, %324 : vector<8x64xf32>
    %326 = arith.truncf %325 : vector<8x64xf32> to vector<8x64xbf16>
    %c0_113 = arith.constant 0 : index
    %c0_114 = arith.constant 0 : index
    %327 = vector.load %arg19[%c0_113, %c0_114] : memref<64x32xbf16, #tpu.memory_space<vmem>>, vector<64x32xbf16>
    %cst_115 = arith.constant dense<0.000000e+00> : vector<8x32xf32>
    %328 = tpu.matmul %326, %327, %cst_115 {dimension_numbers = #tpu.dot_dimension_numbers<[1], [0], [0], [1], [0, 0, 1, 1], [], []>} : vector<8x64xbf16>, vector<64x32xbf16>, vector<8x32xf32> -> vector<8x32xf32>
    %c0_116 = arith.constant 0 : index
    %c0_117 = arith.constant 0 : index
    %329 = vector.load %arg20[%c0_116, %c0_117] : memref<1x32xf32, #tpu.memory_space<vmem>>, vector<1x32xf32>
    %330 = vector.broadcast %329 : vector<1x32xf32> to vector<8x32xf32>
    %331 = arith.addf %328, %330 : vector<8x32xf32>
    %332 = arith.addf %294, %331 : vector<8x32xf32>
    %c0_118 = arith.constant 0 : index
    %c0_119 = arith.constant 0 : index
    %c0_120 = arith.constant 0 : index
    %333 = vector.load %arg23[%c0_118, %c0_119, %c0_120] : memref<1x8x32xf32, #tpu.memory_space<vmem>>, vector<1x8x32xf32>
    %334 = vector.shape_cast %333 : vector<1x8x32xf32> to vector<8x32xf32>
    %335 = vector.shape_cast %332 : vector<8x32xf32> to vector<1x8x32xf32>
    tpu.vector_store %arg23[%c0_118, %c0_119, %c0_120], %335 {strides = array<i32>} : memref<1x8x32xf32, #tpu.memory_space<vmem>>, vector<1x8x32xf32>,
    return
  }
  func.func @transform_0(%arg0: i32) -> (i32, i32, i32) {
    %c0_i32 = arith.constant 0 : i32
    %c0_i32_0 = arith.constant 0 : i32
    %c0_i32_1 = arith.constant 0 : i32
    return %arg0, %c0_i32, %c0_i32_0 : i32, i32, i32
  }
  func.func @transform_1(%arg0: i32) -> (i32, i32, i32) {
    %c0_i32 = arith.constant 0 : i32
    %c0_i32_0 = arith.constant 0 : i32
    %c0_i32_1 = arith.constant 0 : i32
    return %arg0, %c0_i32, %c0_i32_0 : i32, i32, i32
  }
  func.func @transform_2(%arg0: i32) -> (i32, i32, i32) {
    %c0_i32 = arith.constant 0 : i32
    %c0_i32_0 = arith.constant 0 : i32
    %c0_i32_1 = arith.constant 0 : i32
    return %arg0, %c0_i32, %c0_i32_0 : i32, i32, i32
  }
  func.func @transform_3(%arg0: i32) -> (i32, i32, i32) {
    %c0_i32 = arith.constant 0 : i32
    %c0_i32_0 = arith.constant 0 : i32
    %c0_i32_1 = arith.constant 0 : i32
    return %arg0, %c0_i32, %c0_i32_0 : i32, i32, i32
  }
  func.func @transform_4(%arg0: i32) -> (i32, i32) {
    %c0_i32 = arith.constant 0 : i32
    %c0_i32_0 = arith.constant 0 : i32
    %c0_i32_1 = arith.constant 0 : i32
    return %c0_i32, %c0_i32_0 : i32, i32
  }
  func.func @transform_5(%arg0: i32) -> (i32, i32) {
    %c0_i32 = arith.constant 0 : i32
    %c0_i32_0 = arith.constant 0 : i32
    %c0_i32_1 = arith.constant 0 : i32
    return %c0_i32, %c0_i32_0 : i32, i32
  }
  func.func @transform_6(%arg0: i32) -> (i32, i32) {
    %c0_i32 = arith.constant 0 : i32
    %c0_i32_0 = arith.constant 0 : i32
    %c0_i32_1 = arith.constant 0 : i32
    return %c0_i32, %c0_i32_0 : i32, i32
  }
  func.func @transform_7(%arg0: i32) -> (i32, i32) {
    %c0_i32 = arith.constant 0 : i32
    %c0_i32_0 = arith.constant 0 : i32
    %c0_i32_1 = arith.constant 0 : i32
    return %c0_i32, %c0_i32_0 : i32, i32
  }
  func.func @transform_8(%arg0: i32) -> (i32, i32) {
    %c0_i32 = arith.constant 0 : i32
    %c0_i32_0 = arith.constant 0 : i32
    %c0_i32_1 = arith.constant 0 : i32
    return %c0_i32, %c0_i32_0 : i32, i32
  }
  func.func @transform_9(%arg0: i32) -> (i32, i32) {
    %c0_i32 = arith.constant 0 : i32
    %c0_i32_0 = arith.constant 0 : i32
    %c0_i32_1 = arith.constant 0 : i32
    return %c0_i32, %c0_i32_0 : i32, i32
  }
  func.func @transform_10(%arg0: i32) -> (i32, i32) {
    %c0_i32 = arith.constant 0 : i32
    %c0_i32_0 = arith.constant 0 : i32
    %c0_i32_1 = arith.constant 0 : i32
    return %c0_i32, %c0_i32_0 : i32, i32
  }
  func.func @transform_11(%arg0: i32) -> (i32, i32) {
    %c0_i32 = arith.constant 0 : i32
    %c0_i32_0 = arith.constant 0 : i32
    %c0_i32_1 = arith.constant 0 : i32
    return %c0_i32, %c0_i32_0 : i32, i32
  }
  func.func @transform_12(%arg0: i32) -> (i32, i32) {
    %c0_i32 = arith.constant 0 : i32
    %c0_i32_0 = arith.constant 0 : i32
    %c0_i32_1 = arith.constant 0 : i32
    return %c0_i32, %c0_i32_0 : i32, i32
  }
  func.func @transform_13(%arg0: i32) -> (i32, i32) {
    %c0_i32 = arith.constant 0 : i32
    %c0_i32_0 = arith.constant 0 : i32
    %c0_i32_1 = arith.constant 0 : i32
    return %c0_i32, %c0_i32_0 : i32, i32
  }
  func.func @transform_14(%arg0: i32) -> (i32, i32) {
    %c0_i32 = arith.constant 0 : i32
    %c0_i32_0 = arith.constant 0 : i32
    %c0_i32_1 = arith.constant 0 : i32
    return %c0_i32, %c0_i32_0 : i32, i32
  }
  func.func @transform_15(%arg0: i32) -> (i32, i32) {
    %c0_i32 = arith.constant 0 : i32
    %c0_i32_0 = arith.constant 0 : i32
    %c0_i32_1 = arith.constant 0 : i32
    return %c0_i32, %c0_i32_0 : i32, i32
  }
  func.func @transform_16(%arg0: i32) -> (i32, i32) {
    %c0_i32 = arith.constant 0 : i32
    %c0_i32_0 = arith.constant 0 : i32
    %c0_i32_1 = arith.constant 0 : i32
    return %c0_i32, %c0_i32_0 : i32, i32
  }
  func.func @transform_17(%arg0: i32) -> (i32, i32) {
    %c0_i32 = arith.constant 0 : i32
    %c0_i32_0 = arith.constant 0 : i32
    %c0_i32_1 = arith.constant 0 : i32
    return %c0_i32, %c0_i32_0 : i32, i32
  }
  func.func @transform_18(%arg0: i32) -> (i32, i32) {
    %c0_i32 = arith.constant 0 : i32
    %c0_i32_0 = arith.constant 0 : i32
    %c0_i32_1 = arith.constant 0 : i32
    return %c0_i32, %c0_i32_0 : i32, i32
  }
  func.func @transform_19(%arg0: i32) -> (i32, i32) {
    %c0_i32 = arith.constant 0 : i32
    %c0_i32_0 = arith.constant 0 : i32
    %c0_i32_1 = arith.constant 0 : i32
    return %c0_i32, %c0_i32_0 : i32, i32
  }
  func.func @transform_20(%arg0: i32) -> i32 {
    %c0_i32 = arith.constant 0 : i32
    %c0_i32_0 = arith.constant 0 : i32
    return %c0_i32 : i32
  }
  func.func @transform_21(%arg0: i32) -> i32 {
    %c0_i32 = arith.constant 0 : i32
    %c0_i32_0 = arith.constant 0 : i32
    return %c0_i32 : i32
  }
  func.func @transform_22(%arg0: i32) -> (i32, i32, i32) {
    %c0_i32 = arith.constant 0 : i32
    %c0_i32_0 = arith.constant 0 : i32
    %c0_i32_1 = arith.constant 0 : i32
    return %arg0, %c0_i32, %c0_i32_0 : i32, i32, i32
  }
}

</mosaic_0001>

<llo_original>
// kernel: decoder_block_forward.1
$region0: #{decoder_block_forward.1}
  #allocation0 [shape = 'u32[]', space=smem, size = 0x4, offset = 0x4, fixed_abs, tag = 'smem constant byte address 0x4 - core index']
  #allocation1 [shape = 'u32[144,128]{1,0:T(1,128)}', space=vmem, size = 0x12000, scoped, tag = 'internal scratch']
  %s0 = inlined_call_operand.vmem [shape: f32[2,8,32], index: 0, kind: input, shape index: {}]
  %s1 = inlined_call_operand.vmem [shape: f32[2,8,32], index: 1, kind: input, shape index: {}]
  %s2 = inlined_call_operand.vmem [shape: f32[2,8,8], index: 2, kind: input, shape index: {}]
  %s3 = inlined_call_operand.vmem [shape: f32[2,8,8], index: 3, kind: input, shape index: {}]
  %s4 = inlined_call_operand.vmem [shape: bf16[32,32], index: 4, kind: input, shape index: {}]
  %s5 = inlined_call_operand.vmem [shape: f32[1,32], index: 5, kind: input, shape index: {}]
  %s6 = inlined_call_operand.vmem [shape: bf16[32,64], index: 6, kind: input, shape index: {}]
  %s7 = inlined_call_operand.vmem [shape: f32[1,64], index: 7, kind: input, shape index: {}]
  %s8 = inlined_call_operand.vmem [shape: bf16[32,32], index: 8, kind: input, shape index: {}]
  %s9 = inlined_call_operand.vmem [shape: f32[1,32], index: 9, kind: input, shape index: {}]
  %s10 = inlined_call_operand.vmem [shape: bf16[32,32], index: 10, kind: input, shape index: {}]
  %s11 = inlined_call_operand.hbm [shape: f32[1,32], index: 11, kind: input, shape index: {}]
  %s12 = inlined_call_operand.hbm [shape: bf16[32,64], index: 12, kind: input, shape index: {}]
  %s13 = inlined_call_operand.hbm [shape: f32[1,64], index: 13, kind: input, shape index: {}]
  %s14 = inlined_call_operand.hbm [shape: bf16[32,32], index: 14, kind: input, shape index: {}]
  %s15 = inlined_call_operand.hbm [shape: f32[1,32], index: 15, kind: input, shape index: {}]
  %s16 = inlined_call_operand.hbm [shape: bf16[32,64], index: 16, kind: input, shape index: {}]
  %s17 = inlined_call_operand.hbm [shape: f32[1,64], index: 17, kind: input, shape index: {}]
  %s18 = inlined_call_operand.vmem [shape: bf16[64,32], index: 18, kind: input, shape index: {}]
  %s19 = inlined_call_operand.hbm [shape: f32[1,32], index: 19, kind: input, shape index: {}]
  %s20 = inlined_call_operand.vmem [shape: f32[3], index: 20, kind: input, shape index: {}]
  %s21 = inlined_call_operand.vmem [shape: f32[3], index: 21, kind: input, shape index: {}]
  %s22 = inlined_call_operand.hbm [shape: f32[2,8,32], index: 22, kind: output, shape index: {}]
  %s23 = sld [smem:[#allocation0]]
  $region161: #{decoder_block_forward.1} parent=0
    _
  %s25 = ssub.s32 1, %s23
  %s26 = scalar_select 0, %s25, %s23
  $region1: #{decoder_block_forward.1} parent=0
    #allocation2 [shape = 'u8[512]{0}', space=vmem, size = 0x400, scoped, tag = 'input window, operand 11, single buffered']
    #allocation3 [shape = 's32[2]{0}', space=sflag, size = 0x8, scoped, tag = 'scoped memory for decoder_block_forward.1']
    #allocation4 [shape = 's32[2]{0}', space=sflag, size = 0x8, scoped, tag = 'scoped memory for decoder_block_forward.1']
    #allocation5 [shape = 's32[2]{0}', space=sflag, size = 0x8, scoped, tag = 'scoped memory for decoder_block_forward.1']
    #allocation6 [shape = 'u8[8192]{0}', space=vmem, size = 0x2000, scoped, tag = 'input window, operand 12, single buffered']
    #allocation7 [shape = 's32[1]{0}', space=sflag, size = 0x4, scoped, tag = 'scoped memory for decoder_block_forward.1']
    #allocation8 [shape = 'u8[512]{0}', space=vmem, size = 0x400, scoped, tag = 'input window, operand 13, single buffered']
    #allocation9 [shape = 'u8[8192]{0}', space=vmem, size = 0x2000, scoped, tag = 'input window, operand 14, single buffered']
    #allocation10 [shape = 's32[1]{0}', space=sflag, size = 0x4, scoped, tag = 'scoped memory for decoder_block_forward.1']
    #allocation11 [shape = 'u8[512]{0}', space=vmem, size = 0x400, scoped, tag = 'input window, operand 15, single buffered']
    #allocation12 [shape = 'u8[8192]{0}', space=vmem, size = 0x2000, scoped, tag = 'input window, operand 16, single buffered']
    #allocation13 [shape = 's32[1]{0}', space=sflag, size = 0x4, scoped, tag = 'scoped memory for decoder_block_forward.1']
    #allocation14 [shape = 'u8[512]{0}', space=vmem, size = 0x400, scoped, tag = 'input window, operand 17, single buffered']
    #allocation15 [shape = 'u8[512]{0}', space=vmem, size = 0x400, scoped, tag = 'input window, operand 19, single buffered']
    #allocation16 [shape = 's32[1]{0}', space=sflag, size = 0x4, scoped, tag = 'scoped memory for decoder_block_forward.1']
    #allocation17 [shape = 'u8[512]{0}', space=smem, size = 0x200, scoped, tag = 'input window, operand 20, single buffered']
    #allocation18 [shape = 'u8[512]{0}', space=smem, size = 0x200, scoped, tag = 'input window, operand 21, single buffered']
    #allocation19 [shape = 's32[1]{0}', space=sflag, size = 0x4, scoped, tag = 'scoped memory for decoder_block_forward.1']
    #allocation20 [shape = 'u8[8192]{0}', space=vmem, size = 0x2000, scoped, tag = 'output window, operand 0']
    %27 = vsyncpa [#allocation3], 0
    %28 = vsyncpa [#allocation7], 0
    %29 = vsyncpa [#allocation10], 0
    %30 = vsyncpa [#allocation13], 0
    %31 = vsyncpa [#allocation16], 0
    %32 = vsyncpa [#allocation5], 0
    %33 = vsyncpa [#allocation19], 0
    %34 = vsyncpa [#allocation4], 0
    %s35 = scalar_lea.sflag [#allocation4], 1
    %36 = vsyncpa %s35, 0
    loop: start=0, step=1, limit=4
    $region2: #{decoder_block_forward.1} parent=1 // loop_pre_header
      _
    $region3: #{decoder_block_forward.1} parent=1 // loop_header
      %s38 = sphi 0, %s42
      %p39 = scmp.ge.s32.totalorder %s38, 4
      %s48 = sphi 0, %s50
      %s51 = sphi 0, %s48
      %s52 = sphi 0, %s51
      %s68 = sphi 0, %s52
      %s74 = sphi 0, %s76
      %s77 = sphi 0, %s74
      %s78 = sphi 0, %s77
      %s94 = sphi 0, %s78
      %s100 = sphi 0, %s102
      %s103 = sphi 0, %s100
      %s104 = sphi 0, %s103
      %s120 = sphi 0, %s104
      %s126 = sphi 0, %s128
      %s129 = sphi 0, %s126
      %s130 = sphi 0, %s129
      %s146 = sphi 0, %s130
      %s150 = sphi 0, %s150
      %s152 = sphi 0, %s150
      %s153 = sphi 0, %s152
      %s167 = sphi 0, %s153
      %s171 = sphi 0, %s171
      %s173 = sphi 0, %s171
      %s174 = sphi 0, %s173
      %s188 = sphi 0, %s174
      %s192 = sphi 0, %s192
      %s194 = sphi 0, %s192
      %s195 = sphi 0, %s194
      %s209 = sphi 0, %s195
      %s213 = sphi 0, %s213
      %s215 = sphi 0, %s213
      %s216 = sphi 0, %s215
      %s230 = sphi 0, %s216
      %s234 = sphi 0, %s234
      %s236 = sphi 0, %s234
      %s237 = sphi 0, %s236
      %s251 = sphi 0, %s237
      %s255 = sphi 0, %s255
      %s257 = sphi 0, %s255
      %s258 = sphi 0, %s257
      %s272 = sphi 0, %s258
      %s276 = sphi 0, %s276
      %s278 = sphi 0, %s276
      %s279 = sphi 0, %s278
      %s293 = sphi 0, %s279
      %s297 = sphi 0, %s297
      %s299 = sphi 0, %s297
      %s300 = sphi 0, %s299
      %s314 = sphi 0, %s300
      %s318 = sphi 0, %s318
      %s320 = sphi 0, %s318
      %s321 = sphi 0, %s320
      %s335 = sphi 0, %s321
      %s339 = sphi 0, %s339
      %s341 = sphi 0, %s339
      %s342 = sphi 0, %s341
      %s356 = sphi 0, %s342
      %s360 = sphi 0, %s360
      %s362 = sphi 0, %s360
      %s363 = sphi 0, %s362
      %s377 = sphi 0, %s363
      %s381 = sphi 0, %s381
      %s383 = sphi 0, %s381
      %s384 = sphi 0, %s383
      %s398 = sphi 0, %s384
      %s402 = sphi 0, %s402
      %s404 = sphi 0, %s402
      %s405 = sphi 0, %s404
      %s419 = sphi 0, %s405
      %s423 = sphi 0, %s423
      %s425 = sphi 0, %s423
      %s426 = sphi 0, %s425
      %s440 = sphi 0, %s426
      %s444 = sphi 0, %s444
      %s446 = sphi 0, %s444
      %s447 = sphi 0, %s446
      %s461 = sphi 0, %s447
      %s465 = sphi 0, %s465
      %s467 = sphi 0, %s465
      %s468 = sphi 0, %s467
      %s482 = sphi 0, %s468
      %s486 = sphi 0, %s486
      %s488 = sphi 0, %s486
      %s489 = sphi 0, %s488
      %s503 = sphi 0, %s489
      %s507 = sphi 0, %s507
      %s509 = sphi 0, %s507
      %s510 = sphi 0, %s509
      %s524 = sphi 0, %s510
      %s530 = sphi 0, %s532
      %s533 = sphi 0, %s530
      %s534 = sphi 0, %s533
      %s550 = sphi 0, %s534
    $region4: #{decoder_block_forward.1} parent=1 // loop_header_branch
      %41 = sbr.rel (%p39) target = $region8
    $region5: #{decoder_block_forward.1} parent=1 // loop_body
      %s43 = ssub.s32 %s38, 1
      %s44 = ssub.s32 %s38, 2
      %s45 = sadd.s32 %s38, 1
      %s46 = ssub.s32 %s38, %s45
      %p47 = scmp.eq.s32.totalorder %s46, 0
      %s49 = sadd.s32 %s48, 1
      %s50 = scalar_select %p47, %s48, %s49
      %p53 = pneg %p47
      %p54 = scmp.eq.s32.totalorder %s38, 1
      %p55 = por %p53, %p54
      %p56 = scmp.ne.s32.totalorder %s48, %s51
      %p57 = scmp.eq.s32.totalorder %s38, 0
      %p58 = por %p56, %p57
      %p59 = scmp.ne.s32.totalorder %s48, %s51
      %p60 = scmp.eq.s32.totalorder %s43, 1
      %p61 = por %p59, %p60
      %p62 = scmp.ne.s32.totalorder %s51, %s52
      %p63 = scmp.eq.s32.totalorder %s43, 0
      %p64 = por %p62, %p63
      %p65 = scmp.ne.s32.totalorder %s51, %s52
      %p66 = scmp.eq.s32.totalorder %s44, 1
      %p67 = por %p65, %p66
      %p69 = scmp.ne.s32.totalorder %s52, %s68
      %p70 = scmp.eq.s32.totalorder %s44, 0
      %p71 = por %p69, %p70
      %s72 = ssub.s32 %s38, %s45
      %p73 = scmp.eq.s32.totalorder %s72, 0
      %s75 = sadd.s32 %s74, 1
      %s76 = scalar_select %p73, %s74, %s75
      %p79 = pneg %p73
      %p80 = scmp.eq.s32.totalorder %s38, 1
      %p81 = por %p79, %p80
      %p82 = scmp.ne.s32.totalorder %s74, %s77
      %p83 = scmp.eq.s32.totalorder %s38, 0
      %p84 = por %p82, %p83
      %p85 = scmp.ne.s32.totalorder %s74, %s77
      %p86 = scmp.eq.s32.totalorder %s43, 1
      %p87 = por %p85, %p86
      %p88 = scmp.ne.s32.totalorder %s77, %s78
      %p89 = scmp.eq.s32.totalorder %s43, 0
      %p90 = por %p88, %p89
      %p91 = scmp.ne.s32.totalorder %s77, %s78
      %p92 = scmp.eq.s32.totalorder %s44, 1
      %p93 = por %p91, %p92
      %p95 = scmp.ne.s32.totalorder %s78, %s94
      %p96 = scmp.eq.s32.totalorder %s44, 0
      %p97 = por %p95, %p96
      %s98 = ssub.s32 %s38, %s45
      %p99 = scmp.eq.s32.totalorder %s98, 0
      %s101 = sadd.s32 %s100, 1
      %s102 = scalar_select %p99, %s100, %s101
      %p105 = pneg %p99
      %p106 = scmp.eq.s32.totalorder %s38, 1
      %p107 = por %p105, %p106
      %p108 = scmp.ne.s32.totalorder %s100, %s103
      %p109 = scmp.eq.s32.totalorder %s38, 0
      %p110 = por %p108, %p109
      %p111 = scmp.ne.s32.totalorder %s100, %s103
      %p112 = scmp.eq.s32.totalorder %s43, 1
      %p113 = por %p111, %p112
      %p114 = scmp.ne.s32.totalorder %s103, %s104
      %p115 = scmp.eq.s32.totalorder %s43, 0
      %p116 = por %p114, %p115
      %p117 = scmp.ne.s32.totalorder %s103, %s104
      %p118 = scmp.eq.s32.totalorder %s44, 1
      %p119 = por %p117, %p118
      %p121 = scmp.ne.s32.totalorder %s104, %s120
      %p122 = scmp.eq.s32.totalorder %s44, 0
      %p123 = por %p121, %p122
      %s124 = ssub.s32 %s38, %s45
      %p125 = scmp.eq.s32.totalorder %s124, 0
      %s127 = sadd.s32 %s126, 1
      %s128 = scalar_select %p125, %s126, %s127
      %p131 = pneg %p125
      %p132 = scmp.eq.s32.totalorder %s38, 1
      %p133 = por %p131, %p132
      %p134 = scmp.ne.s32.totalorder %s126, %s129
      %p135 = scmp.eq.s32.totalorder %s38, 0
      %p136 = por %p134, %p135
      %p137 = scmp.ne.s32.totalorder %s126, %s129
      %p138 = scmp.eq.s32.totalorder %s43, 1
      %p139 = por %p137, %p138
      %p140 = scmp.ne.s32.totalorder %s129, %s130
      %p141 = scmp.eq.s32.totalorder %s43, 0
      %p142 = por %p140, %p141
      %p143 = scmp.ne.s32.totalorder %s129, %s130
      %p144 = scmp.eq.s32.totalorder %s44, 1
      %p145 = por %p143, %p144
      %p147 = scmp.ne.s32.totalorder %s130, %s146
      %p148 = scmp.eq.s32.totalorder %s44, 0
      %p149 = por %p147, %p148
      %s151 = sadd.s32 %s150, 1
      %p154 = scmp.eq.s32.totalorder %s38, 1
      %p155 = scmp.ne.s32.totalorder %s150, %s152
      %p156 = scmp.eq.s32.totalorder %s38, 0
      %p157 = por %p155, %p156
      %p158 = scmp.ne.s32.totalorder %s150, %s152
      %p159 = scmp.eq.s32.totalorder %s43, 1
      %p160 = por %p158, %p159
      %p161 = scmp.ne.s32.totalorder %s152, %s153
      %p162 = scmp.eq.s32.totalorder %s43, 0
      %p163 = por %p161, %p162
      %p164 = scmp.ne.s32.totalorder %s152, %s153
      %p165 = scmp.eq.s32.totalorder %s44, 1
      %p166 = por %p164, %p165
      %p168 = scmp.ne.s32.totalorder %s153, %s167
      %p169 = scmp.eq.s32.totalorder %s44, 0
      %p170 = por %p168, %p169
      %s172 = sadd.s32 %s171, 1
      %p175 = scmp.eq.s32.totalorder %s38, 1
      %p176 = scmp.ne.s32.totalorder %s171, %s173
      %p177 = scmp.eq.s32.totalorder %s38, 0
      %p178 = por %p176, %p177
      %p179 = scmp.ne.s32.totalorder %s171, %s173
      %p180 = scmp.eq.s32.totalorder %s43, 1
      %p181 = por %p179, %p180
      %p182 = scmp.ne.s32.totalorder %s173, %s174
      %p183 = scmp.eq.s32.totalorder %s43, 0
      %p184 = por %p182, %p183
      %p185 = scmp.ne.s32.totalorder %s173, %s174
      %p186 = scmp.eq.s32.totalorder %s44, 1
      %p187 = por %p185, %p186
      %p189 = scmp.ne.s32.totalorder %s174, %s188
      %p190 = scmp.eq.s32.totalorder %s44, 0
      %p191 = por %p189, %p190
      %s193 = sadd.s32 %s192, 1
      %p196 = scmp.eq.s32.totalorder %s38, 1
      %p197 = scmp.ne.s32.totalorder %s192, %s194
      %p198 = scmp.eq.s32.totalorder %s38, 0
      %p199 = por %p197, %p198
      %p200 = scmp.ne.s32.totalorder %s192, %s194
      %p201 = scmp.eq.s32.totalorder %s43, 1
      %p202 = por %p200, %p201
      %p203 = scmp.ne.s32.totalorder %s194, %s195
      %p204 = scmp.eq.s32.totalorder %s43, 0
      %p205 = por %p203, %p204
      %p206 = scmp.ne.s32.totalorder %s194, %s195
      %p207 = scmp.eq.s32.totalorder %s44, 1
      %p208 = por %p206, %p207
      %p210 = scmp.ne.s32.totalorder %s195, %s209
      %p211 = scmp.eq.s32.totalorder %s44, 0
      %p212 = por %p210, %p211
      %s214 = sadd.s32 %s213, 1
      %p217 = scmp.eq.s32.totalorder %s38, 1
      %p218 = scmp.ne.s32.totalorder %s213, %s215
      %p219 = scmp.eq.s32.totalorder %s38, 0
      %p220 = por %p218, %p219
      %p221 = scmp.ne.s32.totalorder %s213, %s215
      %p222 = scmp.eq.s32.totalorder %s43, 1
      %p223 = por %p221, %p222
      %p224 = scmp.ne.s32.totalorder %s215, %s216
      %p225 = scmp.eq.s32.totalorder %s43, 0
      %p226 = por %p224, %p225
      %p227 = scmp.ne.s32.totalorder %s215, %s216
      %p228 = scmp.eq.s32.totalorder %s44, 1
      %p229 = por %p227, %p228
      %p231 = scmp.ne.s32.totalorder %s216, %s230
      %p232 = scmp.eq.s32.totalorder %s44, 0
      %p233 = por %p231, %p232
      %s235 = sadd.s32 %s234, 1
      %p238 = scmp.eq.s32.totalorder %s38, 1
      %p239 = scmp.ne.s32.totalorder %s234, %s236
      %p240 = scmp.eq.s32.totalorder %s38, 0
      %p241 = por %p239, %p240
      %p242 = scmp.ne.s32.totalorder %s234, %s236
      %p243 = scmp.eq.s32.totalorder %s43, 1
      %p244 = por %p242, %p243
      %p245 = scmp.ne.s32.totalorder %s236, %s237
      %p246 = scmp.eq.s32.totalorder %s43, 0
      %p247 = por %p245, %p246
      %p248 = scmp.ne.s32.totalorder %s236, %s237
      %p249 = scmp.eq.s32.totalorder %s44, 1
      %p250 = por %p248, %p249
      %p252 = scmp.ne.s32.totalorder %s237, %s251
      %p253 = scmp.eq.s32.totalorder %s44, 0
      %p254 = por %p252, %p253
      %s256 = sadd.s32 %s255, 1
      %p259 = scmp.eq.s32.totalorder %s38, 1
      %p260 = scmp.ne.s32.totalorder %s255, %s257
      %p261 = scmp.eq.s32.totalorder %s38, 0
      %p262 = por %p260, %p261
      %p263 = scmp.ne.s32.totalorder %s255, %s257
      %p264 = scmp.eq.s32.totalorder %s43, 1
      %p265 = por %p263, %p264
      %p266 = scmp.ne.s32.totalorder %s257, %s258
      %p267 = scmp.eq.s32.totalorder %s43, 0
      %p268 = por %p266, %p267
      %p269 = scmp.ne.s32.totalorder %s257, %s258
      %p270 = scmp.eq.s32.totalorder %s44, 1
      %p271 = por %p269, %p270
      %p273 = scmp.ne.s32.totalorder %s258, %s272
      %p274 = scmp.eq.s32.totalorder %s44, 0
      %p275 = por %p273, %p274
      %s277 = sadd.s32 %s276, 1
      %p280 = scmp.eq.s32.totalorder %s38, 1
      %p281 = scmp.ne.s32.totalorder %s276, %s278
      %p282 = scmp.eq.s32.totalorder %s38, 0
      %p283 = por %p281, %p282
      %p284 = scmp.ne.s32.totalorder %s276, %s278
      %p285 = scmp.eq.s32.totalorder %s43, 1
      %p286 = por %p284, %p285
      %p287 = scmp.ne.s32.totalorder %s278, %s279
      %p288 = scmp.eq.s32.totalorder %s43, 0
      %p289 = por %p287, %p288
      %p290 = scmp.ne.s32.totalorder %s278, %s279
      %p291 = scmp.eq.s32.totalorder %s44, 1
      %p292 = por %p290, %p291
      %p294 = scmp.ne.s32.totalorder %s279, %s293
      %p295 = scmp.eq.s32.totalorder %s44, 0
      %p296 = por %p294, %p295
      %s298 = sadd.s32 %s297, 1
      %p301 = scmp.eq.s32.totalorder %s38, 1
      %p302 = scmp.ne.s32.totalorder %s297, %s299
      %p303 = scmp.eq.s32.totalorder %s38, 0
      %p304 = por %p302, %p303
      %p305 = scmp.ne.s32.totalorder %s297, %s299
      %p306 = scmp.eq.s32.totalorder %s43, 1
      %p307 = por %p305, %p306
      %p308 = scmp.ne.s32.totalorder %s299, %s300
      %p309 = scmp.eq.s32.totalorder %s43, 0
      %p310 = por %p308, %p309
      %p311 = scmp.ne.s32.totalorder %s299, %s300
      %p312 = scmp.eq.s32.totalorder %s44, 1
      %p313 = por %p311, %p312
      %p315 = scmp.ne.s32.totalorder %s300, %s314
      %p316 = scmp.eq.s32.totalorder %s44, 0
      %p317 = por %p315, %p316
      %s319 = sadd.s32 %s318, 1
      %p322 = scmp.eq.s32.totalorder %s38, 1
      %p323 = scmp.ne.s32.totalorder %s318, %s320
      %p324 = scmp.eq.s32.totalorder %s38, 0
      %p325 = por %p323, %p324
      %p326 = scmp.ne.s32.totalorder %s318, %s320
      %p327 = scmp.eq.s32.totalorder %s43, 1
      %p328 = por %p326, %p327
      %p329 = scmp.ne.s32.totalorder %s320, %s321
      %p330 = scmp.eq.s32.totalorder %s43, 0
      %p331 = por %p329, %p330
      %p332 = scmp.ne.s32.totalorder %s320, %s321
      %p333 = scmp.eq.s32.totalorder %s44, 1
      %p334 = por %p332, %p333
      %p336 = scmp.ne.s32.totalorder %s321, %s335
      %p337 = scmp.eq.s32.totalorder %s44, 0
      %p338 = por %p336, %p337
      %s340 = sadd.s32 %s339, 1
      %p343 = scmp.eq.s32.totalorder %s38, 1
      %p344 = scmp.ne.s32.totalorder %s339, %s341
      %p345 = scmp.eq.s32.totalorder %s38, 0
      %p346 = por %p344, %p345
      %p347 = scmp.ne.s32.totalorder %s339, %s341
      %p348 = scmp.eq.s32.totalorder %s43, 1
      %p349 = por %p347, %p348
      %p350 = scmp.ne.s32.totalorder %s341, %s342
      %p351 = scmp.eq.s32.totalorder %s43, 0
      %p352 = por %p350, %p351
      %p353 = scmp.ne.s32.totalorder %s341, %s342
      %p354 = scmp.eq.s32.totalorder %s44, 1
      %p355 = por %p353, %p354
      %p357 = scmp.ne.s32.totalorder %s342, %s356
      %p358 = scmp.eq.s32.totalorder %s44, 0
      %p359 = por %p357, %p358
      %s361 = sadd.s32 %s360, 1
      %p364 = scmp.eq.s32.totalorder %s38, 1
      %p365 = scmp.ne.s32.totalorder %s360, %s362
      %p366 = scmp.eq.s32.totalorder %s38, 0
      %p367 = por %p365, %p366
      %p368 = scmp.ne.s32.totalorder %s360, %s362
      %p369 = scmp.eq.s32.totalorder %s43, 1
      %p370 = por %p368, %p369
      %p371 = scmp.ne.s32.totalorder %s362, %s363
      %p372 = scmp.eq.s32.totalorder %s43, 0
      %p373 = por %p371, %p372
      %p374 = scmp.ne.s32.totalorder %s362, %s363
      %p375 = scmp.eq.s32.totalorder %s44, 1
      %p376 = por %p374, %p375
      %p378 = scmp.ne.s32.totalorder %s363, %s377
      %p379 = scmp.eq.s32.totalorder %s44, 0
      %p380 = por %p378, %p379
      %s382 = sadd.s32 %s381, 1
      %p385 = scmp.eq.s32.totalorder %s38, 1
      %p386 = scmp.ne.s32.totalorder %s381, %s383
      %p387 = scmp.eq.s32.totalorder %s38, 0
      %p388 = por %p386, %p387
      %p389 = scmp.ne.s32.totalorder %s381, %s383
      %p390 = scmp.eq.s32.totalorder %s43, 1
      %p391 = por %p389, %p390
      %p392 = scmp.ne.s32.totalorder %s383, %s384
      %p393 = scmp.eq.s32.totalorder %s43, 0
      %p394 = por %p392, %p393
      %p395 = scmp.ne.s32.totalorder %s383, %s384
      %p396 = scmp.eq.s32.totalorder %s44, 1
      %p397 = por %p395, %p396
      %p399 = scmp.ne.s32.totalorder %s384, %s398
      %p400 = scmp.eq.s32.totalorder %s44, 0
      %p401 = por %p399, %p400
      %s403 = sadd.s32 %s402, 1
      %p406 = scmp.eq.s32.totalorder %s38, 1
      %p407 = scmp.ne.s32.totalorder %s402, %s404
      %p408 = scmp.eq.s32.totalorder %s38, 0
      %p409 = por %p407, %p408
      %p410 = scmp.ne.s32.totalorder %s402, %s404
      %p411 = scmp.eq.s32.totalorder %s43, 1
      %p412 = por %p410, %p411
      %p413 = scmp.ne.s32.totalorder %s404, %s405
      %p414 = scmp.eq.s32.totalorder %s43, 0
      %p415 = por %p413, %p414
      %p416 = scmp.ne.s32.totalorder %s404, %s405
      %p417 = scmp.eq.s32.totalorder %s44, 1
      %p418 = por %p416, %p417
      %p420 = scmp.ne.s32.totalorder %s405, %s419
      %p421 = scmp.eq.s32.totalorder %s44, 0
      %p422 = por %p420, %p421
      %s424 = sadd.s32 %s423, 1
      %p427 = scmp.eq.s32.totalorder %s38, 1
      %p428 = scmp.ne.s32.totalorder %s423, %s425
      %p429 = scmp.eq.s32.totalorder %s38, 0
      %p430 = por %p428, %p429
      %p431 = scmp.ne.s32.totalorder %s423, %s425
      %p432 = scmp.eq.s32.totalorder %s43, 1
      %p433 = por %p431, %p432
      %p434 = scmp.ne.s32.totalorder %s425, %s426
      %p435 = scmp.eq.s32.totalorder %s43, 0
      %p436 = por %p434, %p435
      %p437 = scmp.ne.s32.totalorder %s425, %s426
      %p438 = scmp.eq.s32.totalorder %s44, 1
      %p439 = por %p437, %p438
      %p441 = scmp.ne.s32.totalorder %s426, %s440
      %p442 = scmp.eq.s32.totalorder %s44, 0
      %p443 = por %p441, %p442
      %s445 = sadd.s32 %s444, 1
      %p448 = scmp.eq.s32.totalorder %s38, 1
      %p449 = scmp.ne.s32.totalorder %s444, %s446
      %p450 = scmp.eq.s32.totalorder %s38, 0
      %p451 = por %p449, %p450
      %p452 = scmp.ne.s32.totalorder %s444, %s446
      %p453 = scmp.eq.s32.totalorder %s43, 1
      %p454 = por %p452, %p453
      %p455 = scmp.ne.s32.totalorder %s446, %s447
      %p456 = scmp.eq.s32.totalorder %s43, 0
      %p457 = por %p455, %p456
      %p458 = scmp.ne.s32.totalorder %s446, %s447
      %p459 = scmp.eq.s32.totalorder %s44, 1
      %p460 = por %p458, %p459
      %p462 = scmp.ne.s32.totalorder %s447, %s461
      %p463 = scmp.eq.s32.totalorder %s44, 0
      %p464 = por %p462, %p463
      %s466 = sadd.s32 %s465, 1
      %p469 = scmp.eq.s32.totalorder %s38, 1
      %p470 = scmp.ne.s32.totalorder %s465, %s467
      %p471 = scmp.eq.s32.totalorder %s38, 0
      %p472 = por %p470, %p471
      %p473 = scmp.ne.s32.totalorder %s465, %s467
      %p474 = scmp.eq.s32.totalorder %s43, 1
      %p475 = por %p473, %p474
      %p476 = scmp.ne.s32.totalorder %s467, %s468
      %p477 = scmp.eq.s32.totalorder %s43, 0
      %p478 = por %p476, %p477
      %p479 = scmp.ne.s32.totalorder %s467, %s468
      %p480 = scmp.eq.s32.totalorder %s44, 1
      %p481 = por %p479, %p480
      %p483 = scmp.ne.s32.totalorder %s468, %s482
      %p484 = scmp.eq.s32.totalorder %s44, 0
      %p485 = por %p483, %p484
      %s487 = sadd.s32 %s486, 1
      %p490 = scmp.eq.s32.totalorder %s38, 1
      %p491 = scmp.ne.s32.totalorder %s486, %s488
      %p492 = scmp.eq.s32.totalorder %s38, 0
      %p493 = por %p491, %p492
      %p494 = scmp.ne.s32.totalorder %s486, %s488
      %p495 = scmp.eq.s32.totalorder %s43, 1
      %p496 = por %p494, %p495
      %p497 = scmp.ne.s32.totalorder %s488, %s489
      %p498 = scmp.eq.s32.totalorder %s43, 0
      %p499 = por %p497, %p498
      %p500 = scmp.ne.s32.totalorder %s488, %s489
      %p501 = scmp.eq.s32.totalorder %s44, 1
      %p502 = por %p500, %p501
      %p504 = scmp.ne.s32.totalorder %s489, %s503
      %p505 = scmp.eq.s32.totalorder %s44, 0
      %p506 = por %p504, %p505
      %s508 = sadd.s32 %s507, 1
      %p511 = scmp.eq.s32.totalorder %s38, 1
      %p512 = scmp.ne.s32.totalorder %s507, %s509
      %p513 = scmp.eq.s32.totalorder %s38, 0
      %p514 = por %p512, %p513
      %p515 = scmp.ne.s32.totalorder %s507, %s509
      %p516 = scmp.eq.s32.totalorder %s43, 1
      %p517 = por %p515, %p516
      %p518 = scmp.ne.s32.totalorder %s509, %s510
      %p519 = scmp.eq.s32.totalorder %s43, 0
      %p520 = por %p518, %p519
      %p521 = scmp.ne.s32.totalorder %s509, %s510
      %p522 = scmp.eq.s32.totalorder %s44, 1
      %p523 = por %p521, %p522
      %p525 = scmp.ne.s32.totalorder %s510, %s524
      %p526 = scmp.eq.s32.totalorder %s44, 0
      %p527 = por %p525, %p526
      %s528 = ssub.s32 %s38, %s45
      %p529 = scmp.eq.s32.totalorder %s528, 0
      %s531 = sadd.s32 %s530, 1
      %s532 = scalar_select %p529, %s530, %s531
      %p535 = pneg %p529
      %p536 = scmp.eq.s32.totalorder %s38, 1
      %p537 = por %p535, %p536
      %p538 = scmp.ne.s32.totalorder %s530, %s533
      %p539 = scmp.eq.s32.totalorder %s38, 0
      %p540 = por %p538, %p539
      %p541 = scmp.ne.s32.totalorder %s530, %s533
      %p542 = scmp.eq.s32.totalorder %s43, 1
      %p543 = por %p541, %p542
      %p544 = scmp.ne.s32.totalorder %s533, %s534
      %p545 = scmp.eq.s32.totalorder %s43, 0
      %p546 = por %p544, %p545
      %p547 = scmp.ne.s32.totalorder %s533, %s534
      %p548 = scmp.eq.s32.totalorder %s44, 1
      %p549 = por %p547, %p548
      %p551 = scmp.ne.s32.totalorder %s534, %s550
      %p552 = scmp.eq.s32.totalorder %s44, 0
      %p553 = por %p551, %p552
      %p554 = scmp.le.s32.totalorder 1, %s38
      %p555 = scmp.lt.s32.totalorder %s38, 3
      %p556 = pnand %p554, %p555
      %p557 = pneg %p556
      // Predicated region
      $region9: #{decoder_block_forward.1} parent=5 // pred_check
        _
      $region10: #{decoder_block_forward.1} parent=5 // pred_check_branch
        %559 = sbr.rel (%p556) target = $region12
      $region11: #{decoder_block_forward.1} parent=5 // pred_region
        %s560 = ssub.s32 %s38, 1
        // Predicated region
        $region13: #{decoder_block_forward.1} parent=11 // pred_check
          %p561 = pneg %p163
        $region14: #{decoder_block_forward.1} parent=11 // pred_check_branch
          %563 = sbr.rel (%p561) target = $region16
        $region15: #{decoder_block_forward.1} parent=11 // pred_region
          _
        $region16: #{decoder_block_forward.1} parent=11 // pred_fallthru
          _
        // Predicated region
        $region17: #{decoder_block_forward.1} parent=11 // pred_check
          %p564 = pneg %p184
        $region18: #{decoder_block_forward.1} parent=11 // pred_check_branch
          %566 = sbr.rel (%p564) target = $region20
        $region19: #{decoder_block_forward.1} parent=11 // pred_region
          _
        $region20: #{decoder_block_forward.1} parent=11 // pred_fallthru
          _
        // Predicated region
        $region21: #{decoder_block_forward.1} parent=11 // pred_check
          %p567 = pneg %p205
        $region22: #{decoder_block_forward.1} parent=11 // pred_check_branch
          %569 = sbr.rel (%p567) target = $region24
        $region23: #{decoder_block_forward.1} parent=11 // pred_region
          _
        $region24: #{decoder_block_forward.1} parent=11 // pred_fallthru
          _
        // Predicated region
        $region25: #{decoder_block_forward.1} parent=11 // pred_check
          %p570 = pneg %p226
        $region26: #{decoder_block_forward.1} parent=11 // pred_check_branch
          %572 = sbr.rel (%p570) target = $region28
        $region27: #{decoder_block_forward.1} parent=11 // pred_region
          _
        $region28: #{decoder_block_forward.1} parent=11 // pred_fallthru
          _
        // Predicated region
        $region29: #{decoder_block_forward.1} parent=11 // pred_check
          %p573 = pneg %p247
        $region30: #{decoder_block_forward.1} parent=11 // pred_check_branch
          %575 = sbr.rel (%p573) target = $region32
        $region31: #{decoder_block_forward.1} parent=11 // pred_region
          _
        $region32: #{decoder_block_forward.1} parent=11 // pred_fallthru
          _
        // Predicated region
        $region33: #{decoder_block_forward.1} parent=11 // pred_check
          %p576 = pneg %p268
        $region34: #{decoder_block_forward.1} parent=11 // pred_check_branch
          %578 = sbr.rel (%p576) target = $region36
        $region35: #{decoder_block_forward.1} parent=11 // pred_region
          _
        $region36: #{decoder_block_forward.1} parent=11 // pred_fallthru
          _
        // Predicated region
        $region37: #{decoder_block_forward.1} parent=11 // pred_check
          %p579 = pneg %p289
        $region38: #{decoder_block_forward.1} parent=11 // pred_check_branch
          %581 = sbr.rel (%p579) target = $region40
        $region39: #{decoder_block_forward.1} parent=11 // pred_region
          _
        $region40: #{decoder_block_forward.1} parent=11 // pred_fallthru
          _
        // Predicated region
        $region41: #{decoder_block_forward.1} parent=11 // pred_check
          %p582 = pneg %p310
        $region42: #{decoder_block_forward.1} parent=11 // pred_check_branch
          %584 = sbr.rel (%p582) target = $region44
        $region43: #{decoder_block_forward.1} parent=11 // pred_region
          %s586 = ssub.s32 16, 16
          %587 = vsyncadd [#allocation3], %s586
          %s589 = sshll.u32 [#allocation2], 4
          %s590 = int_to_ptr.vmem [resolvable:$true] %s589
          %592 = dma.hbm_to_vmem [thread:$0]  %s11, 16, %s590, [#allocation3]
        $region44: #{decoder_block_forward.1} parent=11 // pred_fallthru
          _
        // Predicated region
        $region45: #{decoder_block_forward.1} parent=11 // pred_check
          %p593 = pneg %p331
        $region46: #{decoder_block_forward.1} parent=11 // pred_check_branch
          %595 = sbr.rel (%p593) target = $region48
        $region47: #{decoder_block_forward.1} parent=11 // pred_region
          %s597 = ssub.s32 256, 256
          %598 = vsyncadd [#allocation7], %s597
          %s599 = sshll.u32 [#allocation6], 4
          %s600 = int_to_ptr.vmem [resolvable:$true] %s599
          %605 = dma.hbm_to_vmem [thread:$0]  %s12, 256, %s600, [#allocation7], 64, 64, 4
        $region48: #{decoder_block_forward.1} parent=11 // pred_fallthru
          _
        // Predicated region
        $region49: #{decoder_block_forward.1} parent=11 // pred_check
          %p606 = pneg %p352
        $region50: #{decoder_block_forward.1} parent=11 // pred_check_branch
          %608 = sbr.rel (%p606) target = $region52
        $region51: #{decoder_block_forward.1} parent=11 // pred_region
          %s610 = ssub.s32 16, 16
          %611 = vsyncadd [#allocation7], %s610
          %s613 = sshll.u32 [#allocation8], 4
          %s614 = int_to_ptr.vmem [resolvable:$true] %s613
          %616 = dma.hbm_to_vmem [thread:$0]  %s13, 16, %s614, [#allocation7]
        $region52: #{decoder_block_forward.1} parent=11 // pred_fallthru
          _
        // Predicated region
        $region53: #{decoder_block_forward.1} parent=11 // pred_check
          %p617 = pneg %p373
        $region54: #{decoder_block_forward.1} parent=11 // pred_check_branch
          %619 = sbr.rel (%p617) target = $region56
        $region55: #{decoder_block_forward.1} parent=11 // pred_region
          %s621 = ssub.s32 256, 256
          %622 = vsyncadd [#allocation10], %s621
          %s623 = sshll.u32 [#allocation9], 4
          %s624 = int_to_ptr.vmem [resolvable:$true] %s623
          %629 = dma.hbm_to_vmem [thread:$0]  %s14, 256, %s624, [#allocation10], 64, 64, 4
        $region56: #{decoder_block_forward.1} parent=11 // pred_fallthru
          _
        // Predicated region
        $region57: #{decoder_block_forward.1} parent=11 // pred_check
          %p630 = pneg %p394
        $region58: #{decoder_block_forward.1} parent=11 // pred_check_branch
          %632 = sbr.rel (%p630) target = $region60
        $region59: #{decoder_block_forward.1} parent=11 // pred_region
          %s634 = ssub.s32 16, 16
          %635 = vsyncadd [#allocation10], %s634
          %s637 = sshll.u32 [#allocation11], 4
          %s638 = int_to_ptr.vmem [resolvable:$true] %s637
          %640 = dma.hbm_to_vmem [thread:$0]  %s15, 16, %s638, [#allocation10]
        $region60: #{decoder_block_forward.1} parent=11 // pred_fallthru
          _
        // Predicated region
        $region61: #{decoder_block_forward.1} parent=11 // pred_check
          %p641 = pneg %p415
        $region62: #{decoder_block_forward.1} parent=11 // pred_check_branch
          %643 = sbr.rel (%p641) target = $region64
        $region63: #{decoder_block_forward.1} parent=11 // pred_region
          %s645 = ssub.s32 256, 256
          %646 = vsyncadd [#allocation13], %s645
          %s647 = sshll.u32 [#allocation12], 4
          %s648 = int_to_ptr.vmem [resolvable:$true] %s647
          %653 = dma.hbm_to_vmem [thread:$0]  %s16, 256, %s648, [#allocation13], 64, 64, 4
        $region64: #{decoder_block_forward.1} parent=11 // pred_fallthru
          _
        // Predicated region
        $region65: #{decoder_block_forward.1} parent=11 // pred_check
          %p654 = pneg %p436
        $region66: #{decoder_block_forward.1} parent=11 // pred_check_branch
          %656 = sbr.rel (%p654) target = $region68
        $region67: #{decoder_block_forward.1} parent=11 // pred_region
          %s658 = ssub.s32 16, 16
          %659 = vsyncadd [#allocation13], %s658
          %s661 = sshll.u32 [#allocation14], 4
          %s662 = int_to_ptr.vmem [resolvable:$true] %s661
          %664 = dma.hbm_to_vmem [thread:$0]  %s17, 16, %s662, [#allocation13]
        $region68: #{decoder_block_forward.1} parent=11 // pred_fallthru
          _
        // Predicated region
        $region69: #{decoder_block_forward.1} parent=11 // pred_check
          %p665 = pneg %p457
        $region70: #{decoder_block_forward.1} parent=11 // pred_check_branch
          %667 = sbr.rel (%p665) target = $region72
        $region71: #{decoder_block_forward.1} parent=11 // pred_region
          _
        $region72: #{decoder_block_forward.1} parent=11 // pred_fallthru
          _
        // Predicated region
        $region73: #{decoder_block_forward.1} parent=11 // pred_check
          %p668 = pneg %p478
        $region74: #{decoder_block_forward.1} parent=11 // pred_check_branch
          %670 = sbr.rel (%p668) target = $region76
        $region75: #{decoder_block_forward.1} parent=11 // pred_region
          %s672 = ssub.s32 16, 16
          %673 = vsyncadd [#allocation16], %s672
          %s675 = sshll.u32 [#allocation15], 4
          %s676 = int_to_ptr.vmem [resolvable:$true] %s675
          %678 = dma.hbm_to_vmem [thread:$0]  %s19, 16, %s676, [#allocation16]
        $region76: #{decoder_block_forward.1} parent=11 // pred_fallthru
          _
        // Predicated region
        $region77: #{decoder_block_forward.1} parent=11 // pred_check
          %p679 = pneg %p499
        $region78: #{decoder_block_forward.1} parent=11 // pred_check_branch
          %681 = sbr.rel (%p679) target = $region80
        $region79: #{decoder_block_forward.1} parent=11 // pred_region
          %s683 = ssub.s32 16, 16
          %684 = vsyncadd [#allocation5], %s683
          %s686 = sshll.u32 %s20, 4
          %s687 = int_to_ptr.vmem [resolvable:$true] %s686
          %689 = dma.vmem_to_smem %s687, 16, [#allocation17], [#allocation5]
        $region80: #{decoder_block_forward.1} parent=11 // pred_fallthru
          _
        // Predicated region
        $region81: #{decoder_block_forward.1} parent=11 // pred_check
          %p690 = pneg %p520
        $region82: #{decoder_block_forward.1} parent=11 // pred_check_branch
          %692 = sbr.rel (%p690) target = $region84
        $region83: #{decoder_block_forward.1} parent=11 // pred_region
          %s694 = ssub.s32 16, 16
          %695 = vsyncadd [#allocation19], %s694
          %s697 = sshll.u32 %s21, 4
          %s698 = int_to_ptr.vmem [resolvable:$true] %s697
          %700 = dma.vmem_to_smem %s698, 16, [#allocation18], [#allocation19]
        $region84: #{decoder_block_forward.1} parent=11 // pred_fallthru
          _
      $region12: #{decoder_block_forward.1} parent=5 // pred_fallthru
        _
      %p701 = scmp.lt.s32.totalorder %s38, 2
      // Predicated region
      $region85: #{decoder_block_forward.1} parent=5 // pred_check
        %p702 = pneg %p701
      $region86: #{decoder_block_forward.1} parent=5 // pred_check_branch
        %704 = sbr.rel (%p702) target = $region88
      $region87: #{decoder_block_forward.1} parent=5 // pred_region
        // Predicated region
        $region89: #{decoder_block_forward.1} parent=87 // pred_check
          %p705 = pneg %p58
        $region90: #{decoder_block_forward.1} parent=87 // pred_check_branch
          %707 = sbr.rel (%p705) target = $region92
        $region91: #{decoder_block_forward.1} parent=87 // pred_region
          %p708 = scmp.lt.s32.totalorder %s38, 1
          %s709 = scalar_select %p708, %s38, 1
          %s710 = smul.addr %s709, 8
          %s711 = scalar_lea.vmem %s0, %s710
        $region92: #{decoder_block_forward.1} parent=87 // pred_fallthru
          _
        // Predicated region
        $region93: #{decoder_block_forward.1} parent=87 // pred_check
          %p712 = pneg %p84
        $region94: #{decoder_block_forward.1} parent=87 // pred_check_branch
          %714 = sbr.rel (%p712) target = $region96
        $region95: #{decoder_block_forward.1} parent=87 // pred_region
          %p715 = scmp.lt.s32.totalorder %s38, 1
          %s716 = scalar_select %p715, %s38, 1
          %s717 = smul.addr %s716, 8
          %s718 = scalar_lea.vmem %s1, %s717
        $region96: #{decoder_block_forward.1} parent=87 // pred_fallthru
          _
        // Predicated region
        $region97: #{decoder_block_forward.1} parent=87 // pred_check
          %p719 = pneg %p110
        $region98: #{decoder_block_forward.1} parent=87 // pred_check_branch
          %721 = sbr.rel (%p719) target = $region100
        $region99: #{decoder_block_forward.1} parent=87 // pred_region
          %p722 = scmp.lt.s32.totalorder %s38, 1
          %s723 = scalar_select %p722, %s38, 1
          %s724 = smul.addr %s723, 8
          %s725 = scalar_lea.vmem %s2, %s724
        $region100: #{decoder_block_forward.1} parent=87 // pred_fallthru
          _
        // Predicated region
        $region101: #{decoder_block_forward.1} parent=87 // pred_check
          %p726 = pneg %p136
        $region102: #{decoder_block_forward.1} parent=87 // pred_check_branch
          %728 = sbr.rel (%p726) target = $region104
        $region103: #{decoder_block_forward.1} parent=87 // pred_region
          %p729 = scmp.lt.s32.totalorder %s38, 1
          %s730 = scalar_select %p729, %s38, 1
          %s731 = smul.addr %s730, 8
          %s732 = scalar_lea.vmem %s3, %s731
        $region104: #{decoder_block_forward.1} parent=87 // pred_fallthru
          _
      $region88: #{decoder_block_forward.1} parent=5 // pred_fallthru
        _
      %p733 = scmp.le.s32.totalorder 1, %s38
      %p734 = scmp.lt.s32.totalorder %s38, 3
      %p735 = pnand %p733, %p734
      %p736 = pneg %p735
      // Predicated region
      $region105: #{decoder_block_forward.1} parent=5 // pred_check
        _
      $region106: #{decoder_block_forward.1} parent=5 // pred_check_branch
        %738 = sbr.rel (%p735) target = $region108
      $region107: #{decoder_block_forward.1} parent=5 // pred_region
        %s739 = ssub.s32 %s38, 1
        // Predicated region
        $region109: #{decoder_block_forward.1} parent=107 // pred_check
          %p740 = pneg %p310
        $region110: #{decoder_block_forward.1} parent=107 // pred_check_branch
          %742 = sbr.rel (%p740) target = $region112
        $region111: #{decoder_block_forward.1} parent=107 // pred_region
          %743 = dma.done [#allocation3], 16
        $region112: #{decoder_block_forward.1} parent=107 // pred_fallthru
          _
        // Predicated region
        $region113: #{decoder_block_forward.1} parent=107 // pred_check
          %p744 = pneg %p331
        $region114: #{decoder_block_forward.1} parent=107 // pred_check_branch
          %746 = sbr.rel (%p744) target = $region116
        $region115: #{decoder_block_forward.1} parent=107 // pred_region
          %747 = dma.done [#allocation7], 256
        $region116: #{decoder_block_forward.1} parent=107 // pred_fallthru
          _
        // Predicated region
        $region117: #{decoder_block_forward.1} parent=107 // pred_check
          %p748 = pneg %p352
        $region118: #{decoder_block_forward.1} parent=107 // pred_check_branch
          %750 = sbr.rel (%p748) target = $region120
        $region119: #{decoder_block_forward.1} parent=107 // pred_region
          %751 = dma.done [#allocation7], 16
        $region120: #{decoder_block_forward.1} parent=107 // pred_fallthru
          _
        // Predicated region
        $region121: #{decoder_block_forward.1} parent=107 // pred_check
          %p752 = pneg %p373
        $region122: #{decoder_block_forward.1} parent=107 // pred_check_branch
          %754 = sbr.rel (%p752) target = $region124
        $region123: #{decoder_block_forward.1} parent=107 // pred_region
          %755 = dma.done [#allocation10], 256
        $region124: #{decoder_block_forward.1} parent=107 // pred_fallthru
          _
        // Predicated region
        $region125: #{decoder_block_forward.1} parent=107 // pred_check
          %p756 = pneg %p394
        $region126: #{decoder_block_forward.1} parent=107 // pred_check_branch
          %758 = sbr.rel (%p756) target = $region128
        $region127: #{decoder_block_forward.1} parent=107 // pred_region
          %759 = dma.done [#allocation10], 16
        $region128: #{decoder_block_forward.1} parent=107 // pred_fallthru
          _
        // Predicated region
        $region129: #{decoder_block_forward.1} parent=107 // pred_check
          %p760 = pneg %p415
        $region130: #{decoder_block_forward.1} parent=107 // pred_check_branch
          %762 = sbr.rel (%p760) target = $region132
        $region131: #{decoder_block_forward.1} parent=107 // pred_region
          %763 = dma.done [#allocation13], 256
        $region132: #{decoder_block_forward.1} parent=107 // pred_fallthru
          _
        // Predicated region
        $region133: #{decoder_block_forward.1} parent=107 // pred_check
          %p764 = pneg %p436
        $region134: #{decoder_block_forward.1} parent=107 // pred_check_branch
          %766 = sbr.rel (%p764) target = $region136
        $region135: #{decoder_block_forward.1} parent=107 // pred_region
          %767 = dma.done [#allocation13], 16
        $region136: #{decoder_block_forward.1} parent=107 // pred_fallthru
          _
        // Predicated region
        $region137: #{decoder_block_forward.1} parent=107 // pred_check
          %p768 = pneg %p478
        $region138: #{decoder_block_forward.1} parent=107 // pred_check_branch
          %770 = sbr.rel (%p768) target = $region140
        $region139: #{decoder_block_forward.1} parent=107 // pred_region
          %771 = dma.done [#allocation16], 16
        $region140: #{decoder_block_forward.1} parent=107 // pred_fallthru
          _
        // Predicated region
        $region141: #{decoder_block_forward.1} parent=107 // pred_check
          %p772 = pneg %p499
        $region142: #{decoder_block_forward.1} parent=107 // pred_check_branch
          %774 = sbr.rel (%p772) target = $region144
        $region143: #{decoder_block_forward.1} parent=107 // pred_region
          %775 = dma.done [#allocation5], 16
        $region144: #{decoder_block_forward.1} parent=107 // pred_fallthru
          _
        // Predicated region
        $region145: #{decoder_block_forward.1} parent=107 // pred_check
          %p776 = pneg %p520
        $region146: #{decoder_block_forward.1} parent=107 // pred_check_branch
          %778 = sbr.rel (%p776) target = $region148
        $region147: #{decoder_block_forward.1} parent=107 // pred_region
          %779 = dma.done [#allocation19], 16
        $region148: #{decoder_block_forward.1} parent=107 // pred_fallthru
          _
        %780 = sfence
        %p781 = scmp.lt.s32.totalorder %s43, 1
        %s782 = scalar_select %p781, %s43, 1
        %s783 = smul.addr %s782, 8
        %s784 = scalar_lea.vmem %s0, %s783
        %p785 = pneg %p64
        %p786 = pneg %p61
        %p787 = scmp.lt.s32.totalorder %s43, 1
        %s788 = scalar_select %p787, %s43, 1
        %s789 = smul.addr %s788, 8
        %s790 = scalar_lea.vmem %s1, %s789
        %p791 = pneg %p90
        %p792 = pneg %p87
        %p793 = scmp.lt.s32.totalorder %s43, 1
        %s794 = scalar_select %p793, %s43, 1
        %s795 = smul.addr %s794, 8
        %s796 = scalar_lea.vmem %s2, %s795
        %p797 = pneg %p116
        %p798 = pneg %p113
        %p799 = scmp.lt.s32.totalorder %s43, 1
        %s800 = scalar_select %p799, %s43, 1
        %s801 = smul.addr %s800, 8
        %s802 = scalar_lea.vmem %s3, %s801
        %p803 = pneg %p142
        %p804 = pneg %p139
        %p805 = pneg %p163
        %p806 = pneg %p160
        %p807 = pneg %p184
        %p808 = pneg %p181
        %p809 = pneg %p205
        %p810 = pneg %p202
        %p811 = pneg %p226
        %p812 = pneg %p223
        %p813 = pneg %p247
        %p814 = pneg %p244
        %p815 = pneg %p268
        %p816 = pneg %p265
        %p817 = pneg %p289
        %p818 = pneg %p286
        %p819 = pneg %p310
        %p820 = pneg %p307
        %p821 = pneg %p331
        %p822 = pneg %p328
        %p823 = pneg %p352
        %p824 = pneg %p349
        %p825 = pneg %p373
        %p826 = pneg %p370
        %p827 = pneg %p394
        %p828 = pneg %p391
        %p829 = pneg %p415
        %p830 = pneg %p412
        %p831 = pneg %p436
        %p832 = pneg %p433
        %p833 = pneg %p457
        %p834 = pneg %p454
        %p835 = pneg %p478
        %p836 = pneg %p475
        %p837 = pneg %p499
        %p838 = pneg %p496
        %p839 = pneg %p520
        %p840 = pneg %p517
        %p841 = pneg %p546
        %p842 = pneg %p543
        %s843 = sand.u32 %s533, 1
        %s844 = scalar_lea.sflag [#allocation4], %s843
        %s845 = sand.u32 %s533, 1
        %s846 = smul.addr %s845, 8
        %s847 = scalar_lea.vmem [#allocation20], %s846
        %p848 = scmp.lt.s32.totalorder %s43, 1
        %s849 = scalar_select %p848, %s43, 1
        %s850 = smul.addr %s849, 8
        %s851 = scalar_lea.vmem %s0, %s850
        %p852 = scmp.lt.s32.totalorder %s43, 1
        %s853 = scalar_select %p852, %s43, 1
        %s854 = smul.addr %s853, 8
        %s855 = scalar_lea.vmem %s1, %s854
        %p856 = scmp.lt.s32.totalorder %s43, 1
        %s857 = scalar_select %p856, %s43, 1
        %s858 = smul.addr %s857, 8
        %s859 = scalar_lea.vmem %s2, %s858
        %p860 = scmp.lt.s32.totalorder %s43, 1
        %s861 = scalar_select %p860, %s43, 1
        %s862 = smul.addr %s861, 8
        %s863 = scalar_lea.vmem %s3, %s862
        %v865 = vld [vmem:[%s851] sm:$0xff]
        %v866 = vld [vmem:[%s855] sm:$0xff]
        %v867 = vld [vmem:[%s859] sm:$0xff]
        %vm868 = vcmp.eq.f32.partialorder %v867, 0.0
        %v869 = vsel %vm868, -1e+09, 0.0
        %v870 = vld [vmem:[%s863] sm:$0xff]
        %vm871 = vcmp.eq.f32.partialorder %v870, 0.0
        %v872 = vsel %vm871, -1e+09, 0.0
        %s873 = sld [smem:[#allocation17]]
        %s874 = sld [smem:[#allocation18]]
        %vm875 = vcmask 261120
        %v876 = vsel %vm875, %v865, 0.0
        %877 = vadd.xlane.f32.xlu0 %v876
        %v878 = vpop.xlane.xlu0 %877
        %v879 = vrcp.pop 32.0
        %v880 = vmul.f32 %v878, %v879
        %v881 = vsub.f32 %v865, %v880
        %v882 = vmul.f32 %v881, %v881
        %v883 = vsel %vm875, %v882, 0.0
        %884 = vadd.xlane.f32.xlu0 %v883
        %v885 = vpop.xlane.xlu0 %884
        %v886 = vmul.f32 %v885, 0.032258064
        %v887 = vrsqrt.pop %v886
        %v888 = vmul.f32 %v886, %v887
        %vm889 = vcmp.eq.f32.partialorder %v886, inf
        %v890 = vsel %vm889, %v886, %v888
        %vm891 = vcmp.eq.f32.partialorder %v886, 0.0
        %v892 = vand.u32 %v886, 2147483648
        %v893 = vsel %vm891, %v892, %v890
        %v894 = vadd.f32 %v893, 1e-06
        %v895 = vrcp.pop %v894
        %v896 = vstv %s873
        %v897 = vmul.f32 %v896, %v895
        %v898 = vmul.f32 %v881, %v897
        %v899 = vstv %s874
        %v900 = vadd.f32 %v898, %v899
        %v901 = vpack.c.bf16 %v900, %v900
        %v902 = vld [vmem:[%s4] sm:$0xf]
        %v903 = vld [vmem:[%s4 + $0x4] sm:$0xf]
        %v904 = vld [vmem:[%s4 + $0x8] sm:$0xf]
        %v905 = vld [vmem:[%s4 + $0xc] sm:$0xf]
        %v906 = vld [vmem:[%s5] sm:$0x1]
        %v908 = vlaneseq
        %v909 = vshrl.u32 %v908, 7
        %v910 = vsub.s32 0, %v909
        %v911 = vrot.slane %v906, %v910
        %v917 = vunpack.c.l.b16 %v902
        %v918 = vunpack.c.l.b16 %v903
        %v919 = vunpack.c.l.b16 %v904
        %v920 = vunpack.c.l.b16 %v905
        %v921 = vpack.c.b16 %v918, %v917
        %v922 = vpack.c.b16 %v920, %v919
        %v926 = vsel %vm875, %v901, 0
        %928 = vmatprep.subr.bf16.mxu0 0
        %929 = vmatpush1.bf16.msra.mxu0 %v921
        %930 = vmatprep.subr.bf16.mxu0 0
        %931 = vmatpush1.bf16.msra.mxu0 %v922
        %932 = vmatprep.subr.bf16.mxu0 0
        %933 = vmatpush1.bf16.msra.mxu0 0
        %934 = vmatprep.subr.bf16.mxu0 0
        %935 = vmatpush1.bf16.msra.mxu0 0
        %936 = vmatprep.subr.bf16.mxu0 0
        %937 = vmatpush1.bf16.msra.mxu0 0
        %938 = vmatprep.subr.bf16.mxu0 0
        %939 = vmatpush1.bf16.msra.mxu0 0
        %940 = vmatprep.subr.bf16.mxu0 0
        %941 = vmatpush1.bf16.msra.mxu0 0
        %942 = vmatprep.subr.bf16.mxu0 0
        %943 = vmatpush1.bf16.msra.mxu0 0
        %944 = vmatprep.subr.bf16.mxu0 0
        %945 = vmatpush1.bf16.msra.mxu0 0
        %946 = vmatprep.subr.bf16.mxu0 0
        %947 = vmatpush1.bf16.msra.mxu0 0
        %948 = vmatprep.subr.bf16.mxu0 0
        %949 = vmatpush1.bf16.msra.mxu0 0
        %950 = vmatprep.subr.bf16.mxu0 0
        %951 = vmatpush1.bf16.msra.mxu0 0
        %952 = vmatprep.subr.bf16.mxu0 0
        %953 = vmatpush1.bf16.msra.mxu0 0
        %954 = vmatprep.subr.bf16.mxu0 0
        %955 = vmatpush1.bf16.msra.mxu0 0
        %956 = vmatprep.subr.bf16.mxu0 0
        %957 = vmatpush1.bf16.msra.mxu0 0
        %958 = vmatprep.subr.bf16.mxu0 0
        %959 = vmatpush1.bf16.msra.mxu0 0
        %960 = vmatprep.mubr.bf16.mxu0 0
        %961 = vmatmul.mubr.bf16.gmra.mrb[0].mxu0 %v926
        %v962 = vpop.f32.mrb[0].mxu0
        %v963 = vadd.f32 %v911, %v962
        %v964 = vpop.f32.mrb[0].mxu0
        %v965 = vpop.f32.mrb[0].mxu0
        %v966 = vpop.f32.mrb[0].mxu0
        %967 = vdwg.mxu0
        %v968 = vld [vmem:[%s6] sm:$0xf]
        %v969 = vld [vmem:[%s6 + $0x4] sm:$0xf]
        %v970 = vld [vmem:[%s6 + $0x8] sm:$0xf]
        %v971 = vld [vmem:[%s6 + $0xc] sm:$0xf]
        %v972 = vld [vmem:[%s7] sm:$0x1]
        %v974 = vlaneseq
        %v975 = vshrl.u32 %v974, 7
        %v976 = vsub.s32 0, %v975
        %v977 = vrot.slane %v972, %v976
        %v983 = vunpack.c.l.b16 %v968
        %v984 = vunpack.c.l.b16 %v969
        %v985 = vunpack.c.l.b16 %v970
        %v986 = vunpack.c.l.b16 %v971
        %v987 = vpack.c.b16 %v984, %v983
        %v988 = vpack.c.b16 %v986, %v985
        %991 = vmatprep.subr.bf16.mxu0 0
        %992 = vmatpush1.bf16.msra.mxu0 %v987
        %993 = vmatprep.subr.bf16.mxu0 0
        %994 = vmatpush1.bf16.msra.mxu0 %v988
        %995 = vmatprep.subr.bf16.mxu0 0
        %996 = vmatpush1.bf16.msra.mxu0 0
        %997 = vmatprep.subr.bf16.mxu0 0
        %998 = vmatpush1.bf16.msra.mxu0 0
        %999 = vmatprep.subr.bf16.mxu0 0
        %1000 = vmatpush1.bf16.msra.mxu0 0
        %1001 = vmatprep.subr.bf16.mxu0 0
        %1002 = vmatpush1.bf16.msra.mxu0 0
        %1003 = vmatprep.subr.bf16.mxu0 0
        %1004 = vmatpush1.bf16.msra.mxu0 0
        %1005 = vmatprep.subr.bf16.mxu0 0
        %1006 = vmatpush1.bf16.msra.mxu0 0
        %1007 = vmatprep.subr.bf16.mxu0 0
        %1008 = vmatpush1.bf16.msra.mxu0 0
        %1009 = vmatprep.subr.bf16.mxu0 0
        %1010 = vmatpush1.bf16.msra.mxu0 0
        %1011 = vmatprep.subr.bf16.mxu0 0
        %1012 = vmatpush1.bf16.msra.mxu0 0
        %1013 = vmatprep.subr.bf16.mxu0 0
        %1014 = vmatpush1.bf16.msra.mxu0 0
        %1015 = vmatprep.subr.bf16.mxu0 0
        %1016 = vmatpush1.bf16.msra.mxu0 0
        %1017 = vmatprep.subr.bf16.mxu0 0
        %1018 = vmatpush1.bf16.msra.mxu0 0
        %1019 = vmatprep.subr.bf16.mxu0 0
        %1020 = vmatpush1.bf16.msra.mxu0 0
        %1021 = vmatprep.subr.bf16.mxu0 0
        %1022 = vmatpush1.bf16.msra.mxu0 0
        %1023 = vmatprep.mubr.bf16.mxu0 0
        %1024 = vmatmul.mubr.bf16.gmra.mrb[0].mxu0 %v926
        %v1025 = vpop.f32.mrb[0].mxu0
        %v1026 = vadd.f32 %v977, %v1025
        %v1027 = vpop.f32.mrb[0].mxu0
        %v1028 = vpop.f32.mrb[0].mxu0
        %v1029 = vpop.f32.mrb[0].mxu0
        %1030 = vdwg.mxu0
        %v1031 = vmul.f32 %v963, 0.35355338
        %v1032 = vld [vmem:[%s8] sm:$0xf]
        %v1033 = vld [vmem:[%s8 + $0x4] sm:$0xf]
        %v1034 = vld [vmem:[%s8 + $0x8] sm:$0xf]
        %v1035 = vld [vmem:[%s8 + $0xc] sm:$0xf]
        %v1036 = vpack.c.bf16 %v1031, %v1031
        %v1037 = vpack.c.bf16 %v1026, %v1026
        %vm1038 = vcmask 64512
        %v1040 = vsel %vm1038, %v1036, 0
        %v1043 = vsel %vm1038, %v1037, 0
        %1045 = vmatprep.subr.bf16.mxu0 0
        %1046 = vmatpush1.bf16.xpose.msra.mxu0 %v1043
        %1047 = vmatprep.subr.bf16.mxu0 0
        %1048 = vmatpush1.bf16.xpose.msra.mxu0 0
        %1049 = vmatprep.subr.bf16.mxu0 0
        %1050 = vmatpush1.bf16.xpose.msra.mxu0 0
        %1051 = vmatprep.subr.bf16.mxu0 0
        %1052 = vmatpush1.bf16.xpose.msra.mxu0 0
        %1053 = vmatprep.subr.bf16.mxu0 0
        %1054 = vmatpush1.bf16.xpose.msra.mxu0 0
        %1055 = vmatprep.subr.bf16.mxu0 0
        %1056 = vmatpush1.bf16.xpose.msra.mxu0 0
        %1057 = vmatprep.subr.bf16.mxu0 0
        %1058 = vmatpush1.bf16.xpose.msra.mxu0 0
        %1059 = vmatprep.subr.bf16.mxu0 0
        %1060 = vmatpush1.bf16.xpose.msra.mxu0 0
        %1061 = vmatprep.subr.bf16.mxu0 0
        %1062 = vmatpush1.bf16.xpose.msra.mxu0 0
        %1063 = vmatprep.subr.bf16.mxu0 0
        %1064 = vmatpush1.bf16.xpose.msra.mxu0 0
        %1065 = vmatprep.subr.bf16.mxu0 0
        %1066 = vmatpush1.bf16.xpose.msra.mxu0 0
        %1067 = vmatprep.subr.bf16.mxu0 0
        %1068 = vmatpush1.bf16.xpose.msra.mxu0 0
        %1069 = vmatprep.subr.bf16.mxu0 0
        %1070 = vmatpush1.bf16.xpose.msra.mxu0 0
        %1071 = vmatprep.subr.bf16.mxu0 0
        %1072 = vmatpush1.bf16.xpose.msra.mxu0 0
        %1073 = vmatprep.subr.bf16.mxu0 0
        %1074 = vmatpush1.bf16.xpose.msra.mxu0 0
        %1075 = vmatprep.subr.bf16.mxu0 0
        %1076 = vmatpush1.bf16.xpose.msra.mxu0 0
        %1077 = vmatprep.mubr.bf16.mxu0 0
        %1078 = vmatmul.mubr.bf16.gmra.mrb[0].mxu0 %v1040
        %v1079 = vpop.f32.mrb[0].mxu0
        %v1080 = vadd.f32 %v869, %v1079
        %v1081 = vpop.f32.mrb[0].mxu0
        %v1082 = vpop.f32.mrb[0].mxu0
        %v1083 = vpop.f32.mrb[0].mxu0
        %1084 = vdwg.mxu0
        %v1085 = vsel %vm1038, %v1080, -inf
        %1086 = vmax.xlane.f32.xlu0 %v1085
        %v1087 = vpop.xlane.xlu0 %1086
        %v1088 = vsub.f32 %v1080, %v1087
        %v1089 = vmul.f32 %v1088, 1.442695
        %v1090 = vpow.pop %v1089
        %v1091 = vsel %vm1038, %v1090, 0.0
        %1092 = vadd.xlane.f32.xlu0 %v1091
        %v1093 = vpop.xlane.xlu0 %1092
        %v1094 = vrcp.pop %v1093
        %v1095 = vmul.f32 %v1090, %v1094
        %v1096 = vpack.c.bf16 %v1095, %v1095
        %1098 = vrot.lane.b32.xlu0 %v1037, 96
        %v1099 = vpop.permute.xlu0 %1098
        %v1101 = vsel %vm1038, %v1096, 0
        %vm1103 = vcmask 1043456
        %v1105 = vsel %vm1103, %v1099, 0
        %1107 = vmatprep.subr.bf16.mxu0 0
        %1108 = vmatpush1.bf16.msra.mxu0 %v1105
        %1109 = vmatprep.subr.bf16.mxu0 0
        %1110 = vmatpush1.bf16.msra.mxu0 0
        %1111 = vmatprep.subr.bf16.mxu0 0
        %1112 = vmatpush1.bf16.msra.mxu0 0
        %1113 = vmatprep.subr.bf16.mxu0 0
        %1114 = vmatpush1.bf16.msra.mxu0 0
        %1115 = vmatprep.subr.bf16.mxu0 0
        %1116 = vmatpush1.bf16.msra.mxu0 0
        %1117 = vmatprep.subr.bf16.mxu0 0
        %1118 = vmatpush1.bf16.msra.mxu0 0
        %1119 = vmatprep.subr.bf16.mxu0 0
        %1120 = vmatpush1.bf16.msra.mxu0 0
        %1121 = vmatprep.subr.bf16.mxu0 0
        %1122 = vmatpush1.bf16.msra.mxu0 0
        %1123 = vmatprep.subr.bf16.mxu0 0
        %1124 = vmatpush1.bf16.msra.mxu0 0
        %1125 = vmatprep.subr.bf16.mxu0 0
        %1126 = vmatpush1.bf16.msra.mxu0 0
        %1127 = vmatprep.subr.bf16.mxu0 0
        %1128 = vmatpush1.bf16.msra.mxu0 0
        %1129 = vmatprep.subr.bf16.mxu0 0
        %1130 = vmatpush1.bf16.msra.mxu0 0
        %1131 = vmatprep.subr.bf16.mxu0 0
        %1132 = vmatpush1.bf16.msra.mxu0 0
        %1133 = vmatprep.subr.bf16.mxu0 0
        %1134 = vmatpush1.bf16.msra.mxu0 0
        %1135 = vmatprep.subr.bf16.mxu0 0
        %1136 = vmatpush1.bf16.msra.mxu0 0
        %1137 = vmatprep.subr.bf16.mxu0 0
        %1138 = vmatpush1.bf16.msra.mxu0 0
        %1139 = vmatprep.mubr.bf16.mxu0 0
        %1140 = vmatmul.mubr.bf16.gmra.mrb[0].mxu0 %v1101
        %v1141 = vpop.f32.mrb[0].mxu0
        %v1142 = vadd.f32 0.0, %v1141
        %v1143 = vpop.f32.mrb[0].mxu0
        %v1144 = vpop.f32.mrb[0].mxu0
        %v1145 = vpop.f32.mrb[0].mxu0
        %1146 = vdwg.mxu0
        %v1147 = vpack.c.bf16 %v1142, %v1142
        %1149 = vrot.lane.b32.xlu0 %v1036, 120
        %v1150 = vpop.permute.xlu0 %1149
        %1151 = vrot.lane.b32.xlu0 %v1037, 120
        %v1152 = vpop.permute.xlu0 %1151
        %v1154 = vsel %vm1038, %v1150, 0
        %v1157 = vsel %vm1038, %v1152, 0
        %1159 = vmatprep.subr.bf16.mxu0 0
        %1160 = vmatpush1.bf16.xpose.msra.mxu0 %v1157
        %1161 = vmatprep.subr.bf16.mxu0 0
        %1162 = vmatpush1.bf16.xpose.msra.mxu0 0
        %1163 = vmatprep.subr.bf16.mxu0 0
        %1164 = vmatpush1.bf16.xpose.msra.mxu0 0
        %1165 = vmatprep.subr.bf16.mxu0 0
        %1166 = vmatpush1.bf16.xpose.msra.mxu0 0
        %1167 = vmatprep.subr.bf16.mxu0 0
        %1168 = vmatpush1.bf16.xpose.msra.mxu0 0
        %1169 = vmatprep.subr.bf16.mxu0 0
        %1170 = vmatpush1.bf16.xpose.msra.mxu0 0
        %1171 = vmatprep.subr.bf16.mxu0 0
        %1172 = vmatpush1.bf16.xpose.msra.mxu0 0
        %1173 = vmatprep.subr.bf16.mxu0 0
        %1174 = vmatpush1.bf16.xpose.msra.mxu0 0
        %1175 = vmatprep.subr.bf16.mxu0 0
        %1176 = vmatpush1.bf16.xpose.msra.mxu0 0
        %1177 = vmatprep.subr.bf16.mxu0 0
        %1178 = vmatpush1.bf16.xpose.msra.mxu0 0
        %1179 = vmatprep.subr.bf16.mxu0 0
        %1180 = vmatpush1.bf16.xpose.msra.mxu0 0
        %1181 = vmatprep.subr.bf16.mxu0 0
        %1182 = vmatpush1.bf16.xpose.msra.mxu0 0
        %1183 = vmatprep.subr.bf16.mxu0 0
        %1184 = vmatpush1.bf16.xpose.msra.mxu0 0
        %1185 = vmatprep.subr.bf16.mxu0 0
        %1186 = vmatpush1.bf16.xpose.msra.mxu0 0
        %1187 = vmatprep.subr.bf16.mxu0 0
        %1188 = vmatpush1.bf16.xpose.msra.mxu0 0
        %1189 = vmatprep.subr.bf16.mxu0 0
        %1190 = vmatpush1.bf16.xpose.msra.mxu0 0
        %1191 = vmatprep.mubr.bf16.mxu0 0
        %1192 = vmatmul.mubr.bf16.gmra.mrb[0].mxu0 %v1154
        %v1193 = vpop.f32.mrb[0].mxu0
        %v1194 = vadd.f32 %v869, %v1193
        %v1195 = vpop.f32.mrb[0].mxu0
        %v1196 = vpop.f32.mrb[0].mxu0
        %v1197 = vpop.f32.mrb[0].mxu0
        %1198 = vdwg.mxu0
        %v1199 = vsel %vm1038, %v1194, -inf
        %1200 = vmax.xlane.f32.xlu0 %v1199
        %v1201 = vpop.xlane.xlu0 %1200
        %v1202 = vsub.f32 %v1194, %v1201
        %v1203 = vmul.f32 %v1202, 1.442695
        %v1204 = vpow.pop %v1203
        %v1205 = vsel %vm1038, %v1204, 0.0
        %1206 = vadd.xlane.f32.xlu0 %v1205
        %v1207 = vpop.xlane.xlu0 %1206
        %v1208 = vrcp.pop %v1207
        %v1209 = vmul.f32 %v1204, %v1208
        %v1210 = vpack.c.bf16 %v1209, %v1209
        %1211 = vrot.lane.b32.xlu0 %v1037, 88
        %v1212 = vpop.permute.xlu0 %1211
        %v1214 = vsel %vm1038, %v1210, 0
        %v1217 = vsel %vm1103, %v1212, 0
        %1219 = vmatprep.subr.bf16.mxu0 0
        %1220 = vmatpush1.bf16.msra.mxu0 %v1217
        %1221 = vmatprep.subr.bf16.mxu0 0
        %1222 = vmatpush1.bf16.msra.mxu0 0
        %1223 = vmatprep.subr.bf16.mxu0 0
        %1224 = vmatpush1.bf16.msra.mxu0 0
        %1225 = vmatprep.subr.bf16.mxu0 0
        %1226 = vmatpush1.bf16.msra.mxu0 0
        %1227 = vmatprep.subr.bf16.mxu0 0
        %1228 = vmatpush1.bf16.msra.mxu0 0
        %1229 = vmatprep.subr.bf16.mxu0 0
        %1230 = vmatpush1.bf16.msra.mxu0 0
        %1231 = vmatprep.subr.bf16.mxu0 0
        %1232 = vmatpush1.bf16.msra.mxu0 0
        %1233 = vmatprep.subr.bf16.mxu0 0
        %1234 = vmatpush1.bf16.msra.mxu0 0
        %1235 = vmatprep.subr.bf16.mxu0 0
        %1236 = vmatpush1.bf16.msra.mxu0 0
        %1237 = vmatprep.subr.bf16.mxu0 0
        %1238 = vmatpush1.bf16.msra.mxu0 0
        %1239 = vmatprep.subr.bf16.mxu0 0
        %1240 = vmatpush1.bf16.msra.mxu0 0
        %1241 = vmatprep.subr.bf16.mxu0 0
        %1242 = vmatpush1.bf16.msra.mxu0 0
        %1243 = vmatprep.subr.bf16.mxu0 0
        %1244 = vmatpush1.bf16.msra.mxu0 0
        %1245 = vmatprep.subr.bf16.mxu0 0
        %1246 = vmatpush1.bf16.msra.mxu0 0
        %1247 = vmatprep.subr.bf16.mxu0 0
        %1248 = vmatpush1.bf16.msra.mxu0 0
        %1249 = vmatprep.subr.bf16.mxu0 0
        %1250 = vmatpush1.bf16.msra.mxu0 0
        %1251 = vmatprep.mubr.bf16.mxu0 0
        %1252 = vmatmul.mubr.bf16.gmra.mrb[0].mxu0 %v1214
        %v1253 = vpop.f32.mrb[0].mxu0
        %v1254 = vadd.f32 0.0, %v1253
        %v1255 = vpop.f32.mrb[0].mxu0
        %v1256 = vpop.f32.mrb[0].mxu0
        %v1257 = vpop.f32.mrb[0].mxu0
        %1258 = vdwg.mxu0
        %v1259 = vpack.c.bf16 %v1254, %v1254
        %v1261 = vsel %vm1038, %v1259, 0
        %v1264 = vsel %vm1103, %v1033, 0
        %1266 = vmatprep.subr.bf16.mxu0 0
        %1267 = vmatpush1.bf16.msra.mxu0 %v1264
        %1268 = vmatprep.subr.bf16.mxu0 0
        %1269 = vmatpush1.bf16.msra.mxu0 0
        %1270 = vmatprep.subr.bf16.mxu0 0
        %1271 = vmatpush1.bf16.msra.mxu0 0
        %1272 = vmatprep.subr.bf16.mxu0 0
        %1273 = vmatpush1.bf16.msra.mxu0 0
        %1274 = vmatprep.subr.bf16.mxu0 0
        %1275 = vmatpush1.bf16.msra.mxu0 0
        %1276 = vmatprep.subr.bf16.mxu0 0
        %1277 = vmatpush1.bf16.msra.mxu0 0
        %1278 = vmatprep.subr.bf16.mxu0 0
        %1279 = vmatpush1.bf16.msra.mxu0 0
        %1280 = vmatprep.subr.bf16.mxu0 0
        %1281 = vmatpush1.bf16.msra.mxu0 0
        %1282 = vmatprep.subr.bf16.mxu0 0
        %1283 = vmatpush1.bf16.msra.mxu0 0
        %1284 = vmatprep.subr.bf16.mxu0 0
        %1285 = vmatpush1.bf16.msra.mxu0 0
        %1286 = vmatprep.subr.bf16.mxu0 0
        %1287 = vmatpush1.bf16.msra.mxu0 0
        %1288 = vmatprep.subr.bf16.mxu0 0
        %1289 = vmatpush1.bf16.msra.mxu0 0
        %1290 = vmatprep.subr.bf16.mxu0 0
        %1291 = vmatpush1.bf16.msra.mxu0 0
        %1292 = vmatprep.subr.bf16.mxu0 0
        %1293 = vmatpush1.bf16.msra.mxu0 0
        %1294 = vmatprep.subr.bf16.mxu0 0
        %1295 = vmatpush1.bf16.msra.mxu0 0
        %1296 = vmatprep.subr.bf16.mxu0 0
        %1297 = vmatpush1.bf16.msra.mxu0 0
        %1298 = vmatprep.mubr.bf16.mxu0 0
        %1299 = vmatmul.mubr.bf16.gmra.mrb[0].mxu0 %v1261
        %v1300 = vpop.f32.mrb[0].mxu0
        %v1301 = vadd.f32 0.0, %v1300
        %v1302 = vpop.f32.mrb[0].mxu0
        %v1303 = vpop.f32.mrb[0].mxu0
        %v1304 = vpop.f32.mrb[0].mxu0
        %1305 = vdwg.mxu0
        %v1307 = vsel %vm1038, %v1147, 0
        %v1310 = vsel %vm1103, %v1032, 0
        %1312 = vmatprep.subr.bf16.mxu0 0
        %1313 = vmatpush1.bf16.msra.mxu0 %v1310
        %1314 = vmatprep.subr.bf16.mxu0 0
        %1315 = vmatpush1.bf16.msra.mxu0 0
        %1316 = vmatprep.subr.bf16.mxu0 0
        %1317 = vmatpush1.bf16.msra.mxu0 0
        %1318 = vmatprep.subr.bf16.mxu0 0
        %1319 = vmatpush1.bf16.msra.mxu0 0
        %1320 = vmatprep.subr.bf16.mxu0 0
        %1321 = vmatpush1.bf16.msra.mxu0 0
        %1322 = vmatprep.subr.bf16.mxu0 0
        %1323 = vmatpush1.bf16.msra.mxu0 0
        %1324 = vmatprep.subr.bf16.mxu0 0
        %1325 = vmatpush1.bf16.msra.mxu0 0
        %1326 = vmatprep.subr.bf16.mxu0 0
        %1327 = vmatpush1.bf16.msra.mxu0 0
        %1328 = vmatprep.subr.bf16.mxu0 0
        %1329 = vmatpush1.bf16.msra.mxu0 0
        %1330 = vmatprep.subr.bf16.mxu0 0
        %1331 = vmatpush1.bf16.msra.mxu0 0
        %1332 = vmatprep.subr.bf16.mxu0 0
        %1333 = vmatpush1.bf16.msra.mxu0 0
        %1334 = vmatprep.subr.bf16.mxu0 0
        %1335 = vmatpush1.bf16.msra.mxu0 0
        %1336 = vmatprep.subr.bf16.mxu0 0
        %1337 = vmatpush1.bf16.msra.mxu0 0
        %1338 = vmatprep.subr.bf16.mxu0 0
        %1339 = vmatpush1.bf16.msra.mxu0 0
        %1340 = vmatprep.subr.bf16.mxu0 0
        %1341 = vmatpush1.bf16.msra.mxu0 0
        %1342 = vmatprep.subr.bf16.mxu0 0
        %1343 = vmatpush1.bf16.msra.mxu0 0
        %1344 = vmatprep.mubr.bf16.mxu0 0
        %1345 = vmatmul.mubr.bf16.gmra.mrb[0].mxu0 %v1307
        %v1346 = vpop.f32.mrb[0].mxu0
        %v1347 = vadd.f32 %v1301, %v1346
        %v1348 = vpop.f32.mrb[0].mxu0
        %v1349 = vpop.f32.mrb[0].mxu0
        %v1350 = vpop.f32.mrb[0].mxu0
        %1351 = vdwg.mxu0
        %1352 = vrot.lane.b32.xlu0 %v1036, 112
        %v1353 = vpop.permute.xlu0 %1352
        %1354 = vrot.lane.b32.xlu0 %v1037, 112
        %v1355 = vpop.permute.xlu0 %1354
        %v1357 = vsel %vm1038, %v1353, 0
        %v1360 = vsel %vm1038, %v1355, 0
        %1362 = vmatprep.subr.bf16.mxu0 0
        %1363 = vmatpush1.bf16.xpose.msra.mxu0 %v1360
        %1364 = vmatprep.subr.bf16.mxu0 0
        %1365 = vmatpush1.bf16.xpose.msra.mxu0 0
        %1366 = vmatprep.subr.bf16.mxu0 0
        %1367 = vmatpush1.bf16.xpose.msra.mxu0 0
        %1368 = vmatprep.subr.bf16.mxu0 0
        %1369 = vmatpush1.bf16.xpose.msra.mxu0 0
        %1370 = vmatprep.subr.bf16.mxu0 0
        %1371 = vmatpush1.bf16.xpose.msra.mxu0 0
        %1372 = vmatprep.subr.bf16.mxu0 0
        %1373 = vmatpush1.bf16.xpose.msra.mxu0 0
        %1374 = vmatprep.subr.bf16.mxu0 0
        %1375 = vmatpush1.bf16.xpose.msra.mxu0 0
        %1376 = vmatprep.subr.bf16.mxu0 0
        %1377 = vmatpush1.bf16.xpose.msra.mxu0 0
        %1378 = vmatprep.subr.bf16.mxu0 0
        %1379 = vmatpush1.bf16.xpose.msra.mxu0 0
        %1380 = vmatprep.subr.bf16.mxu0 0
        %1381 = vmatpush1.bf16.xpose.msra.mxu0 0
        %1382 = vmatprep.subr.bf16.mxu0 0
        %1383 = vmatpush1.bf16.xpose.msra.mxu0 0
        %1384 = vmatprep.subr.bf16.mxu0 0
        %1385 = vmatpush1.bf16.xpose.msra.mxu0 0
        %1386 = vmatprep.subr.bf16.mxu0 0
        %1387 = vmatpush1.bf16.xpose.msra.mxu0 0
        %1388 = vmatprep.subr.bf16.mxu0 0
        %1389 = vmatpush1.bf16.xpose.msra.mxu0 0
        %1390 = vmatprep.subr.bf16.mxu0 0
        %1391 = vmatpush1.bf16.xpose.msra.mxu0 0
        %1392 = vmatprep.subr.bf16.mxu0 0
        %1393 = vmatpush1.bf16.xpose.msra.mxu0 0
        %1394 = vmatprep.mubr.bf16.mxu0 0
        %1395 = vmatmul.mubr.bf16.gmra.mrb[0].mxu0 %v1357
        %v1396 = vpop.f32.mrb[0].mxu0
        %v1397 = vadd.f32 %v869, %v1396
        %v1398 = vpop.f32.mrb[0].mxu0
        %v1399 = vpop.f32.mrb[0].mxu0
        %v1400 = vpop.f32.mrb[0].mxu0
        %1401 = vdwg.mxu0
        %v1402 = vsel %vm1038, %v1397, -inf
        %1403 = vmax.xlane.f32.xlu0 %v1402
        %v1404 = vpop.xlane.xlu0 %1403
        %v1405 = vsub.f32 %v1397, %v1404
        %v1406 = vmul.f32 %v1405, 1.442695
        %v1407 = vpow.pop %v1406
        %v1408 = vsel %vm1038, %v1407, 0.0
        %1409 = vadd.xlane.f32.xlu0 %v1408
        %v1410 = vpop.xlane.xlu0 %1409
        %v1411 = vrcp.pop %v1410
        %v1412 = vmul.f32 %v1407, %v1411
        %v1413 = vpack.c.bf16 %v1412, %v1412
        %1414 = vrot.lane.b32.xlu0 %v1037, 80
        %v1415 = vpop.permute.xlu0 %1414
        %v1417 = vsel %vm1038, %v1413, 0
        %v1420 = vsel %vm1103, %v1415, 0
        %1422 = vmatprep.subr.bf16.mxu0 0
        %1423 = vmatpush1.bf16.msra.mxu0 %v1420
        %1424 = vmatprep.subr.bf16.mxu0 0
        %1425 = vmatpush1.bf16.msra.mxu0 0
        %1426 = vmatprep.subr.bf16.mxu0 0
        %1427 = vmatpush1.bf16.msra.mxu0 0
        %1428 = vmatprep.subr.bf16.mxu0 0
        %1429 = vmatpush1.bf16.msra.mxu0 0
        %1430 = vmatprep.subr.bf16.mxu0 0
        %1431 = vmatpush1.bf16.msra.mxu0 0
        %1432 = vmatprep.subr.bf16.mxu0 0
        %1433 = vmatpush1.bf16.msra.mxu0 0
        %1434 = vmatprep.subr.bf16.mxu0 0
        %1435 = vmatpush1.bf16.msra.mxu0 0
        %1436 = vmatprep.subr.bf16.mxu0 0
        %1437 = vmatpush1.bf16.msra.mxu0 0
        %1438 = vmatprep.subr.bf16.mxu0 0
        %1439 = vmatpush1.bf16.msra.mxu0 0
        %1440 = vmatprep.subr.bf16.mxu0 0
        %1441 = vmatpush1.bf16.msra.mxu0 0
        %1442 = vmatprep.subr.bf16.mxu0 0
        %1443 = vmatpush1.bf16.msra.mxu0 0
        %1444 = vmatprep.subr.bf16.mxu0 0
        %1445 = vmatpush1.bf16.msra.mxu0 0
        %1446 = vmatprep.subr.bf16.mxu0 0
        %1447 = vmatpush1.bf16.msra.mxu0 0
        %1448 = vmatprep.subr.bf16.mxu0 0
        %1449 = vmatpush1.bf16.msra.mxu0 0
        %1450 = vmatprep.subr.bf16.mxu0 0
        %1451 = vmatpush1.bf16.msra.mxu0 0
        %1452 = vmatprep.subr.bf16.mxu0 0
        %1453 = vmatpush1.bf16.msra.mxu0 0
        %1454 = vmatprep.mubr.bf16.mxu0 0
        %1455 = vmatmul.mubr.bf16.gmra.mrb[0].mxu0 %v1417
        %v1456 = vpop.f32.mrb[0].mxu0
        %v1457 = vadd.f32 0.0, %v1456
        %v1458 = vpop.f32.mrb[0].mxu0
        %v1459 = vpop.f32.mrb[0].mxu0
        %v1460 = vpop.f32.mrb[0].mxu0
        %1461 = vdwg.mxu0
        %v1462 = vpack.c.bf16 %v1457, %v1457
        %v1464 = vsel %vm1038, %v1462, 0
        %v1467 = vsel %vm1103, %v1034, 0
        %1469 = vmatprep.subr.bf16.mxu0 0
        %1470 = vmatpush1.bf16.msra.mxu0 %v1467
        %1471 = vmatprep.subr.bf16.mxu0 0
        %1472 = vmatpush1.bf16.msra.mxu0 0
        %1473 = vmatprep.subr.bf16.mxu0 0
        %1474 = vmatpush1.bf16.msra.mxu0 0
        %1475 = vmatprep.subr.bf16.mxu0 0
        %1476 = vmatpush1.bf16.msra.mxu0 0
        %1477 = vmatprep.subr.bf16.mxu0 0
        %1478 = vmatpush1.bf16.msra.mxu0 0
        %1479 = vmatprep.subr.bf16.mxu0 0
        %1480 = vmatpush1.bf16.msra.mxu0 0
        %1481 = vmatprep.subr.bf16.mxu0 0
        %1482 = vmatpush1.bf16.msra.mxu0 0
        %1483 = vmatprep.subr.bf16.mxu0 0
        %1484 = vmatpush1.bf16.msra.mxu0 0
        %1485 = vmatprep.subr.bf16.mxu0 0
        %1486 = vmatpush1.bf16.msra.mxu0 0
        %1487 = vmatprep.subr.bf16.mxu0 0
        %1488 = vmatpush1.bf16.msra.mxu0 0
        %1489 = vmatprep.subr.bf16.mxu0 0
        %1490 = vmatpush1.bf16.msra.mxu0 0
        %1491 = vmatprep.subr.bf16.mxu0 0
        %1492 = vmatpush1.bf16.msra.mxu0 0
        %1493 = vmatprep.subr.bf16.mxu0 0
        %1494 = vmatpush1.bf16.msra.mxu0 0
        %1495 = vmatprep.subr.bf16.mxu0 0
        %1496 = vmatpush1.bf16.msra.mxu0 0
        %1497 = vmatprep.subr.bf16.mxu0 0
        %1498 = vmatpush1.bf16.msra.mxu0 0
        %1499 = vmatprep.subr.bf16.mxu0 0
        %1500 = vmatpush1.bf16.msra.mxu0 0
        %1501 = vmatprep.mubr.bf16.mxu0 0
        %1502 = vmatmul.mubr.bf16.gmra.mrb[0].mxu0 %v1464
        %v1503 = vpop.f32.mrb[0].mxu0
        %v1504 = vadd.f32 0.0, %v1503
        %v1505 = vpop.f32.mrb[0].mxu0
        %v1506 = vpop.f32.mrb[0].mxu0
        %v1507 = vpop.f32.mrb[0].mxu0
        %1508 = vdwg.mxu0
        %v1509 = vadd.f32 %v1347, %v1504
        %1510 = vrot.lane.b32.xlu0 %v1036, 104
        %v1511 = vpop.permute.xlu0 %1510
        %1512 = vrot.lane.b32.xlu0 %v1037, 104
        %v1513 = vpop.permute.xlu0 %1512
        %v1515 = vsel %vm1038, %v1511, 0
        %v1518 = vsel %vm1038, %v1513, 0
        %1520 = vmatprep.subr.bf16.mxu0 0
        %1521 = vmatpush1.bf16.xpose.msra.mxu0 %v1518
        %1522 = vmatprep.subr.bf16.mxu0 0
        %1523 = vmatpush1.bf16.xpose.msra.mxu0 0
        %1524 = vmatprep.subr.bf16.mxu0 0
        %1525 = vmatpush1.bf16.xpose.msra.mxu0 0
        %1526 = vmatprep.subr.bf16.mxu0 0
        %1527 = vmatpush1.bf16.xpose.msra.mxu0 0
        %1528 = vmatprep.subr.bf16.mxu0 0
        %1529 = vmatpush1.bf16.xpose.msra.mxu0 0
        %1530 = vmatprep.subr.bf16.mxu0 0
        %1531 = vmatpush1.bf16.xpose.msra.mxu0 0
        %1532 = vmatprep.subr.bf16.mxu0 0
        %1533 = vmatpush1.bf16.xpose.msra.mxu0 0
        %1534 = vmatprep.subr.bf16.mxu0 0
        %1535 = vmatpush1.bf16.xpose.msra.mxu0 0
        %1536 = vmatprep.subr.bf16.mxu0 0
        %1537 = vmatpush1.bf16.xpose.msra.mxu0 0
        %1538 = vmatprep.subr.bf16.mxu0 0
        %1539 = vmatpush1.bf16.xpose.msra.mxu0 0
        %1540 = vmatprep.subr.bf16.mxu0 0
        %1541 = vmatpush1.bf16.xpose.msra.mxu0 0
        %1542 = vmatprep.subr.bf16.mxu0 0
        %1543 = vmatpush1.bf16.xpose.msra.mxu0 0
        %1544 = vmatprep.subr.bf16.mxu0 0
        %1545 = vmatpush1.bf16.xpose.msra.mxu0 0
        %1546 = vmatprep.subr.bf16.mxu0 0
        %1547 = vmatpush1.bf16.xpose.msra.mxu0 0
        %1548 = vmatprep.subr.bf16.mxu0 0
        %1549 = vmatpush1.bf16.xpose.msra.mxu0 0
        %1550 = vmatprep.subr.bf16.mxu0 0
        %1551 = vmatpush1.bf16.xpose.msra.mxu0 0
        %1552 = vmatprep.mubr.bf16.mxu0 0
        %1553 = vmatmul.mubr.bf16.gmra.mrb[0].mxu0 %v1515
        %v1554 = vpop.f32.mrb[0].mxu0
        %v1555 = vadd.f32 %v869, %v1554
        %v1556 = vpop.f32.mrb[0].mxu0
        %v1557 = vpop.f32.mrb[0].mxu0
        %v1558 = vpop.f32.mrb[0].mxu0
        %1559 = vdwg.mxu0
        %v1560 = vsel %vm1038, %v1555, -inf
        %1561 = vmax.xlane.f32.xlu0 %v1560
        %v1562 = vpop.xlane.xlu0 %1561
        %v1563 = vsub.f32 %v1555, %v1562
        %v1564 = vmul.f32 %v1563, 1.442695
        %v1565 = vpow.pop %v1564
        %v1566 = vsel %vm1038, %v1565, 0.0
        %1567 = vadd.xlane.f32.xlu0 %v1566
        %v1568 = vpop.xlane.xlu0 %1567
        %v1569 = vrcp.pop %v1568
        %v1570 = vmul.f32 %v1565, %v1569
        %v1571 = vpack.c.bf16 %v1570, %v1570
        %1572 = vrot.lane.b32.xlu0 %v1037, 72
        %v1573 = vpop.permute.xlu0 %1572
        %v1575 = vsel %vm1038, %v1571, 0
        %v1578 = vsel %vm1103, %v1573, 0
        %1580 = vmatprep.subr.bf16.mxu0 0
        %1581 = vmatpush1.bf16.msra.mxu0 %v1578
        %1582 = vmatprep.subr.bf16.mxu0 0
        %1583 = vmatpush1.bf16.msra.mxu0 0
        %1584 = vmatprep.subr.bf16.mxu0 0
        %1585 = vmatpush1.bf16.msra.mxu0 0
        %1586 = vmatprep.subr.bf16.mxu0 0
        %1587 = vmatpush1.bf16.msra.mxu0 0
        %1588 = vmatprep.subr.bf16.mxu0 0
        %1589 = vmatpush1.bf16.msra.mxu0 0
        %1590 = vmatprep.subr.bf16.mxu0 0
        %1591 = vmatpush1.bf16.msra.mxu0 0
        %1592 = vmatprep.subr.bf16.mxu0 0
        %1593 = vmatpush1.bf16.msra.mxu0 0
        %1594 = vmatprep.subr.bf16.mxu0 0
        %1595 = vmatpush1.bf16.msra.mxu0 0
        %1596 = vmatprep.subr.bf16.mxu0 0
        %1597 = vmatpush1.bf16.msra.mxu0 0
        %1598 = vmatprep.subr.bf16.mxu0 0
        %1599 = vmatpush1.bf16.msra.mxu0 0
        %1600 = vmatprep.subr.bf16.mxu0 0
        %1601 = vmatpush1.bf16.msra.mxu0 0
        %1602 = vmatprep.subr.bf16.mxu0 0
        %1603 = vmatpush1.bf16.msra.mxu0 0
        %1604 = vmatprep.subr.bf16.mxu0 0
        %1605 = vmatpush1.bf16.msra.mxu0 0
        %1606 = vmatprep.subr.bf16.mxu0 0
        %1607 = vmatpush1.bf16.msra.mxu0 0
        %1608 = vmatprep.subr.bf16.mxu0 0
        %1609 = vmatpush1.bf16.msra.mxu0 0
        %1610 = vmatprep.subr.bf16.mxu0 0
        %1611 = vmatpush1.bf16.msra.mxu0 0
        %1612 = vmatprep.mubr.bf16.mxu0 0
        %1613 = vmatmul.mubr.bf16.gmra.mrb[0].mxu0 %v1575
        %v1614 = vpop.f32.mrb[0].mxu0
        %v1615 = vadd.f32 0.0, %v1614
        %v1616 = vpop.f32.mrb[0].mxu0
        %v1617 = vpop.f32.mrb[0].mxu0
        %v1618 = vpop.f32.mrb[0].mxu0
        %1619 = vdwg.mxu0
        %v1620 = vpack.c.bf16 %v1615, %v1615
        %v1622 = vsel %vm1038, %v1620, 0
        %v1625 = vsel %vm1103, %v1035, 0
        %1627 = vmatprep.subr.bf16.mxu0 0
        %1628 = vmatpush1.bf16.msra.mxu0 %v1625
        %1629 = vmatprep.subr.bf16.mxu0 0
        %1630 = vmatpush1.bf16.msra.mxu0 0
        %1631 = vmatprep.subr.bf16.mxu0 0
        %1632 = vmatpush1.bf16.msra.mxu0 0
        %1633 = vmatprep.subr.bf16.mxu0 0
        %1634 = vmatpush1.bf16.msra.mxu0 0
        %1635 = vmatprep.subr.bf16.mxu0 0
        %1636 = vmatpush1.bf16.msra.mxu0 0
        %1637 = vmatprep.subr.bf16.mxu0 0
        %1638 = vmatpush1.bf16.msra.mxu0 0
        %1639 = vmatprep.subr.bf16.mxu0 0
        %1640 = vmatpush1.bf16.msra.mxu0 0
        %1641 = vmatprep.subr.bf16.mxu0 0
        %1642 = vmatpush1.bf16.msra.mxu0 0
        %1643 = vmatprep.subr.bf16.mxu0 0
        %1644 = vmatpush1.bf16.msra.mxu0 0
        %1645 = vmatprep.subr.bf16.mxu0 0
        %1646 = vmatpush1.bf16.msra.mxu0 0
        %1647 = vmatprep.subr.bf16.mxu0 0
        %1648 = vmatpush1.bf16.msra.mxu0 0
        %1649 = vmatprep.subr.bf16.mxu0 0
        %1650 = vmatpush1.bf16.msra.mxu0 0
        %1651 = vmatprep.subr.bf16.mxu0 0
        %1652 = vmatpush1.bf16.msra.mxu0 0
        %1653 = vmatprep.subr.bf16.mxu0 0
        %1654 = vmatpush1.bf16.msra.mxu0 0
        %1655 = vmatprep.subr.bf16.mxu0 0
        %1656 = vmatpush1.bf16.msra.mxu0 0
        %1657 = vmatprep.subr.bf16.mxu0 0
        %1658 = vmatpush1.bf16.msra.mxu0 0
        %1659 = vmatprep.mubr.bf16.mxu0 0
        %1660 = vmatmul.mubr.bf16.gmra.mrb[0].mxu0 %v1622
        %v1661 = vpop.f32.mrb[0].mxu0
        %v1662 = vadd.f32 0.0, %v1661
        %v1663 = vpop.f32.mrb[0].mxu0
        %v1664 = vpop.f32.mrb[0].mxu0
        %v1665 = vpop.f32.mrb[0].mxu0
        %1666 = vdwg.mxu0
        %v1667 = vadd.f32 %v1509, %v1662
        %v1668 = vld [vmem:[%s9] sm:$0x1]
        %v1670 = vlaneseq
        %v1671 = vshrl.u32 %v1670, 7
        %v1672 = vsub.s32 0, %v1671
        %v1673 = vrot.slane %v1668, %v1672
        %v1675 = vadd.f32 %v1667, %v1673
        %v1676 = vadd.f32 %v865, %v1675
        %s1677 = sld [smem:[#allocation17 + $0x1]]
        %s1678 = sld [smem:[#allocation18 + $0x1]]
        %v1679 = vsel %vm875, %v1676, 0.0
        %1680 = vadd.xlane.f32.xlu0 %v1679
        %v1681 = vpop.xlane.xlu0 %1680
        %v1682 = vmul.f32 %v1681, %v879
        %v1683 = vsub.f32 %v1676, %v1682
        %v1684 = vmul.f32 %v1683, %v1683
        %v1685 = vsel %vm875, %v1684, 0.0
        %1686 = vadd.xlane.f32.xlu0 %v1685
        %v1687 = vpop.xlane.xlu0 %1686
        %v1688 = vmul.f32 %v1687, 0.032258064
        %v1689 = vrsqrt.pop %v1688
        %v1690 = vmul.f32 %v1688, %v1689
        %vm1691 = vcmp.eq.f32.partialorder %v1688, inf
        %v1692 = vsel %vm1691, %v1688, %v1690
        %vm1693 = vcmp.eq.f32.partialorder %v1688, 0.0
        %v1694 = vand.u32 %v1688, 2147483648
        %v1695 = vsel %vm1693, %v1694, %v1692
        %v1696 = vadd.f32 %v1695, 1e-06
        %v1697 = vrcp.pop %v1696
        %v1698 = vstv %s1677
        %v1699 = vmul.f32 %v1698, %v1697
        %v1700 = vmul.f32 %v1683, %v1699
        %v1701 = vstv %s1678
        %v1702 = vadd.f32 %v1700, %v1701
        %v1703 = vpack.c.bf16 %v1702, %v1702
        %v1704 = vpack.c.bf16 %v866, %v866
        %v1705 = vld [vmem:[%s10] sm:$0xf]
        %v1706 = vld [vmem:[%s10 + $0x4] sm:$0xf]
        %v1707 = vld [vmem:[%s10 + $0x8] sm:$0xf]
        %v1708 = vld [vmem:[%s10 + $0xc] sm:$0xf]
        %v1709 = vld [vmem:[#allocation2] sm:$0x1]
        %v1711 = vlaneseq
        %v1712 = vshrl.u32 %v1711, 7
        %v1713 = vsub.s32 0, %v1712
        %v1714 = vrot.slane %v1709, %v1713
        %v1720 = vunpack.c.l.b16 %v1705
        %v1721 = vunpack.c.l.b16 %v1706
        %v1722 = vunpack.c.l.b16 %v1707
        %v1723 = vunpack.c.l.b16 %v1708
        %v1724 = vpack.c.b16 %v1721, %v1720
        %v1725 = vpack.c.b16 %v1723, %v1722
        %v1729 = vsel %vm875, %v1703, 0
        %1731 = vmatprep.subr.bf16.mxu0 0
        %1732 = vmatpush1.bf16.msra.mxu0 %v1724
        %1733 = vmatprep.subr.bf16.mxu0 0
        %1734 = vmatpush1.bf16.msra.mxu0 %v1725
        %1735 = vmatprep.subr.bf16.mxu0 0
        %1736 = vmatpush1.bf16.msra.mxu0 0
        %1737 = vmatprep.subr.bf16.mxu0 0
        %1738 = vmatpush1.bf16.msra.mxu0 0
        %1739 = vmatprep.subr.bf16.mxu0 0
        %1740 = vmatpush1.bf16.msra.mxu0 0
        %1741 = vmatprep.subr.bf16.mxu0 0
        %1742 = vmatpush1.bf16.msra.mxu0 0
        %1743 = vmatprep.subr.bf16.mxu0 0
        %1744 = vmatpush1.bf16.msra.mxu0 0
        %1745 = vmatprep.subr.bf16.mxu0 0
        %1746 = vmatpush1.bf16.msra.mxu0 0
        %1747 = vmatprep.subr.bf16.mxu0 0
        %1748 = vmatpush1.bf16.msra.mxu0 0
        %1749 = vmatprep.subr.bf16.mxu0 0
        %1750 = vmatpush1.bf16.msra.mxu0 0
        %1751 = vmatprep.subr.bf16.mxu0 0
        %1752 = vmatpush1.bf16.msra.mxu0 0
        %1753 = vmatprep.subr.bf16.mxu0 0
        %1754 = vmatpush1.bf16.msra.mxu0 0
        %1755 = vmatprep.subr.bf16.mxu0 0
        %1756 = vmatpush1.bf16.msra.mxu0 0
        %1757 = vmatprep.subr.bf16.mxu0 0
        %1758 = vmatpush1.bf16.msra.mxu0 0
        %1759 = vmatprep.subr.bf16.mxu0 0
        %1760 = vmatpush1.bf16.msra.mxu0 0
        %1761 = vmatprep.subr.bf16.mxu0 0
        %1762 = vmatpush1.bf16.msra.mxu0 0
        %1763 = vmatprep.mubr.bf16.mxu0 0
        %1764 = vmatmul.mubr.bf16.gmra.mrb[0].mxu0 %v1729
        %v1765 = vpop.f32.mrb[0].mxu0
        %v1766 = vadd.f32 %v1714, %v1765
        %v1767 = vpop.f32.mrb[0].mxu0
        %v1768 = vpop.f32.mrb[0].mxu0
        %v1769 = vpop.f32.mrb[0].mxu0
        %1770 = vdwg.mxu0
        %v1771 = vld [vmem:[#allocation6] sm:$0xf]
        %v1772 = vld [vmem:[#allocation6 + $0x4] sm:$0xf]
        %v1773 = vld [vmem:[#allocation6 + $0x8] sm:$0xf]
        %v1774 = vld [vmem:[#allocation6 + $0xc] sm:$0xf]
        %v1775 = vld [vmem:[#allocation8] sm:$0x1]
        %v1777 = vlaneseq
        %v1778 = vshrl.u32 %v1777, 7
        %v1779 = vsub.s32 0, %v1778
        %v1780 = vrot.slane %v1775, %v1779
        %v1786 = vunpack.c.l.b16 %v1771
        %v1787 = vunpack.c.l.b16 %v1772
        %v1788 = vunpack.c.l.b16 %v1773
        %v1789 = vunpack.c.l.b16 %v1774
        %v1790 = vpack.c.b16 %v1787, %v1786
        %v1791 = vpack.c.b16 %v1789, %v1788
        %v1795 = vsel %vm875, %v1704, 0
        %1797 = vmatprep.subr.bf16.mxu0 0
        %1798 = vmatpush1.bf16.msra.mxu0 %v1790
        %1799 = vmatprep.subr.bf16.mxu0 0
        %1800 = vmatpush1.bf16.msra.mxu0 %v1791
        %1801 = vmatprep.subr.bf16.mxu0 0
        %1802 = vmatpush1.bf16.msra.mxu0 0
        %1803 = vmatprep.subr.bf16.mxu0 0
        %1804 = vmatpush1.bf16.msra.mxu0 0
        %1805 = vmatprep.subr.bf16.mxu0 0
        %1806 = vmatpush1.bf16.msra.mxu0 0
        %1807 = vmatprep.subr.bf16.mxu0 0
        %1808 = vmatpush1.bf16.msra.mxu0 0
        %1809 = vmatprep.subr.bf16.mxu0 0
        %1810 = vmatpush1.bf16.msra.mxu0 0
        %1811 = vmatprep.subr.bf16.mxu0 0
        %1812 = vmatpush1.bf16.msra.mxu0 0
        %1813 = vmatprep.subr.bf16.mxu0 0
        %1814 = vmatpush1.bf16.msra.mxu0 0
        %1815 = vmatprep.subr.bf16.mxu0 0
        %1816 = vmatpush1.bf16.msra.mxu0 0
        %1817 = vmatprep.subr.bf16.mxu0 0
        %1818 = vmatpush1.bf16.msra.mxu0 0
        %1819 = vmatprep.subr.bf16.mxu0 0
        %1820 = vmatpush1.bf16.msra.mxu0 0
        %1821 = vmatprep.subr.bf16.mxu0 0
        %1822 = vmatpush1.bf16.msra.mxu0 0
        %1823 = vmatprep.subr.bf16.mxu0 0
        %1824 = vmatpush1.bf16.msra.mxu0 0
        %1825 = vmatprep.subr.bf16.mxu0 0
        %1826 = vmatpush1.bf16.msra.mxu0 0
        %1827 = vmatprep.subr.bf16.mxu0 0
        %1828 = vmatpush1.bf16.msra.mxu0 0
        %1829 = vmatprep.mubr.bf16.mxu0 0
        %1830 = vmatmul.mubr.bf16.gmra.mrb[0].mxu0 %v1795
        %v1831 = vpop.f32.mrb[0].mxu0
        %v1832 = vadd.f32 %v1780, %v1831
        %v1833 = vpop.f32.mrb[0].mxu0
        %v1834 = vpop.f32.mrb[0].mxu0
        %v1835 = vpop.f32.mrb[0].mxu0
        %1836 = vdwg.mxu0
        %v1837 = vmul.f32 %v1766, 0.35355338
        %v1838 = vld [vmem:[#allocation9] sm:$0xf]
        %v1839 = vld [vmem:[#allocation9 + $0x4] sm:$0xf]
        %v1840 = vld [vmem:[#allocation9 + $0x8] sm:$0xf]
        %v1841 = vld [vmem:[#allocation9 + $0xc] sm:$0xf]
        %v1842 = vpack.c.bf16 %v1837, %v1837
        %v1843 = vpack.c.bf16 %v1832, %v1832
        %v1845 = vsel %vm1038, %v1842, 0
        %v1848 = vsel %vm1038, %v1843, 0
        %1850 = vmatprep.subr.bf16.mxu0 0
        %1851 = vmatpush1.bf16.xpose.msra.mxu0 %v1848
        %1852 = vmatprep.subr.bf16.mxu0 0
        %1853 = vmatpush1.bf16.xpose.msra.mxu0 0
        %1854 = vmatprep.subr.bf16.mxu0 0
        %1855 = vmatpush1.bf16.xpose.msra.mxu0 0
        %1856 = vmatprep.subr.bf16.mxu0 0
        %1857 = vmatpush1.bf16.xpose.msra.mxu0 0
        %1858 = vmatprep.subr.bf16.mxu0 0
        %1859 = vmatpush1.bf16.xpose.msra.mxu0 0
        %1860 = vmatprep.subr.bf16.mxu0 0
        %1861 = vmatpush1.bf16.xpose.msra.mxu0 0
        %1862 = vmatprep.subr.bf16.mxu0 0
        %1863 = vmatpush1.bf16.xpose.msra.mxu0 0
        %1864 = vmatprep.subr.bf16.mxu0 0
        %1865 = vmatpush1.bf16.xpose.msra.mxu0 0
        %1866 = vmatprep.subr.bf16.mxu0 0
        %1867 = vmatpush1.bf16.xpose.msra.mxu0 0
        %1868 = vmatprep.subr.bf16.mxu0 0
        %1869 = vmatpush1.bf16.xpose.msra.mxu0 0
        %1870 = vmatprep.subr.bf16.mxu0 0
        %1871 = vmatpush1.bf16.xpose.msra.mxu0 0
        %1872 = vmatprep.subr.bf16.mxu0 0
        %1873 = vmatpush1.bf16.xpose.msra.mxu0 0
        %1874 = vmatprep.subr.bf16.mxu0 0
        %1875 = vmatpush1.bf16.xpose.msra.mxu0 0
        %1876 = vmatprep.subr.bf16.mxu0 0
        %1877 = vmatpush1.bf16.xpose.msra.mxu0 0
        %1878 = vmatprep.subr.bf16.mxu0 0
        %1879 = vmatpush1.bf16.xpose.msra.mxu0 0
        %1880 = vmatprep.subr.bf16.mxu0 0
        %1881 = vmatpush1.bf16.xpose.msra.mxu0 0
        %1882 = vmatprep.mubr.bf16.mxu0 0
        %1883 = vmatmul.mubr.bf16.gmra.mrb[0].mxu0 %v1845
        %v1884 = vpop.f32.mrb[0].mxu0
        %v1885 = vadd.f32 %v872, %v1884
        %v1886 = vpop.f32.mrb[0].mxu0
        %v1887 = vpop.f32.mrb[0].mxu0
        %v1888 = vpop.f32.mrb[0].mxu0
        %1889 = vdwg.mxu0
        %v1890 = vsel %vm1038, %v1885, -inf
        %1891 = vmax.xlane.f32.xlu0 %v1890
        %v1892 = vpop.xlane.xlu0 %1891
        %v1893 = vsub.f32 %v1885, %v1892
        %v1894 = vmul.f32 %v1893, 1.442695
        %v1895 = vpow.pop %v1894
        %v1896 = vsel %vm1038, %v1895, 0.0
        %1897 = vadd.xlane.f32.xlu0 %v1896
        %v1898 = vpop.xlane.xlu0 %1897
        %v1899 = vrcp.pop %v1898
        %v1900 = vmul.f32 %v1895, %v1899
        %v1901 = vpack.c.bf16 %v1900, %v1900
        %1903 = vrot.lane.b32.xlu0 %v1843, 96
        %v1904 = vpop.permute.xlu0 %1903
        %v1906 = vsel %vm1038, %v1901, 0
        %v1909 = vsel %vm1103, %v1904, 0
        %1911 = vmatprep.subr.bf16.mxu0 0
        %1912 = vmatpush1.bf16.msra.mxu0 %v1909
        %1913 = vmatprep.subr.bf16.mxu0 0
        %1914 = vmatpush1.bf16.msra.mxu0 0
        %1915 = vmatprep.subr.bf16.mxu0 0
        %1916 = vmatpush1.bf16.msra.mxu0 0
        %1917 = vmatprep.subr.bf16.mxu0 0
        %1918 = vmatpush1.bf16.msra.mxu0 0
        %1919 = vmatprep.subr.bf16.mxu0 0
        %1920 = vmatpush1.bf16.msra.mxu0 0
        %1921 = vmatprep.subr.bf16.mxu0 0
        %1922 = vmatpush1.bf16.msra.mxu0 0
        %1923 = vmatprep.subr.bf16.mxu0 0
        %1924 = vmatpush1.bf16.msra.mxu0 0
        %1925 = vmatprep.subr.bf16.mxu0 0
        %1926 = vmatpush1.bf16.msra.mxu0 0
        %1927 = vmatprep.subr.bf16.mxu0 0
        %1928 = vmatpush1.bf16.msra.mxu0 0
        %1929 = vmatprep.subr.bf16.mxu0 0
        %1930 = vmatpush1.bf16.msra.mxu0 0
        %1931 = vmatprep.subr.bf16.mxu0 0
        %1932 = vmatpush1.bf16.msra.mxu0 0
        %1933 = vmatprep.subr.bf16.mxu0 0
        %1934 = vmatpush1.bf16.msra.mxu0 0
        %1935 = vmatprep.subr.bf16.mxu0 0
        %1936 = vmatpush1.bf16.msra.mxu0 0
        %1937 = vmatprep.subr.bf16.mxu0 0
        %1938 = vmatpush1.bf16.msra.mxu0 0
        %1939 = vmatprep.subr.bf16.mxu0 0
        %1940 = vmatpush1.bf16.msra.mxu0 0
        %1941 = vmatprep.subr.bf16.mxu0 0
        %1942 = vmatpush1.bf16.msra.mxu0 0
        %1943 = vmatprep.mubr.bf16.mxu0 0
        %1944 = vmatmul.mubr.bf16.gmra.mrb[0].mxu0 %v1906
        %v1945 = vpop.f32.mrb[0].mxu0
        %v1946 = vadd.f32 0.0, %v1945
        %v1947 = vpop.f32.mrb[0].mxu0
        %v1948 = vpop.f32.mrb[0].mxu0
        %v1949 = vpop.f32.mrb[0].mxu0
        %1950 = vdwg.mxu0
        %v1951 = vpack.c.bf16 %v1946, %v1946
        %1953 = vrot.lane.b32.xlu0 %v1842, 120
        %v1954 = vpop.permute.xlu0 %1953
        %1955 = vrot.lane.b32.xlu0 %v1843, 120
        %v1956 = vpop.permute.xlu0 %1955
        %v1958 = vsel %vm1038, %v1954, 0
        %v1961 = vsel %vm1038, %v1956, 0
        %1963 = vmatprep.subr.bf16.mxu0 0
        %1964 = vmatpush1.bf16.xpose.msra.mxu0 %v1961
        %1965 = vmatprep.subr.bf16.mxu0 0
        %1966 = vmatpush1.bf16.xpose.msra.mxu0 0
        %1967 = vmatprep.subr.bf16.mxu0 0
        %1968 = vmatpush1.bf16.xpose.msra.mxu0 0
        %1969 = vmatprep.subr.bf16.mxu0 0
        %1970 = vmatpush1.bf16.xpose.msra.mxu0 0
        %1971 = vmatprep.subr.bf16.mxu0 0
        %1972 = vmatpush1.bf16.xpose.msra.mxu0 0
        %1973 = vmatprep.subr.bf16.mxu0 0
        %1974 = vmatpush1.bf16.xpose.msra.mxu0 0
        %1975 = vmatprep.subr.bf16.mxu0 0
        %1976 = vmatpush1.bf16.xpose.msra.mxu0 0
        %1977 = vmatprep.subr.bf16.mxu0 0
        %1978 = vmatpush1.bf16.xpose.msra.mxu0 0
        %1979 = vmatprep.subr.bf16.mxu0 0
        %1980 = vmatpush1.bf16.xpose.msra.mxu0 0
        %1981 = vmatprep.subr.bf16.mxu0 0
        %1982 = vmatpush1.bf16.xpose.msra.mxu0 0
        %1983 = vmatprep.subr.bf16.mxu0 0
        %1984 = vmatpush1.bf16.xpose.msra.mxu0 0
        %1985 = vmatprep.subr.bf16.mxu0 0
        %1986 = vmatpush1.bf16.xpose.msra.mxu0 0
        %1987 = vmatprep.subr.bf16.mxu0 0
        %1988 = vmatpush1.bf16.xpose.msra.mxu0 0
        %1989 = vmatprep.subr.bf16.mxu0 0
        %1990 = vmatpush1.bf16.xpose.msra.mxu0 0
        %1991 = vmatprep.subr.bf16.mxu0 0
        %1992 = vmatpush1.bf16.xpose.msra.mxu0 0
        %1993 = vmatprep.subr.bf16.mxu0 0
        %1994 = vmatpush1.bf16.xpose.msra.mxu0 0
        %1995 = vmatprep.mubr.bf16.mxu0 0
        %1996 = vmatmul.mubr.bf16.gmra.mrb[0].mxu0 %v1958
        %v1997 = vpop.f32.mrb[0].mxu0
        %v1998 = vadd.f32 %v872, %v1997
        %v1999 = vpop.f32.mrb[0].mxu0
        %v2000 = vpop.f32.mrb[0].mxu0
        %v2001 = vpop.f32.mrb[0].mxu0
        %2002 = vdwg.mxu0
        %v2003 = vsel %vm1038, %v1998, -inf
        %2004 = vmax.xlane.f32.xlu0 %v2003
        %v2005 = vpop.xlane.xlu0 %2004
        %v2006 = vsub.f32 %v1998, %v2005
        %v2007 = vmul.f32 %v2006, 1.442695
        %v2008 = vpow.pop %v2007
        %v2009 = vsel %vm1038, %v2008, 0.0
        %2010 = vadd.xlane.f32.xlu0 %v2009
        %v2011 = vpop.xlane.xlu0 %2010
        %v2012 = vrcp.pop %v2011
        %v2013 = vmul.f32 %v2008, %v2012
        %v2014 = vpack.c.bf16 %v2013, %v2013
        %2015 = vrot.lane.b32.xlu0 %v1843, 88
        %v2016 = vpop.permute.xlu0 %2015
        %v2018 = vsel %vm1038, %v2014, 0
        %v2021 = vsel %vm1103, %v2016, 0
        %2023 = vmatprep.subr.bf16.mxu0 0
        %2024 = vmatpush1.bf16.msra.mxu0 %v2021
        %2025 = vmatprep.subr.bf16.mxu0 0
        %2026 = vmatpush1.bf16.msra.mxu0 0
        %2027 = vmatprep.subr.bf16.mxu0 0
        %2028 = vmatpush1.bf16.msra.mxu0 0
        %2029 = vmatprep.subr.bf16.mxu0 0
        %2030 = vmatpush1.bf16.msra.mxu0 0
        %2031 = vmatprep.subr.bf16.mxu0 0
        %2032 = vmatpush1.bf16.msra.mxu0 0
        %2033 = vmatprep.subr.bf16.mxu0 0
        %2034 = vmatpush1.bf16.msra.mxu0 0
        %2035 = vmatprep.subr.bf16.mxu0 0
        %2036 = vmatpush1.bf16.msra.mxu0 0
        %2037 = vmatprep.subr.bf16.mxu0 0
        %2038 = vmatpush1.bf16.msra.mxu0 0
        %2039 = vmatprep.subr.bf16.mxu0 0
        %2040 = vmatpush1.bf16.msra.mxu0 0
        %2041 = vmatprep.subr.bf16.mxu0 0
        %2042 = vmatpush1.bf16.msra.mxu0 0
        %2043 = vmatprep.subr.bf16.mxu0 0
        %2044 = vmatpush1.bf16.msra.mxu0 0
        %2045 = vmatprep.subr.bf16.mxu0 0
        %2046 = vmatpush1.bf16.msra.mxu0 0
        %2047 = vmatprep.subr.bf16.mxu0 0
        %2048 = vmatpush1.bf16.msra.mxu0 0
        %2049 = vmatprep.subr.bf16.mxu0 0
        %2050 = vmatpush1.bf16.msra.mxu0 0
        %2051 = vmatprep.subr.bf16.mxu0 0
        %2052 = vmatpush1.bf16.msra.mxu0 0
        %2053 = vmatprep.subr.bf16.mxu0 0
        %2054 = vmatpush1.bf16.msra.mxu0 0
        %2055 = vmatprep.mubr.bf16.mxu0 0
        %2056 = vmatmul.mubr.bf16.gmra.mrb[0].mxu0 %v2018
        %v2057 = vpop.f32.mrb[0].mxu0
        %v2058 = vadd.f32 0.0, %v2057
        %v2059 = vpop.f32.mrb[0].mxu0
        %v2060 = vpop.f32.mrb[0].mxu0
        %v2061 = vpop.f32.mrb[0].mxu0
        %2062 = vdwg.mxu0
        %v2063 = vpack.c.bf16 %v2058, %v2058
        %v2065 = vsel %vm1038, %v2063, 0
        %v2068 = vsel %vm1103, %v1839, 0
        %2070 = vmatprep.subr.bf16.mxu0 0
        %2071 = vmatpush1.bf16.msra.mxu0 %v2068
        %2072 = vmatprep.subr.bf16.mxu0 0
        %2073 = vmatpush1.bf16.msra.mxu0 0
        %2074 = vmatprep.subr.bf16.mxu0 0
        %2075 = vmatpush1.bf16.msra.mxu0 0
        %2076 = vmatprep.subr.bf16.mxu0 0
        %2077 = vmatpush1.bf16.msra.mxu0 0
        %2078 = vmatprep.subr.bf16.mxu0 0
        %2079 = vmatpush1.bf16.msra.mxu0 0
        %2080 = vmatprep.subr.bf16.mxu0 0
        %2081 = vmatpush1.bf16.msra.mxu0 0
        %2082 = vmatprep.subr.bf16.mxu0 0
        %2083 = vmatpush1.bf16.msra.mxu0 0
        %2084 = vmatprep.subr.bf16.mxu0 0
        %2085 = vmatpush1.bf16.msra.mxu0 0
        %2086 = vmatprep.subr.bf16.mxu0 0
        %2087 = vmatpush1.bf16.msra.mxu0 0
        %2088 = vmatprep.subr.bf16.mxu0 0
        %2089 = vmatpush1.bf16.msra.mxu0 0
        %2090 = vmatprep.subr.bf16.mxu0 0
        %2091 = vmatpush1.bf16.msra.mxu0 0
        %2092 = vmatprep.subr.bf16.mxu0 0
        %2093 = vmatpush1.bf16.msra.mxu0 0
        %2094 = vmatprep.subr.bf16.mxu0 0
        %2095 = vmatpush1.bf16.msra.mxu0 0
        %2096 = vmatprep.subr.bf16.mxu0 0
        %2097 = vmatpush1.bf16.msra.mxu0 0
        %2098 = vmatprep.subr.bf16.mxu0 0
        %2099 = vmatpush1.bf16.msra.mxu0 0
        %2100 = vmatprep.subr.bf16.mxu0 0
        %2101 = vmatpush1.bf16.msra.mxu0 0
        %2102 = vmatprep.mubr.bf16.mxu0 0
        %2103 = vmatmul.mubr.bf16.gmra.mrb[0].mxu0 %v2065
        %v2104 = vpop.f32.mrb[0].mxu0
        %v2105 = vadd.f32 0.0, %v2104
        %v2106 = vpop.f32.mrb[0].mxu0
        %v2107 = vpop.f32.mrb[0].mxu0
        %v2108 = vpop.f32.mrb[0].mxu0
        %2109 = vdwg.mxu0
        %v2111 = vsel %vm1038, %v1951, 0
        %v2114 = vsel %vm1103, %v1838, 0
        %2116 = vmatprep.subr.bf16.mxu0 0
        %2117 = vmatpush1.bf16.msra.mxu0 %v2114
        %2118 = vmatprep.subr.bf16.mxu0 0
        %2119 = vmatpush1.bf16.msra.mxu0 0
        %2120 = vmatprep.subr.bf16.mxu0 0
        %2121 = vmatpush1.bf16.msra.mxu0 0
        %2122 = vmatprep.subr.bf16.mxu0 0
        %2123 = vmatpush1.bf16.msra.mxu0 0
        %2124 = vmatprep.subr.bf16.mxu0 0
        %2125 = vmatpush1.bf16.msra.mxu0 0
        %2126 = vmatprep.subr.bf16.mxu0 0
        %2127 = vmatpush1.bf16.msra.mxu0 0
        %2128 = vmatprep.subr.bf16.mxu0 0
        %2129 = vmatpush1.bf16.msra.mxu0 0
        %2130 = vmatprep.subr.bf16.mxu0 0
        %2131 = vmatpush1.bf16.msra.mxu0 0
        %2132 = vmatprep.subr.bf16.mxu0 0
        %2133 = vmatpush1.bf16.msra.mxu0 0
        %2134 = vmatprep.subr.bf16.mxu0 0
        %2135 = vmatpush1.bf16.msra.mxu0 0
        %2136 = vmatprep.subr.bf16.mxu0 0
        %2137 = vmatpush1.bf16.msra.mxu0 0
        %2138 = vmatprep.subr.bf16.mxu0 0
        %2139 = vmatpush1.bf16.msra.mxu0 0
        %2140 = vmatprep.subr.bf16.mxu0 0
        %2141 = vmatpush1.bf16.msra.mxu0 0
        %2142 = vmatprep.subr.bf16.mxu0 0
        %2143 = vmatpush1.bf16.msra.mxu0 0
        %2144 = vmatprep.subr.bf16.mxu0 0
        %2145 = vmatpush1.bf16.msra.mxu0 0
        %2146 = vmatprep.subr.bf16.mxu0 0
        %2147 = vmatpush1.bf16.msra.mxu0 0
        %2148 = vmatprep.mubr.bf16.mxu0 0
        %2149 = vmatmul.mubr.bf16.gmra.mrb[0].mxu0 %v2111
        %v2150 = vpop.f32.mrb[0].mxu0
        %v2151 = vadd.f32 %v2105, %v2150
        %v2152 = vpop.f32.mrb[0].mxu0
        %v2153 = vpop.f32.mrb[0].mxu0
        %v2154 = vpop.f32.mrb[0].mxu0
        %2155 = vdwg.mxu0
        %2156 = vrot.lane.b32.xlu0 %v1842, 112
        %v2157 = vpop.permute.xlu0 %2156
        %2158 = vrot.lane.b32.xlu0 %v1843, 112
        %v2159 = vpop.permute.xlu0 %2158
        %v2161 = vsel %vm1038, %v2157, 0
        %v2164 = vsel %vm1038, %v2159, 0
        %2166 = vmatprep.subr.bf16.mxu0 0
        %2167 = vmatpush1.bf16.xpose.msra.mxu0 %v2164
        %2168 = vmatprep.subr.bf16.mxu0 0
        %2169 = vmatpush1.bf16.xpose.msra.mxu0 0
        %2170 = vmatprep.subr.bf16.mxu0 0
        %2171 = vmatpush1.bf16.xpose.msra.mxu0 0
        %2172 = vmatprep.subr.bf16.mxu0 0
        %2173 = vmatpush1.bf16.xpose.msra.mxu0 0
        %2174 = vmatprep.subr.bf16.mxu0 0
        %2175 = vmatpush1.bf16.xpose.msra.mxu0 0
        %2176 = vmatprep.subr.bf16.mxu0 0
        %2177 = vmatpush1.bf16.xpose.msra.mxu0 0
        %2178 = vmatprep.subr.bf16.mxu0 0
        %2179 = vmatpush1.bf16.xpose.msra.mxu0 0
        %2180 = vmatprep.subr.bf16.mxu0 0
        %2181 = vmatpush1.bf16.xpose.msra.mxu0 0
        %2182 = vmatprep.subr.bf16.mxu0 0
        %2183 = vmatpush1.bf16.xpose.msra.mxu0 0
        %2184 = vmatprep.subr.bf16.mxu0 0
        %2185 = vmatpush1.bf16.xpose.msra.mxu0 0
        %2186 = vmatprep.subr.bf16.mxu0 0
        %2187 = vmatpush1.bf16.xpose.msra.mxu0 0
        %2188 = vmatprep.subr.bf16.mxu0 0
        %2189 = vmatpush1.bf16.xpose.msra.mxu0 0
        %2190 = vmatprep.subr.bf16.mxu0 0
        %2191 = vmatpush1.bf16.xpose.msra.mxu0 0
        %2192 = vmatprep.subr.bf16.mxu0 0
        %2193 = vmatpush1.bf16.xpose.msra.mxu0 0
        %2194 = vmatprep.subr.bf16.mxu0 0
        %2195 = vmatpush1.bf16.xpose.msra.mxu0 0
        %2196 = vmatprep.subr.bf16.mxu0 0
        %2197 = vmatpush1.bf16.xpose.msra.mxu0 0
        %2198 = vmatprep.mubr.bf16.mxu0 0
        %2199 = vmatmul.mubr.bf16.gmra.mrb[0].mxu0 %v2161
        %v2200 = vpop.f32.mrb[0].mxu0
        %v2201 = vadd.f32 %v872, %v2200
        %v2202 = vpop.f32.mrb[0].mxu0
        %v2203 = vpop.f32.mrb[0].mxu0
        %v2204 = vpop.f32.mrb[0].mxu0
        %2205 = vdwg.mxu0
        %v2206 = vsel %vm1038, %v2201, -inf
        %2207 = vmax.xlane.f32.xlu0 %v2206
        %v2208 = vpop.xlane.xlu0 %2207
        %v2209 = vsub.f32 %v2201, %v2208
        %v2210 = vmul.f32 %v2209, 1.442695
        %v2211 = vpow.pop %v2210
        %v2212 = vsel %vm1038, %v2211, 0.0
        %2213 = vadd.xlane.f32.xlu0 %v2212
        %v2214 = vpop.xlane.xlu0 %2213
        %v2215 = vrcp.pop %v2214
        %v2216 = vmul.f32 %v2211, %v2215
        %v2217 = vpack.c.bf16 %v2216, %v2216
        %2218 = vrot.lane.b32.xlu0 %v1843, 80
        %v2219 = vpop.permute.xlu0 %2218
        %v2221 = vsel %vm1038, %v2217, 0
        %v2224 = vsel %vm1103, %v2219, 0
        %2226 = vmatprep.subr.bf16.mxu0 0
        %2227 = vmatpush1.bf16.msra.mxu0 %v2224
        %2228 = vmatprep.subr.bf16.mxu0 0
        %2229 = vmatpush1.bf16.msra.mxu0 0
        %2230 = vmatprep.subr.bf16.mxu0 0
        %2231 = vmatpush1.bf16.msra.mxu0 0
        %2232 = vmatprep.subr.bf16.mxu0 0
        %2233 = vmatpush1.bf16.msra.mxu0 0
        %2234 = vmatprep.subr.bf16.mxu0 0
        %2235 = vmatpush1.bf16.msra.mxu0 0
        %2236 = vmatprep.subr.bf16.mxu0 0
        %2237 = vmatpush1.bf16.msra.mxu0 0
        %2238 = vmatprep.subr.bf16.mxu0 0
        %2239 = vmatpush1.bf16.msra.mxu0 0
        %2240 = vmatprep.subr.bf16.mxu0 0
        %2241 = vmatpush1.bf16.msra.mxu0 0
        %2242 = vmatprep.subr.bf16.mxu0 0
        %2243 = vmatpush1.bf16.msra.mxu0 0
        %2244 = vmatprep.subr.bf16.mxu0 0
        %2245 = vmatpush1.bf16.msra.mxu0 0
        %2246 = vmatprep.subr.bf16.mxu0 0
        %2247 = vmatpush1.bf16.msra.mxu0 0
        %2248 = vmatprep.subr.bf16.mxu0 0
        %2249 = vmatpush1.bf16.msra.mxu0 0
        %2250 = vmatprep.subr.bf16.mxu0 0
        %2251 = vmatpush1.bf16.msra.mxu0 0
        %2252 = vmatprep.subr.bf16.mxu0 0
        %2253 = vmatpush1.bf16.msra.mxu0 0
        %2254 = vmatprep.subr.bf16.mxu0 0
        %2255 = vmatpush1.bf16.msra.mxu0 0
        %2256 = vmatprep.subr.bf16.mxu0 0
        %2257 = vmatpush1.bf16.msra.mxu0 0
        %2258 = vmatprep.mubr.bf16.mxu0 0
        %2259 = vmatmul.mubr.bf16.gmra.mrb[0].mxu0 %v2221
        %v2260 = vpop.f32.mrb[0].mxu0
        %v2261 = vadd.f32 0.0, %v2260
        %v2262 = vpop.f32.mrb[0].mxu0
        %v2263 = vpop.f32.mrb[0].mxu0
        %v2264 = vpop.f32.mrb[0].mxu0
        %2265 = vdwg.mxu0
        %v2266 = vpack.c.bf16 %v2261, %v2261
        %v2268 = vsel %vm1038, %v2266, 0
        %v2271 = vsel %vm1103, %v1840, 0
        %2273 = vmatprep.subr.bf16.mxu0 0
        %2274 = vmatpush1.bf16.msra.mxu0 %v2271
        %2275 = vmatprep.subr.bf16.mxu0 0
        %2276 = vmatpush1.bf16.msra.mxu0 0
        %2277 = vmatprep.subr.bf16.mxu0 0
        %2278 = vmatpush1.bf16.msra.mxu0 0
        %2279 = vmatprep.subr.bf16.mxu0 0
        %2280 = vmatpush1.bf16.msra.mxu0 0
        %2281 = vmatprep.subr.bf16.mxu0 0
        %2282 = vmatpush1.bf16.msra.mxu0 0
        %2283 = vmatprep.subr.bf16.mxu0 0
        %2284 = vmatpush1.bf16.msra.mxu0 0
        %2285 = vmatprep.subr.bf16.mxu0 0
        %2286 = vmatpush1.bf16.msra.mxu0 0
        %2287 = vmatprep.subr.bf16.mxu0 0
        %2288 = vmatpush1.bf16.msra.mxu0 0
        %2289 = vmatprep.subr.bf16.mxu0 0
        %2290 = vmatpush1.bf16.msra.mxu0 0
        %2291 = vmatprep.subr.bf16.mxu0 0
        %2292 = vmatpush1.bf16.msra.mxu0 0
        %2293 = vmatprep.subr.bf16.mxu0 0
        %2294 = vmatpush1.bf16.msra.mxu0 0
        %2295 = vmatprep.subr.bf16.mxu0 0
        %2296 = vmatpush1.bf16.msra.mxu0 0
        %2297 = vmatprep.subr.bf16.mxu0 0
        %2298 = vmatpush1.bf16.msra.mxu0 0
        %2299 = vmatprep.subr.bf16.mxu0 0
        %2300 = vmatpush1.bf16.msra.mxu0 0
        %2301 = vmatprep.subr.bf16.mxu0 0
        %2302 = vmatpush1.bf16.msra.mxu0 0
        %2303 = vmatprep.subr.bf16.mxu0 0
        %2304 = vmatpush1.bf16.msra.mxu0 0
        %2305 = vmatprep.mubr.bf16.mxu0 0
        %2306 = vmatmul.mubr.bf16.gmra.mrb[0].mxu0 %v2268
        %v2307 = vpop.f32.mrb[0].mxu0
        %v2308 = vadd.f32 0.0, %v2307
        %v2309 = vpop.f32.mrb[0].mxu0
        %v2310 = vpop.f32.mrb[0].mxu0
        %v2311 = vpop.f32.mrb[0].mxu0
        %2312 = vdwg.mxu0
        %v2313 = vadd.f32 %v2151, %v2308
        %2314 = vrot.lane.b32.xlu0 %v1842, 104
        %v2315 = vpop.permute.xlu0 %2314
        %2316 = vrot.lane.b32.xlu0 %v1843, 104
        %v2317 = vpop.permute.xlu0 %2316
        %v2319 = vsel %vm1038, %v2315, 0
        %v2322 = vsel %vm1038, %v2317, 0
        %2324 = vmatprep.subr.bf16.mxu0 0
        %2325 = vmatpush1.bf16.xpose.msra.mxu0 %v2322
        %2326 = vmatprep.subr.bf16.mxu0 0
        %2327 = vmatpush1.bf16.xpose.msra.mxu0 0
        %2328 = vmatprep.subr.bf16.mxu0 0
        %2329 = vmatpush1.bf16.xpose.msra.mxu0 0
        %2330 = vmatprep.subr.bf16.mxu0 0
        %2331 = vmatpush1.bf16.xpose.msra.mxu0 0
        %2332 = vmatprep.subr.bf16.mxu0 0
        %2333 = vmatpush1.bf16.xpose.msra.mxu0 0
        %2334 = vmatprep.subr.bf16.mxu0 0
        %2335 = vmatpush1.bf16.xpose.msra.mxu0 0
        %2336 = vmatprep.subr.bf16.mxu0 0
        %2337 = vmatpush1.bf16.xpose.msra.mxu0 0
        %2338 = vmatprep.subr.bf16.mxu0 0
        %2339 = vmatpush1.bf16.xpose.msra.mxu0 0
        %2340 = vmatprep.subr.bf16.mxu0 0
        %2341 = vmatpush1.bf16.xpose.msra.mxu0 0
        %2342 = vmatprep.subr.bf16.mxu0 0
        %2343 = vmatpush1.bf16.xpose.msra.mxu0 0
        %2344 = vmatprep.subr.bf16.mxu0 0
        %2345 = vmatpush1.bf16.xpose.msra.mxu0 0
        %2346 = vmatprep.subr.bf16.mxu0 0
        %2347 = vmatpush1.bf16.xpose.msra.mxu0 0
        %2348 = vmatprep.subr.bf16.mxu0 0
        %2349 = vmatpush1.bf16.xpose.msra.mxu0 0
        %2350 = vmatprep.subr.bf16.mxu0 0
        %2351 = vmatpush1.bf16.xpose.msra.mxu0 0
        %2352 = vmatprep.subr.bf16.mxu0 0
        %2353 = vmatpush1.bf16.xpose.msra.mxu0 0
        %2354 = vmatprep.subr.bf16.mxu0 0
        %2355 = vmatpush1.bf16.xpose.msra.mxu0 0
        %2356 = vmatprep.mubr.bf16.mxu0 0
        %2357 = vmatmul.mubr.bf16.gmra.mrb[0].mxu0 %v2319
        %v2358 = vpop.f32.mrb[0].mxu0
        %v2359 = vadd.f32 %v872, %v2358
        %v2360 = vpop.f32.mrb[0].mxu0
        %v2361 = vpop.f32.mrb[0].mxu0
        %v2362 = vpop.f32.mrb[0].mxu0
        %2363 = vdwg.mxu0
        %v2364 = vsel %vm1038, %v2359, -inf
        %2365 = vmax.xlane.f32.xlu0 %v2364
        %v2366 = vpop.xlane.xlu0 %2365
        %v2367 = vsub.f32 %v2359, %v2366
        %v2368 = vmul.f32 %v2367, 1.442695
        %v2369 = vpow.pop %v2368
        %v2370 = vsel %vm1038, %v2369, 0.0
        %2371 = vadd.xlane.f32.xlu0 %v2370
        %v2372 = vpop.xlane.xlu0 %2371
        %v2373 = vrcp.pop %v2372
        %v2374 = vmul.f32 %v2369, %v2373
        %v2375 = vpack.c.bf16 %v2374, %v2374
        %2376 = vrot.lane.b32.xlu0 %v1843, 72
        %v2377 = vpop.permute.xlu0 %2376
        %v2379 = vsel %vm1038, %v2375, 0
        %v2382 = vsel %vm1103, %v2377, 0
        %2384 = vmatprep.subr.bf16.mxu0 0
        %2385 = vmatpush1.bf16.msra.mxu0 %v2382
        %2386 = vmatprep.subr.bf16.mxu0 0
        %2387 = vmatpush1.bf16.msra.mxu0 0
        %2388 = vmatprep.subr.bf16.mxu0 0
        %2389 = vmatpush1.bf16.msra.mxu0 0
        %2390 = vmatprep.subr.bf16.mxu0 0
        %2391 = vmatpush1.bf16.msra.mxu0 0
        %2392 = vmatprep.subr.bf16.mxu0 0
        %2393 = vmatpush1.bf16.msra.mxu0 0
        %2394 = vmatprep.subr.bf16.mxu0 0
        %2395 = vmatpush1.bf16.msra.mxu0 0
        %2396 = vmatprep.subr.bf16.mxu0 0
        %2397 = vmatpush1.bf16.msra.mxu0 0
        %2398 = vmatprep.subr.bf16.mxu0 0
        %2399 = vmatpush1.bf16.msra.mxu0 0
        %2400 = vmatprep.subr.bf16.mxu0 0
        %2401 = vmatpush1.bf16.msra.mxu0 0
        %2402 = vmatprep.subr.bf16.mxu0 0
        %2403 = vmatpush1.bf16.msra.mxu0 0
        %2404 = vmatprep.subr.bf16.mxu0 0
        %2405 = vmatpush1.bf16.msra.mxu0 0
        %2406 = vmatprep.subr.bf16.mxu0 0
        %2407 = vmatpush1.bf16.msra.mxu0 0
        %2408 = vmatprep.subr.bf16.mxu0 0
        %2409 = vmatpush1.bf16.msra.mxu0 0
        %2410 = vmatprep.subr.bf16.mxu0 0
        %2411 = vmatpush1.bf16.msra.mxu0 0
        %2412 = vmatprep.subr.bf16.mxu0 0
        %2413 = vmatpush1.bf16.msra.mxu0 0
        %2414 = vmatprep.subr.bf16.mxu0 0
        %2415 = vmatpush1.bf16.msra.mxu0 0
        %2416 = vmatprep.mubr.bf16.mxu0 0
        %2417 = vmatmul.mubr.bf16.gmra.mrb[0].mxu0 %v2379
        %v2418 = vpop.f32.mrb[0].mxu0
        %v2419 = vadd.f32 0.0, %v2418
        %v2420 = vpop.f32.mrb[0].mxu0
        %v2421 = vpop.f32.mrb[0].mxu0
        %v2422 = vpop.f32.mrb[0].mxu0
        %2423 = vdwg.mxu0
        %v2424 = vpack.c.bf16 %v2419, %v2419
        %v2426 = vsel %vm1038, %v2424, 0
        %v2429 = vsel %vm1103, %v1841, 0
        %2431 = vmatprep.subr.bf16.mxu0 0
        %2432 = vmatpush1.bf16.msra.mxu0 %v2429
        %2433 = vmatprep.subr.bf16.mxu0 0
        %2434 = vmatpush1.bf16.msra.mxu0 0
        %2435 = vmatprep.subr.bf16.mxu0 0
        %2436 = vmatpush1.bf16.msra.mxu0 0
        %2437 = vmatprep.subr.bf16.mxu0 0
        %2438 = vmatpush1.bf16.msra.mxu0 0
        %2439 = vmatprep.subr.bf16.mxu0 0
        %2440 = vmatpush1.bf16.msra.mxu0 0
        %2441 = vmatprep.subr.bf16.mxu0 0
        %2442 = vmatpush1.bf16.msra.mxu0 0
        %2443 = vmatprep.subr.bf16.mxu0 0
        %2444 = vmatpush1.bf16.msra.mxu0 0
        %2445 = vmatprep.subr.bf16.mxu0 0
        %2446 = vmatpush1.bf16.msra.mxu0 0
        %2447 = vmatprep.subr.bf16.mxu0 0
        %2448 = vmatpush1.bf16.msra.mxu0 0
        %2449 = vmatprep.subr.bf16.mxu0 0
        %2450 = vmatpush1.bf16.msra.mxu0 0
        %2451 = vmatprep.subr.bf16.mxu0 0
        %2452 = vmatpush1.bf16.msra.mxu0 0
        %2453 = vmatprep.subr.bf16.mxu0 0
        %2454 = vmatpush1.bf16.msra.mxu0 0
        %2455 = vmatprep.subr.bf16.mxu0 0
        %2456 = vmatpush1.bf16.msra.mxu0 0
        %2457 = vmatprep.subr.bf16.mxu0 0
        %2458 = vmatpush1.bf16.msra.mxu0 0
        %2459 = vmatprep.subr.bf16.mxu0 0
        %2460 = vmatpush1.bf16.msra.mxu0 0
        %2461 = vmatprep.subr.bf16.mxu0 0
        %2462 = vmatpush1.bf16.msra.mxu0 0
        %2463 = vmatprep.mubr.bf16.mxu0 0
        %2464 = vmatmul.mubr.bf16.gmra.mrb[0].mxu0 %v2426
        %v2465 = vpop.f32.mrb[0].mxu0
        %v2466 = vadd.f32 0.0, %v2465
        %v2467 = vpop.f32.mrb[0].mxu0
        %v2468 = vpop.f32.mrb[0].mxu0
        %v2469 = vpop.f32.mrb[0].mxu0
        %2470 = vdwg.mxu0
        %v2471 = vadd.f32 %v2313, %v2466
        %v2472 = vld [vmem:[#allocation11] sm:$0x1]
        %v2474 = vlaneseq
        %v2475 = vshrl.u32 %v2474, 7
        %v2476 = vsub.s32 0, %v2475
        %v2477 = vrot.slane %v2472, %v2476
        %v2479 = vadd.f32 %v2471, %v2477
        %v2480 = vadd.f32 %v1676, %v2479
        %s2481 = sld [smem:[#allocation17 + $0x2]]
        %s2482 = sld [smem:[#allocation18 + $0x2]]
        %v2483 = vsel %vm875, %v2480, 0.0
        %2484 = vadd.xlane.f32.xlu0 %v2483
        %v2485 = vpop.xlane.xlu0 %2484
        %v2486 = vmul.f32 %v2485, %v879
        %v2487 = vsub.f32 %v2480, %v2486
        %v2488 = vmul.f32 %v2487, %v2487
        %v2489 = vsel %vm875, %v2488, 0.0
        %2490 = vadd.xlane.f32.xlu0 %v2489
        %v2491 = vpop.xlane.xlu0 %2490
        %v2492 = vmul.f32 %v2491, 0.032258064
        %v2493 = vrsqrt.pop %v2492
        %v2494 = vmul.f32 %v2492, %v2493
        %vm2495 = vcmp.eq.f32.partialorder %v2492, inf
        %v2496 = vsel %vm2495, %v2492, %v2494
        %vm2497 = vcmp.eq.f32.partialorder %v2492, 0.0
        %v2498 = vand.u32 %v2492, 2147483648
        %v2499 = vsel %vm2497, %v2498, %v2496
        %v2500 = vadd.f32 %v2499, 1e-06
        %v2501 = vrcp.pop %v2500
        %v2502 = vstv %s2481
        %v2503 = vmul.f32 %v2502, %v2501
        %v2504 = vmul.f32 %v2487, %v2503
        %v2505 = vstv %s2482
        %v2506 = vadd.f32 %v2504, %v2505
        %v2507 = vpack.c.bf16 %v2506, %v2506
        %v2508 = vld [vmem:[#allocation12] sm:$0xf]
        %v2509 = vld [vmem:[#allocation12 + $0x4] sm:$0xf]
        %v2510 = vld [vmem:[#allocation12 + $0x8] sm:$0xf]
        %v2511 = vld [vmem:[#allocation12 + $0xc] sm:$0xf]
        %v2512 = vld [vmem:[#allocation14] sm:$0x1]
        %v2514 = vlaneseq
        %v2515 = vshrl.u32 %v2514, 7
        %v2516 = vsub.s32 0, %v2515
        %v2517 = vrot.slane %v2512, %v2516
        %v2523 = vunpack.c.l.b16 %v2508
        %v2524 = vunpack.c.l.b16 %v2509
        %v2525 = vunpack.c.l.b16 %v2510
        %v2526 = vunpack.c.l.b16 %v2511
        %v2527 = vpack.c.b16 %v2524, %v2523
        %v2528 = vpack.c.b16 %v2526, %v2525
        %v2532 = vsel %vm875, %v2507, 0
        %2534 = vmatprep.subr.bf16.mxu0 0
        %2535 = vmatpush1.bf16.msra.mxu0 %v2527
        %2536 = vmatprep.subr.bf16.mxu0 0
        %2537 = vmatpush1.bf16.msra.mxu0 %v2528
        %2538 = vmatprep.subr.bf16.mxu0 0
        %2539 = vmatpush1.bf16.msra.mxu0 0
        %2540 = vmatprep.subr.bf16.mxu0 0
        %2541 = vmatpush1.bf16.msra.mxu0 0
        %2542 = vmatprep.subr.bf16.mxu0 0
        %2543 = vmatpush1.bf16.msra.mxu0 0
        %2544 = vmatprep.subr.bf16.mxu0 0
        %2545 = vmatpush1.bf16.msra.mxu0 0
        %2546 = vmatprep.subr.bf16.mxu0 0
        %2547 = vmatpush1.bf16.msra.mxu0 0
        %2548 = vmatprep.subr.bf16.mxu0 0
        %2549 = vmatpush1.bf16.msra.mxu0 0
        %2550 = vmatprep.subr.bf16.mxu0 0
        %2551 = vmatpush1.bf16.msra.mxu0 0
        %2552 = vmatprep.subr.bf16.mxu0 0
        %2553 = vmatpush1.bf16.msra.mxu0 0
        %2554 = vmatprep.subr.bf16.mxu0 0
        %2555 = vmatpush1.bf16.msra.mxu0 0
        %2556 = vmatprep.subr.bf16.mxu0 0
        %2557 = vmatpush1.bf16.msra.mxu0 0
        %2558 = vmatprep.subr.bf16.mxu0 0
        %2559 = vmatpush1.bf16.msra.mxu0 0
        %2560 = vmatprep.subr.bf16.mxu0 0
        %2561 = vmatpush1.bf16.msra.mxu0 0
        %2562 = vmatprep.subr.bf16.mxu0 0
        %2563 = vmatpush1.bf16.msra.mxu0 0
        %2564 = vmatprep.subr.bf16.mxu0 0
        %2565 = vmatpush1.bf16.msra.mxu0 0
        %2566 = vmatprep.mubr.bf16.mxu0 0
        %2567 = vmatmul.mubr.bf16.gmra.mrb[0].mxu0 %v2532
        %v2568 = vpop.f32.mrb[0].mxu0
        %v2569 = vadd.f32 %v2517, %v2568
        %v2570 = vpop.f32.mrb[0].mxu0
        %v2571 = vpop.f32.mrb[0].mxu0
        %v2572 = vpop.f32.mrb[0].mxu0
        %2573 = vdwg.mxu0
        %v2574 = vmax.f32 %v2569, 0.0
        %v2575 = vpack.c.bf16 %v2574, %v2574
        %v2576 = vld [vmem:[%s18] sm:$0xf]
        %v2577 = vld [vmem:[%s18 + $0x4] sm:$0xf]
        %v2578 = vld [vmem:[%s18 + $0x8] sm:$0xf]
        %v2579 = vld [vmem:[%s18 + $0xc] sm:$0xf]
        %v2580 = vld [vmem:[%s18 + $0x10] sm:$0xf]
        %v2581 = vld [vmem:[%s18 + $0x14] sm:$0xf]
        %v2582 = vld [vmem:[%s18 + $0x18] sm:$0xf]
        %v2583 = vld [vmem:[%s18 + $0x1c] sm:$0xf]
        %v2584 = vld [vmem:[#allocation15] sm:$0x1]
        %v2586 = vlaneseq
        %v2587 = vshrl.u32 %v2586, 7
        %v2588 = vsub.s32 0, %v2587
        %v2589 = vrot.slane %v2584, %v2588
        %v2599 = vunpack.c.l.b16 %v2576
        %v2600 = vunpack.c.l.b16 %v2577
        %v2601 = vunpack.c.l.b16 %v2578
        %v2602 = vunpack.c.l.b16 %v2579
        %v2603 = vunpack.c.l.b16 %v2580
        %v2604 = vunpack.c.l.b16 %v2581
        %v2605 = vunpack.c.l.b16 %v2582
        %v2606 = vunpack.c.l.b16 %v2583
        %v2607 = vpack.c.b16 %v2600, %v2599
        %v2608 = vpack.c.b16 %v2602, %v2601
        %v2609 = vpack.c.b16 %v2604, %v2603
        %v2610 = vpack.c.b16 %v2606, %v2605
        %vm2615 = vcmask 523264
        %v2617 = vsel %vm2615, %v2575, 0
        %2619 = vmatprep.subr.bf16.mxu0 0
        %2620 = vmatpush1.bf16.msra.mxu0 %v2607
        %2621 = vmatprep.subr.bf16.mxu0 0
        %2622 = vmatpush1.bf16.msra.mxu0 %v2608
        %2623 = vmatprep.subr.bf16.mxu0 0
        %2624 = vmatpush1.bf16.msra.mxu0 %v2609
        %2625 = vmatprep.subr.bf16.mxu0 0
        %2626 = vmatpush1.bf16.msra.mxu0 %v2610
        %2627 = vmatprep.subr.bf16.mxu0 0
        %2628 = vmatpush1.bf16.msra.mxu0 0
        %2629 = vmatprep.subr.bf16.mxu0 0
        %2630 = vmatpush1.bf16.msra.mxu0 0
        %2631 = vmatprep.subr.bf16.mxu0 0
        %2632 = vmatpush1.bf16.msra.mxu0 0
        %2633 = vmatprep.subr.bf16.mxu0 0
        %2634 = vmatpush1.bf16.msra.mxu0 0
        %2635 = vmatprep.subr.bf16.mxu0 0
        %2636 = vmatpush1.bf16.msra.mxu0 0
        %2637 = vmatprep.subr.bf16.mxu0 0
        %2638 = vmatpush1.bf16.msra.mxu0 0
        %2639 = vmatprep.subr.bf16.mxu0 0
        %2640 = vmatpush1.bf16.msra.mxu0 0
        %2641 = vmatprep.subr.bf16.mxu0 0
        %2642 = vmatpush1.bf16.msra.mxu0 0
        %2643 = vmatprep.subr.bf16.mxu0 0
        %2644 = vmatpush1.bf16.msra.mxu0 0
        %2645 = vmatprep.subr.bf16.mxu0 0
        %2646 = vmatpush1.bf16.msra.mxu0 0
        %2647 = vmatprep.subr.bf16.mxu0 0
        %2648 = vmatpush1.bf16.msra.mxu0 0
        %2649 = vmatprep.subr.bf16.mxu0 0
        %2650 = vmatpush1.bf16.msra.mxu0 0
        %2651 = vmatprep.mubr.bf16.mxu0 0
        %2652 = vmatmul.mubr.bf16.gmra.mrb[0].mxu0 %v2617
        %v2653 = vpop.f32.mrb[0].mxu0
        %v2654 = vadd.f32 %v2589, %v2653
        %v2655 = vpop.f32.mrb[0].mxu0
        %v2656 = vpop.f32.mrb[0].mxu0
        %v2657 = vpop.f32.mrb[0].mxu0
        %2658 = vdwg.mxu0
        %v2659 = vadd.f32 %v2480, %v2654
        %2660 = vst.msk [vmem:[%s847] sm:$0xff] %vm875, %v2659
        %s2661 = sand.u32 %s533, 1
        %s2662 = scalar_lea.sflag [#allocation4], %s2661
        %s2663 = sand.u32 %s533, 1
        %s2664 = smul.addr %s2663, 8
        %s2665 = scalar_lea.vmem [#allocation20], %s2664
        // Predicated region
        $region149: #{decoder_block_forward.1} parent=107 // pred_check
          %p2666 = pneg %p543
        $region150: #{decoder_block_forward.1} parent=107 // pred_check_branch
          %2668 = sbr.rel (%p2666) target = $region152
        $region151: #{decoder_block_forward.1} parent=107 // pred_region
          %s2670 = ssub.s32 128, 128
          %2671 = vsyncadd %s2662, %s2670
          %s2672 = smul.addr %s43, 128
          %s2673 = scalar_lea.hbm %s22, %s2672
          %s2675 = sshll.u32 %s2665, 4
          %s2676 = int_to_ptr.vmem [resolvable:$true] %s2675
          %2678 = dma.vmem_to_hbm [thread:$0]  %s2676, 128, %s2673, %s2662
        $region152: #{decoder_block_forward.1} parent=107 // pred_fallthru
          _
      $region108: #{decoder_block_forward.1} parent=5 // pred_fallthru
        _
      %p2679 = scmp.le.s32.totalorder 2, %s38
      // Predicated region
      $region153: #{decoder_block_forward.1} parent=5 // pred_check
        %p2680 = pneg %p2679
      $region154: #{decoder_block_forward.1} parent=5 // pred_check_branch
        %2682 = sbr.rel (%p2680) target = $region156
      $region155: #{decoder_block_forward.1} parent=5 // pred_region
        %s2683 = ssub.s32 %s38, 2
        // Predicated region
        $region157: #{decoder_block_forward.1} parent=155 // pred_check
          %p2684 = pneg %p549
        $region158: #{decoder_block_forward.1} parent=155 // pred_check_branch
          %2686 = sbr.rel (%p2684) target = $region160
        $region159: #{decoder_block_forward.1} parent=155 // pred_region
          %s2687 = sand.u32 %s534, 1
          %s2688 = scalar_lea.sflag [#allocation4], %s2687
          %s2689 = sand.u32 %s534, 1
          %s2690 = smul.addr %s2689, 8
          %s2691 = scalar_lea.vmem [#allocation20], %s2690
          %2692 = dma.done %s2688, 128
        $region160: #{decoder_block_forward.1} parent=155 // pred_fallthru
          _
      $region156: #{decoder_block_forward.1} parent=5 // pred_fallthru
        _
    $region6: #{decoder_block_forward.1} parent=1 // loop_footer
      %s42 = sadd.s32 1, %s38
    $region7: #{decoder_block_forward.1} parent=1 // loop_footer_branch
      %37 = sbr.rel target = $region3
    $region8: #{decoder_block_forward.1} parent=1 // loop_exit
      _
    %2693 = vsyncpa [#allocation3], 1
    %s2694 = scalar_lea.sflag [#allocation3], 1
    %2695 = vsyncpa %s2694, 1
    %2696 = vsyncpa [#allocation7], 1
    %2697 = vsyncpa [#allocation10], 1
    %2698 = vsyncpa [#allocation13], 1
    %2699 = vsyncpa [#allocation16], 1
    %2700 = vsyncpa [#allocation4], 1
    %s2701 = scalar_lea.sflag [#allocation4], 1
    %2702 = vsyncpa %s2701, 1
    %2703 = vsyncpa [#allocation5], 1
    %s2704 = scalar_lea.sflag [#allocation5], 1
    %2705 = vsyncpa %s2704, 1
    %2706 = vsyncpa [#allocation19], 1

</llo_original>
